<compile_context>
chip_gen: v6e
topology: v6e:2x2x1
jax: 0.10.0
libtpu: 0.0.40
codegen_flags: <defaults>
</compile_context>

<pallas_src>
import functools

import jax
import jax.numpy as jnp
from jax.experimental import pallas as pl
from jax.experimental.pallas import tpu as pltpu

# ------------------------------ small config --------------------------------
B = 2              # batch size per sequence side
L = 8              # max_sequence_length (scaled down from 50)
H = 32             # hidden dim (scaled down from 768)
NH = 4             # attention heads
DH = H // NH       # head dim
FF = 64            # FFN dim
N_LAYERS = 2       # scaled down from 6
VOCAB = 101
MATCHED_DIM = 128  # scaled down from 4096
N_CLASSES = 3
PRED_PAD = 128     # lane-dense padding of the predictor output (sliced to 3)

TOTAL_SEQS = 2 * B             # sequences A and B stacked along batch


def _tpu_generation():
    try:
        kind = jax.devices()[0].device_kind.lower()
    except Exception:
        return 0
    for g in (7, 6, 5, 4):
        if f"v{g}" in kind or f"tpu{g}" in kind:
            return g
    return 0


_GEN = _tpu_generation()
IS_V7X = _GEN >= 7

# Only split the batch across TensorCores on v7x (2 TCs). On v5e/v6e a second
# chunk would just re-stream every layer's weights and double per-step cost.
NB_CHUNKS = 2 if IS_V7X else 1
CHUNK_B = TOTAL_SEQS // NB_CHUNKS
CHUNK_ROWS = CHUNK_B * L       # activation rows per grid step

# v5e's default scoped-VMEM budget is only 16 MiB of 128 MiB physical; raise it.
# On v7x (64 MiB physical) keep the compiler default to leave headroom.
VMEM_LIMIT_BYTES = None if IS_V7X else (64 << 20)

SCALE = 1.0 / (DH ** 0.5)
MXU_DTYPE = jnp.bfloat16       # bf16 MXU operands, f32 accumulation

# rows of the packed per-layer vector block (each vector lane-aligned at 0)
PV_BQKV, PV_BO, PV_LN1G, PV_LN1B, PV_B1, PV_B2, PV_LN2G, PV_LN2B = range(8)
PV_ROWS = 8
PV_LANES = 128


# ------------------------------ in-kernel helpers ----------------------------
def _mm_nn(x, w):
    """x @ w with bf16 MXU operands and f32 accumulation. x:(M,K), w:(K,N)."""
    return jax.lax.dot_general(
        x.astype(MXU_DTYPE), w.astype(MXU_DTYPE),
        dimension_numbers=(((1,), (0,)), ((), ())),
        preferred_element_type=jnp.float32)


def _layernorm(x, g, b, eps=1e-12):
    x = x.astype(jnp.float32)
    mu = jnp.mean(x, axis=-1, keepdims=True)
    var = jnp.mean(jnp.square(x - mu), axis=-1, keepdims=True)
    return (x - mu) * jax.lax.rsqrt(var + eps) * g + b


# ------------------------------ fused encoder kernel -------------------------
def _encoder_kernel(
    x_ref, mask_ref, eg_ref, eb_ref,
    wqkv_ref, wo_ref, w1_ref, w2_ref, pvec_ref,
    o_ref,
    h_ref,
):
    """One grid step = (one batch chunk, one transformer layer).

    h_ref (VMEM scratch, f32) carries the hidden state across the layer axis.
    """
    chunk = pl.program_id(0)
    layer_idx = pl.program_id(1)

    @pl.when(layer_idx == 0)
    def _():
        # Embedding LayerNorm, applied once per batch chunk.
        h_ref[...] = _layernorm(x_ref[...], eg_ref[...], eb_ref[...])

    # unpack the per-layer small vectors from the single packed block
    pv = pvec_ref[0]                                          # (8, 128) f32
    bqkv = pv[PV_BQKV:PV_BQKV + 1, :3 * H]                    # (1, 3H)
    bo = pv[PV_BO:PV_BO + 1, :H]
    ln1g = pv[PV_LN1G:PV_LN1G + 1, :H]
    ln1b = pv[PV_LN1B:PV_LN1B + 1, :H]
    b1 = pv[PV_B1:PV_B1 + 1, :FF]
    b2 = pv[PV_B2:PV_B2 + 1, :H]
    ln2g = pv[PV_LN2G:PV_LN2G + 1, :H]
    ln2b = pv[PV_LN2B:PV_LN2B + 1, :H]

    x = h_ref[...]                                            # (CHUNK_ROWS, H) f32

    # ---- fused Q/K/V projection: x @ (H, 3H) pre-transposed weight ---------
    qkv = _mm_nn(x, wqkv_ref[0]) + bqkv                       # (CHUNK_ROWS, 3H)
    q = qkv[:, 0:H]
    k = qkv[:, H:2 * H]
    v = qkv[:, 2 * H:3 * H]

    # per-sequence views (leading-dim split at a multiple of the sublane tile)
    q3 = q.reshape(CHUNK_B, L, H)
    k3 = k.reshape(CHUNK_B, L, H)
    v3 = v.reshape(CHUNK_B, L, H)

    # ---- multi-head attention, batched over (head, sequence) ---------------
    # Masked-Q trick: zero all but head h's columns of Q/V and contract over the
    # full H. TODO(synk): use true (L, DH) per-head contractions when H % 128 == 0.
    lane = jax.lax.broadcasted_iota(jnp.int32, (1, H), 1)
    qh_list, vh_list = [], []
    for hh in range(NH):                                      # static, NH small
        m_h = ((lane >= hh * DH) & (lane < (hh + 1) * DH)).astype(jnp.float32)
        qh_list.append(q3 * m_h)
        vh_list.append(v3 * m_h)
    qh = jnp.concatenate(qh_list, axis=0)                     # (NH*CHUNK_B, L, H)
    vh = jnp.concatenate(vh_list, axis=0)
    kh = jnp.concatenate([k3] * NH, axis=0)

    s = jnp.einsum("bqd,bkd->bqk",
                   qh.astype(MXU_DTYPE), kh.astype(MXU_DTYPE),
                   preferred_element_type=jnp.float32) * SCALE  # (NH*CHUNK_B, L, L)

    # additive key-mask bias built in-kernel from the raw (2B, L) mask
    bias_rows = []
    for b in range(CHUNK_B):                                  # static, CHUNK_B small
        row = mask_ref[pl.ds(chunk * CHUNK_B + b, 1), :]      # (1, L)
        bias_rows.append((1.0 - row) * jnp.float32(-1e9))
    bias3 = jnp.stack(bias_rows, axis=0)                      # (CHUNK_B, 1, L)
    bias_b = jnp.concatenate([bias3] * NH, axis=0)            # (NH*CHUNK_B, 1, L)
    s = s + bias_b

    # one softmax over the whole batched score block (exact divide)
    s_max = jnp.max(s, axis=-1, keepdims=True)
    p = jnp.exp(s - s_max)
    p = p / jnp.sum(p, axis=-1, keepdims=True)

    ctx4 = jnp.einsum("bqk,bkd->bqd",
                      p.astype(MXU_DTYPE), vh.astype(MXU_DTYPE),
                      preferred_element_type=jnp.float32)     # (NH*CHUNK_B, L, H)

    # sum head contributions (each head only populated its own columns)
    ctx3 = ctx4[0:CHUNK_B]
    for hh in range(1, NH):
        ctx3 = ctx3 + ctx4[hh * CHUNK_B:(hh + 1) * CHUNK_B]
    ctx = ctx3.reshape(CHUNK_ROWS, H)

    # ---- output projection + residual + LayerNorm ---------------------------
    attn_out = _mm_nn(ctx, wo_ref[0]) + bo
    h1 = _layernorm(x + attn_out, ln1g, ln1b)

    # ---- GELU FFN (both matmuls fused, intermediate stays in vregs/VMEM) ----
    ff = _mm_nn(h1, w1_ref[0]) + b1                           # (CHUNK_ROWS, FF)
    ff = jax.nn.gelu(ff, approximate=True)                    # TODO(synk): erf GELU
    ff = _mm_nn(ff, w2_ref[0]) + b2                           # (CHUNK_ROWS, H)
    h2 = _layernorm(h1 + ff, ln2g, ln2b)

    h_ref[...] = h2

    # only the final layer's hidden state leaves the chip
    @pl.when(layer_idx == pl.num_programs(1) - 1)
    def _():
        o_ref[...] = h2.astype(o_ref.dtype)


def encode(params, x2d, mask2d):
    """x2d: (2B*L, H) embedded inputs; mask2d: (2B, L) {0,1} attention mask."""
    xmap = lambda c, l: (c, 0)     # activation blocks follow the chunk axis
    cmap = lambda c, l: (0, 0)     # constant blocks (mask, embedding LN params)
    wmap = lambda c, l: (l, 0, 0)  # per-layer stacked weights follow the layer axis

    return pl.pallas_call(
        _encoder_kernel,
        grid=(NB_CHUNKS, N_LAYERS),
        in_specs=[
            pl.BlockSpec((CHUNK_ROWS, H), xmap),        # x (embedded)
            pl.BlockSpec((TOTAL_SEQS, L), cmap),        # raw attention mask
            pl.BlockSpec((1, H), cmap),                 # emb LN gamma
            pl.BlockSpec((1, H), cmap),                 # emb LN beta
            pl.BlockSpec((1, H, 3 * H), wmap),          # wqkv (pre-transposed)
            pl.BlockSpec((1, H, H), wmap),              # wo   (pre-transposed)
            pl.BlockSpec((1, H, FF), wmap),             # w1   (pre-transposed)
            pl.BlockSpec((1, FF, H), wmap),             # w2   (pre-transposed)
            pl.BlockSpec((1, PV_ROWS, PV_LANES), wmap), # packed per-layer vectors
        ],
        out_specs=pl.BlockSpec((CHUNK_ROWS, H), xmap),
        out_shape=jax.ShapeDtypeStruct((TOTAL_SEQS * L, H), jnp.bfloat16),
        scratch_shapes=[
            pltpu.VMEM((CHUNK_ROWS, H), jnp.float32),   # resident hidden state
        ],
        compiler_params=pltpu.CompilerParams(
            dimension_semantics=("parallel", "arbitrary"),
            vmem_limit_bytes=VMEM_LIMIT_BYTES),
    )(x2d, mask2d,
      params["emb_ln_g"], params["emb_ln_b"],
      params["wqkv"], params["wo"], params["w1"], params["w2"], params["pvec"])


# ------------------------- fused matcher + predictor -------------------------
TK = 128                       # K tile of the matcher matmul
K_TOTAL = 2 * L * H            # matcher input features


def _matcher_kernel(x_ref, mw_ref, mb_ref, pw_ref, pb_ref, o_ref, acc_ref):
    kk = pl.program_id(0)

    @pl.when(kk == 0)
    def _():
        acc_ref[...] = jnp.zeros_like(acc_ref)

    acc_ref[...] += _mm_nn(x_ref[...], mw_ref[...])           # (B, MATCHED_DIM) f32

    @pl.when(kk == pl.num_programs(0) - 1)
    def _():
        matched = acc_ref[...] + mb_ref[...]                  # dropout = identity
        pred = _mm_nn(matched, pw_ref[...]) + pb_ref[...]     # (B, PRED_PAD)
        o_ref[...] = pred.astype(o_ref.dtype)


def matcher_predictor(params, combined):
    return pl.pallas_call(
        _matcher_kernel,
        grid=(K_TOTAL // TK,),
        in_specs=[
            pl.BlockSpec((B, TK), lambda k: (0, k)),
            pl.BlockSpec((TK, MATCHED_DIM), lambda k: (k, 0)),
            pl.BlockSpec((1, MATCHED_DIM), lambda k: (0, 0)),
            pl.BlockSpec((MATCHED_DIM, PRED_PAD), lambda k: (0, 0)),
            pl.BlockSpec((1, PRED_PAD), lambda k: (0, 0)),
        ],
        out_specs=pl.BlockSpec((B, PRED_PAD), lambda k: (0, 0)),
        out_shape=jax.ShapeDtypeStruct((B, PRED_PAD), jnp.float32),
        scratch_shapes=[pltpu.VMEM((B, MATCHED_DIM), jnp.float32)],
        compiler_params=pltpu.CompilerParams(
            dimension_semantics=("arbitrary",),
            vmem_limit_bytes=VMEM_LIMIT_BYTES),
    )(combined, params["matcher_w"], params["matcher_b"],
      params["predictor_w_pad"], params["predictor_b_pad"])


# ------------------------------- parameters ----------------------------------
def init_params(seed=0):
    key = jax.random.PRNGKey(seed)
    ks = jax.random.split(key, 10)

    def nrm(k, shape, dtype=jnp.float32):
        return (0.02 * jax.random.normal(k, shape, jnp.float32)).astype(dtype)

    # packed per-layer vectors: LN gammas = 1, everything else = 0
    pvec = jnp.zeros((N_LAYERS, PV_ROWS, PV_LANES), jnp.float32)
    pvec = pvec.at[:, PV_LN1G, :H].set(1.0)
    pvec = pvec.at[:, PV_LN2G, :H].set(1.0)

    p = {
        "word_emb": nrm(ks[0], (VOCAB, H)),
        "pos_emb": nrm(ks[1], (L, H)),
        "emb_ln_g": jnp.ones((1, H), jnp.float32),
        "emb_ln_b": jnp.zeros((1, H), jnp.float32),
        # per-layer weights, pre-transposed to (K, N) so the kernel does x @ w
        "wqkv": nrm(ks[2], (N_LAYERS, H, 3 * H), MXU_DTYPE),
        "wo": nrm(ks[3], (N_LAYERS, H, H), MXU_DTYPE),
        "w1": nrm(ks[4], (N_LAYERS, H, FF), MXU_DTYPE),
        "w2": nrm(ks[5], (N_LAYERS, FF, H), MXU_DTYPE),
        "pvec": pvec,
        # matcher / predictor, also pre-transposed to (K, N)
        "matcher_w": nrm(ks[6], (K_TOTAL, MATCHED_DIM), MXU_DTYPE),
        "matcher_b": jnp.zeros((1, MATCHED_DIM), jnp.float32),
    }
    pw = nrm(ks[7], (MATCHED_DIM, N_CLASSES))
    pw_pad = jnp.zeros((MATCHED_DIM, PRED_PAD), jnp.float32).at[:, :N_CLASSES].set(pw)
    p["predictor_w_pad"] = pw_pad.astype(MXU_DTYPE)
    p["predictor_b_pad"] = jnp.zeros((1, PRED_PAD), jnp.float32)
    return p


# ------------------------------- forward pass --------------------------------
def bert_matcher_forward(params, token_id_a, attn_mask_a, token_id_b, attn_mask_b):
    # Stack the two encoder passes into one batch of 2B sequences.
    tok = jnp.concatenate([token_id_a, token_id_b], axis=0)          # (2B, L)
    mask = jnp.concatenate([attn_mask_a, attn_mask_b], axis=0)       # (2B, L)
    mask = mask.astype(jnp.float32)

    # Embedding lookup + positional embeddings (cheap XLA gather on a tiny table).
    emb = jnp.take(params["word_emb"], tok, axis=0) + params["pos_emb"][None]
    x2d = emb.reshape(TOTAL_SEQS * L, H).astype(jnp.float32)

    hid = encode(params, x2d, mask)                                  # (2B*L, H) bf16
    hid3 = hid.reshape(TOTAL_SEQS, L, H)
    hidden_a, hidden_b = hid3[:B], hid3[B:]
    combined = jnp.concatenate([hidden_a, hidden_b], axis=1).reshape(B, 2 * L * H)

    # dropout = identity (eval mode); matcher + predictor fused in one kernel.
    logits_padded = matcher_predictor(params, combined)              # (B, PRED_PAD)
    return logits_padded[:, :N_CLASSES]


# ------------------------------------ main ------------------------------------
if __name__ == "__main__":
    params = init_params(seed=0)

    key = jax.random.PRNGKey(0)
    ka, kb = jax.random.split(key)
    token_id_a = jax.random.randint(ka, (B, L), 0, VOCAB, dtype=jnp.int32)
    token_id_b = jax.random.randint(kb, (B, L), 0, VOCAB, dtype=jnp.int32)
    # sequence a fully valid; sequence b has the last 2 positions padded
    attn_mask_a = jnp.ones((B, L), jnp.float32)
    attn_mask_b = jnp.concatenate(
        [jnp.ones((B, L - 2), jnp.float32), jnp.zeros((B, 2), jnp.float32)], axis=1)

    fwd = jax.jit(functools.partial(bert_matcher_forward, params))
    out = jax.block_until_ready(fwd(token_id_a, attn_mask_a, token_id_b, attn_mask_b))
    assert out.shape == (B, N_CLASSES), out.shape
    assert bool(jnp.all(jnp.isfinite(out)))
    print("KERNEL_OK")
</pallas_src>

<mosaic_0001>
module attributes {stable_mosaic.version = 11 : i64} {
  func.func @_matcher_kernel(%arg0: i32, %arg1: memref<2x128xbf16, #tpu.memory_space<vmem>>, %arg2: memref<128x128xbf16, #tpu.memory_space<vmem>>, %arg3: memref<1x128xf32, #tpu.memory_space<vmem>>, %arg4: memref<128x128xbf16, #tpu.memory_space<vmem>>, %arg5: memref<1x128xf32, #tpu.memory_space<vmem>>, %arg6: memref<2x128xf32, #tpu.memory_space<vmem>>, %arg7: memref<2x128xf32, #tpu.memory_space<vmem>>) attributes {dimension_semantics = [#tpu.dimension_semantics<arbitrary>], iteration_bounds = array<i64: 4>, scalar_prefetch = 0 : i64, scratch_operands = 1 : i64, tpu.core_type = #tpu.core_type<tc>, window_params = [{transform_indices = @transform_0, window_bounds = array<i64: 2, 128>}, {transform_indices = @transform_1, window_bounds = array<i64: 128, 128>}, {pipeline_mode = #tpu.pipeline_mode<synchronous>, transform_indices = @transform_2, window_bounds = array<i64: 1, 128>}, {pipeline_mode = #tpu.pipeline_mode<synchronous>, transform_indices = @transform_3, window_bounds = array<i64: 128, 128>}, {pipeline_mode = #tpu.pipeline_mode<synchronous>, transform_indices = @transform_4, window_bounds = array<i64: 1, 128>}, {pipeline_mode = #tpu.pipeline_mode<synchronous>, transform_indices = @transform_5, window_bounds = array<i64: 2, 128>}]} {
    %c0_i32 = arith.constant 0 : i32
    %0 = arith.cmpi eq, %arg0, %c0_i32 : i32
    %1 = arith.extui %0 : i1 to i32
    %c0_i32_0 = arith.constant 0 : i32
    %2 = arith.cmpi ne, %1, %c0_i32_0 : i32
    scf.if %2 {
      %cst_9 = arith.constant 0.000000e+00 : f32
      %12 = vector.broadcast %cst_9 : f32 to vector<2x128xf32>
      %c0_10 = arith.constant 0 : index
      %c0_11 = arith.constant 0 : index
      %13 = vector.load %arg7[%c0_10, %c0_11] : memref<2x128xf32, #tpu.memory_space<vmem>>, vector<2x128xf32>
      tpu.vector_store %arg7[%c0_10, %c0_11], %12 {strides = array<i32>} : memref<2x128xf32, #tpu.memory_space<vmem>>, vector<2x128xf32>,
    } else {
    }
    %c0 = arith.constant 0 : index
    %c0_1 = arith.constant 0 : index
    %3 = vector.load %arg7[%c0, %c0_1] : memref<2x128xf32, #tpu.memory_space<vmem>>, vector<2x128xf32>
    %c0_2 = arith.constant 0 : index
    %c0_3 = arith.constant 0 : index
    %4 = vector.load %arg1[%c0_2, %c0_3] : memref<2x128xbf16, #tpu.memory_space<vmem>>, vector<2x128xbf16>
    %c0_4 = arith.constant 0 : index
    %c0_5 = arith.constant 0 : index
    %5 = vector.load %arg2[%c0_4, %c0_5] : memref<128x128xbf16, #tpu.memory_space<vmem>>, vector<128x128xbf16>
    %cst = arith.constant dense<0.000000e+00> : vector<2x128xf32>
    %6 = tpu.matmul %4, %5, %cst {dimension_numbers = #tpu.dot_dimension_numbers<[1], [0], [0], [1], [0, 0, 1, 1], [], []>} : vector<2x128xbf16>, vector<128x128xbf16>, vector<2x128xf32> -> vector<2x128xf32>
    %7 = arith.addf %3, %6 : vector<2x128xf32>
    %c0_6 = arith.constant 0 : index
    %c0_7 = arith.constant 0 : index
    %8 = vector.load %arg7[%c0_6, %c0_7] : memref<2x128xf32, #tpu.memory_space<vmem>>, vector<2x128xf32>
    tpu.vector_store %arg7[%c0_6, %c0_7], %7 {strides = array<i32>} : memref<2x128xf32, #tpu.memory_space<vmem>>, vector<2x128xf32>,
    %c3_i32 = arith.constant 3 : i32
    %9 = arith.cmpi eq, %arg0, %c3_i32 : i32
    %10 = arith.extui %9 : i1 to i32
    %c0_i32_8 = arith.constant 0 : i32
    %11 = arith.cmpi ne, %10, %c0_i32_8 : i32
    scf.if %11 {
      %c0_9 = arith.constant 0 : index
      %c0_10 = arith.constant 0 : index
      %12 = vector.load %arg7[%c0_9, %c0_10] : memref<2x128xf32, #tpu.memory_space<vmem>>, vector<2x128xf32>
      %c0_11 = arith.constant 0 : index
      %c0_12 = arith.constant 0 : index
      %13 = vector.load %arg3[%c0_11, %c0_12] : memref<1x128xf32, #tpu.memory_space<vmem>>, vector<1x128xf32>
      %14 = vector.broadcast %13 : vector<1x128xf32> to vector<2x128xf32>
      %15 = arith.addf %12, %14 : vector<2x128xf32>
      %c0_13 = arith.constant 0 : index
      %c0_14 = arith.constant 0 : index
      %16 = vector.load %arg4[%c0_13, %c0_14] : memref<128x128xbf16, #tpu.memory_space<vmem>>, vector<128x128xbf16>
      %17 = arith.truncf %15 : vector<2x128xf32> to vector<2x128xbf16>
      %cst_15 = arith.constant dense<0.000000e+00> : vector<2x128xf32>
      %18 = tpu.matmul %17, %16, %cst_15 {dimension_numbers = #tpu.dot_dimension_numbers<[1], [0], [0], [1], [0, 0, 1, 1], [], []>} : vector<2x128xbf16>, vector<128x128xbf16>, vector<2x128xf32> -> vector<2x128xf32>
      %c0_16 = arith.constant 0 : index
      %c0_17 = arith.constant 0 : index
      %19 = vector.load %arg5[%c0_16, %c0_17] : memref<1x128xf32, #tpu.memory_space<vmem>>, vector<1x128xf32>
      %20 = vector.broadcast %19 : vector<1x128xf32> to vector<2x128xf32>
      %21 = arith.addf %18, %20 : vector<2x128xf32>
      %c0_18 = arith.constant 0 : index
      %c0_19 = arith.constant 0 : index
      %22 = vector.load %arg6[%c0_18, %c0_19] : memref<2x128xf32, #tpu.memory_space<vmem>>, vector<2x128xf32>
      tpu.vector_store %arg6[%c0_18, %c0_19], %21 {strides = array<i32>} : memref<2x128xf32, #tpu.memory_space<vmem>>, vector<2x128xf32>,
    } else {
    }
    return
  }
  func.func @transform_0(%arg0: i32) -> (i32, i32) {
    %c0_i32 = arith.constant 0 : i32
    %c0_i32_0 = arith.constant 0 : i32
    return %c0_i32, %arg0 : i32, i32
  }
  func.func @transform_1(%arg0: i32) -> (i32, i32) {
    %c0_i32 = arith.constant 0 : i32
    %c0_i32_0 = arith.constant 0 : i32
    return %arg0, %c0_i32 : i32, i32
  }
  func.func @transform_2(%arg0: i32) -> (i32, i32) {
    %c0_i32 = arith.constant 0 : i32
    %c0_i32_0 = arith.constant 0 : i32
    %c0_i32_1 = arith.constant 0 : i32
    return %c0_i32, %c0_i32_0 : i32, i32
  }
  func.func @transform_3(%arg0: i32) -> (i32, i32) {
    %c0_i32 = arith.constant 0 : i32
    %c0_i32_0 = arith.constant 0 : i32
    %c0_i32_1 = arith.constant 0 : i32
    return %c0_i32, %c0_i32_0 : i32, i32
  }
  func.func @transform_4(%arg0: i32) -> (i32, i32) {
    %c0_i32 = arith.constant 0 : i32
    %c0_i32_0 = arith.constant 0 : i32
    %c0_i32_1 = arith.constant 0 : i32
    return %c0_i32, %c0_i32_0 : i32, i32
  }
  func.func @transform_5(%arg0: i32) -> (i32, i32) {
    %c0_i32 = arith.constant 0 : i32
    %c0_i32_0 = arith.constant 0 : i32
    %c0_i32_1 = arith.constant 0 : i32
    return %c0_i32, %c0_i32_0 : i32, i32
  }
}

module attributes {stable_mosaic.version = 11 : i64} {
  func.func @_encoder_kernel(%arg0: i32, %arg1: i32, %arg2: memref<32x32xf32, #tpu.memory_space<vmem>>, %arg3: memref<4x8xf32, #tpu.memory_space<vmem>>, %arg4: memref<1x32xf32, #tpu.memory_space<vmem>>, %arg5: memref<1x32xf32, #tpu.memory_space<vmem>>, %arg6: memref<1x32x96xbf16, #tpu.memory_space<vmem>>, %arg7: memref<1x32x32xbf16, #tpu.memory_space<vmem>>, %arg8: memref<1x32x64xbf16, #tpu.memory_space<vmem>>, %arg9: memref<1x64x32xbf16, #tpu.memory_space<vmem>>, %arg10: memref<1x8x128xf32, #tpu.memory_space<vmem>>, %arg11: memref<32x32xbf16, #tpu.memory_space<vmem>>, %arg12: memref<32x32xf32, #tpu.memory_space<vmem>>) attributes {dimension_semantics = [#tpu.dimension_semantics<parallel>, #tpu.dimension_semantics<arbitrary>], iteration_bounds = array<i64: 1, 2>, scalar_prefetch = 0 : i64, scratch_operands = 1 : i64, tpu.core_type = #tpu.core_type<tc>, window_params = [{transform_indices = @transform_0, window_bounds = array<i64: 32, 32>}, {pipeline_mode = #tpu.pipeline_mode<synchronous>, transform_indices = @transform_1, window_bounds = array<i64: 4, 8>}, {pipeline_mode = #tpu.pipeline_mode<synchronous>, transform_indices = @transform_2, window_bounds = array<i64: 1, 32>}, {pipeline_mode = #tpu.pipeline_mode<synchronous>, transform_indices = @transform_3, window_bounds = array<i64: 1, 32>}, {transform_indices = @transform_4, window_bounds = array<i64: 1, 32, 96>}, {transform_indices = @transform_5, window_bounds = array<i64: 1, 32, 32>}, {transform_indices = @transform_6, window_bounds = array<i64: 1, 32, 64>}, {transform_indices = @transform_7, window_bounds = array<i64: 1, 64, 32>}, {transform_indices = @transform_8, window_bounds = array<i64: 1, 8, 128>}, {transform_indices = @transform_9, window_bounds = array<i64: 32, 32>}]} {
    %c0_i32 = arith.constant 0 : i32
    %0 = arith.cmpi eq, %arg1, %c0_i32 : i32
    %1 = arith.extui %0 : i1 to i32
    %c0_i32_0 = arith.constant 0 : i32
    %2 = arith.cmpi ne, %1, %c0_i32_0 : i32
    scf.if %2 {
      %c0_63 = arith.constant 0 : index
      %c0_64 = arith.constant 0 : index
      %228 = vector.load %arg2[%c0_63, %c0_64] : memref<32x32xf32, #tpu.memory_space<vmem>>, vector<32x32xf32>
      %c0_65 = arith.constant 0 : index
      %c0_66 = arith.constant 0 : index
      %229 = vector.load %arg4[%c0_65, %c0_66] : memref<1x32xf32, #tpu.memory_space<vmem>>, vector<1x32xf32>
      %c0_67 = arith.constant 0 : index
      %c0_68 = arith.constant 0 : index
      %230 = vector.load %arg5[%c0_67, %c0_68] : memref<1x32xf32, #tpu.memory_space<vmem>>, vector<1x32xf32>
      %cst_69 = arith.constant dense<0.000000e+00> : vector<32xf32>
      %231 = vector.multi_reduction <add>, %228, %cst_69 [1] : vector<32x32xf32> to vector<32xf32>
      %232 = vector.shape_cast %231 : vector<32xf32> to vector<32x1xf32>
      %cst_70 = arith.constant 3.200000e+01 : f32
      %233 = vector.broadcast %cst_70 : f32 to vector<32x1xf32>
      %234 = arith.divf %232, %233 : vector<32x1xf32>
      %235 = vector.broadcast %234 : vector<32x1xf32> to vector<32x32xf32>
      %236 = arith.subf %228, %235 : vector<32x32xf32>
      %237 = arith.mulf %236, %236 : vector<32x32xf32>
      %cst_71 = arith.constant dense<0.000000e+00> : vector<32xf32>
      %238 = vector.multi_reduction <add>, %237, %cst_71 [1] : vector<32x32xf32> to vector<32xf32>
      %239 = vector.shape_cast %238 : vector<32xf32> to vector<32x1xf32>
      %cst_72 = arith.constant 3.200000e+01 : f32
      %240 = vector.broadcast %cst_72 : f32 to vector<32x1xf32>
      %241 = arith.divf %239, %240 : vector<32x1xf32>
      %242 = vector.broadcast %234 : vector<32x1xf32> to vector<32x32xf32>
      %243 = arith.subf %228, %242 : vector<32x32xf32>
      %cst_73 = arith.constant 9.99999996E-13 : f32
      %244 = vector.broadcast %cst_73 : f32 to vector<32x1xf32>
      %245 = arith.addf %241, %244 : vector<32x1xf32>
      %246 = math.rsqrt %245 : vector<32x1xf32>
      %247 = vector.broadcast %246 : vector<32x1xf32> to vector<32x32xf32>
      %248 = arith.mulf %243, %247 : vector<32x32xf32>
      %249 = vector.broadcast %229 : vector<1x32xf32> to vector<32x32xf32>
      %250 = arith.mulf %248, %249 : vector<32x32xf32>
      %251 = vector.broadcast %230 : vector<1x32xf32> to vector<32x32xf32>
      %252 = arith.addf %250, %251 : vector<32x32xf32>
      %c0_74 = arith.constant 0 : index
      %c0_75 = arith.constant 0 : index
      %253 = vector.load %arg12[%c0_74, %c0_75] : memref<32x32xf32, #tpu.memory_space<vmem>>, vector<32x32xf32>
      tpu.vector_store %arg12[%c0_74, %c0_75], %252 {strides = array<i32>} : memref<32x32xf32, #tpu.memory_space<vmem>>, vector<32x32xf32>,
    } else {
    }
    %c0 = arith.constant 0 : index
    %c0_1 = arith.constant 0 : index
    %c0_2 = arith.constant 0 : index
    %3 = vector.load %arg10[%c0, %c0_1, %c0_2] : memref<1x8x128xf32, #tpu.memory_space<vmem>>, vector<1x8x128xf32>
    %4 = vector.shape_cast %3 : vector<1x8x128xf32> to vector<8x128xf32>
    %5 = vector.extract_strided_slice %4 {offsets = [0, 0], sizes = [1, 96], strides = [1, 1]} : vector<8x128xf32> to vector<1x96xf32>
    %6 = vector.extract_strided_slice %4 {offsets = [1, 0], sizes = [1, 32], strides = [1, 1]} : vector<8x128xf32> to vector<1x32xf32>
    %7 = vector.extract_strided_slice %4 {offsets = [2, 0], sizes = [1, 32], strides = [1, 1]} : vector<8x128xf32> to vector<1x32xf32>
    %8 = vector.extract_strided_slice %4 {offsets = [3, 0], sizes = [1, 32], strides = [1, 1]} : vector<8x128xf32> to vector<1x32xf32>
    %9 = vector.extract_strided_slice %4 {offsets = [4, 0], sizes = [1, 64], strides = [1, 1]} : vector<8x128xf32> to vector<1x64xf32>
    %10 = vector.extract_strided_slice %4 {offsets = [5, 0], sizes = [1, 32], strides = [1, 1]} : vector<8x128xf32> to vector<1x32xf32>
    %11 = vector.extract_strided_slice %4 {offsets = [6, 0], sizes = [1, 32], strides = [1, 1]} : vector<8x128xf32> to vector<1x32xf32>
    %12 = vector.extract_strided_slice %4 {offsets = [7, 0], sizes = [1, 32], strides = [1, 1]} : vector<8x128xf32> to vector<1x32xf32>
    %c0_3 = arith.constant 0 : index
    %c0_4 = arith.constant 0 : index
    %13 = vector.load %arg12[%c0_3, %c0_4] : memref<32x32xf32, #tpu.memory_space<vmem>>, vector<32x32xf32>
    %c0_5 = arith.constant 0 : index
    %c0_6 = arith.constant 0 : index
    %c0_7 = arith.constant 0 : index
    %14 = vector.load %arg6[%c0_5, %c0_6, %c0_7] : memref<1x32x96xbf16, #tpu.memory_space<vmem>>, vector<1x32x96xbf16>
    %15 = vector.shape_cast %14 : vector<1x32x96xbf16> to vector<32x96xbf16>
    %16 = arith.truncf %13 : vector<32x32xf32> to vector<32x32xbf16>
    %cst = arith.constant dense<0.000000e+00> : vector<32x96xf32>
    %17 = tpu.matmul %16, %15, %cst {dimension_numbers = #tpu.dot_dimension_numbers<[1], [0], [0], [1], [0, 0, 1, 1], [], []>} : vector<32x32xbf16>, vector<32x96xbf16>, vector<32x96xf32> -> vector<32x96xf32>
    %18 = vector.broadcast %5 : vector<1x96xf32> to vector<32x96xf32>
    %19 = arith.addf %17, %18 : vector<32x96xf32>
    %20 = vector.extract_strided_slice %19 {offsets = [0, 0], sizes = [32, 32], strides = [1, 1]} : vector<32x96xf32> to vector<32x32xf32>
    %21 = vector.extract_strided_slice %19 {offsets = [0, 32], sizes = [32, 32], strides = [1, 1]} : vector<32x96xf32> to vector<32x32xf32>
    %22 = vector.extract_strided_slice %19 {offsets = [0, 64], sizes = [32, 32], strides = [1, 1]} : vector<32x96xf32> to vector<32x32xf32>
    %23 = vector.shape_cast %20 : vector<32x32xf32> to vector<4x8x32xf32>
    %24 = vector.shape_cast %21 : vector<32x32xf32> to vector<4x8x32xf32>
    %25 = vector.shape_cast %22 : vector<32x32xf32> to vector<4x8x32xf32>
    %26 = tpu.iota {dimensions = array<i32: 1>} : vector<1x32xi32>
    %c0_i32_8 = arith.constant 0 : i32
    %27 = vector.broadcast %c0_i32_8 : i32 to vector<1x32xi32>
    %28 = arith.cmpi sge, %26, %27 : vector<1x32xi32>
    %c8_i32 = arith.constant 8 : i32
    %29 = vector.broadcast %c8_i32 : i32 to vector<1x32xi32>
    %30 = arith.cmpi slt, %26, %29 : vector<1x32xi32>
    %31 = arith.andi %28, %30 : vector<1x32xi1>
    %32 = arith.extui %31 : vector<1x32xi1> to vector<1x32xi32>
    %33 = arith.sitofp %32 : vector<1x32xi32> to vector<1x32xf32>
    %34 = vector.shape_cast %33 : vector<1x32xf32> to vector<1x1x32xf32>
    %35 = vector.broadcast %34 : vector<1x1x32xf32> to vector<4x8x32xf32>
    %36 = arith.mulf %23, %35 : vector<4x8x32xf32>
    %37 = vector.shape_cast %33 : vector<1x32xf32> to vector<1x1x32xf32>
    %38 = vector.broadcast %37 : vector<1x1x32xf32> to vector<4x8x32xf32>
    %39 = arith.mulf %25, %38 : vector<4x8x32xf32>
    %c8_i32_9 = arith.constant 8 : i32
    %40 = vector.broadcast %c8_i32_9 : i32 to vector<1x32xi32>
    %41 = arith.cmpi sge, %26, %40 : vector<1x32xi32>
    %c16_i32 = arith.constant 16 : i32
    %42 = vector.broadcast %c16_i32 : i32 to vector<1x32xi32>
    %43 = arith.cmpi slt, %26, %42 : vector<1x32xi32>
    %44 = arith.andi %41, %43 : vector<1x32xi1>
    %45 = arith.extui %44 : vector<1x32xi1> to vector<1x32xi32>
    %46 = arith.sitofp %45 : vector<1x32xi32> to vector<1x32xf32>
    %47 = vector.shape_cast %46 : vector<1x32xf32> to vector<1x1x32xf32>
    %48 = vector.broadcast %47 : vector<1x1x32xf32> to vector<4x8x32xf32>
    %49 = arith.mulf %23, %48 : vector<4x8x32xf32>
    %50 = vector.shape_cast %46 : vector<1x32xf32> to vector<1x1x32xf32>
    %51 = vector.broadcast %50 : vector<1x1x32xf32> to vector<4x8x32xf32>
    %52 = arith.mulf %25, %51 : vector<4x8x32xf32>
    %c16_i32_10 = arith.constant 16 : i32
    %53 = vector.broadcast %c16_i32_10 : i32 to vector<1x32xi32>
    %54 = arith.cmpi sge, %26, %53 : vector<1x32xi32>
    %c24_i32 = arith.constant 24 : i32
    %55 = vector.broadcast %c24_i32 : i32 to vector<1x32xi32>
    %56 = arith.cmpi slt, %26, %55 : vector<1x32xi32>
    %57 = arith.andi %54, %56 : vector<1x32xi1>
    %58 = arith.extui %57 : vector<1x32xi1> to vector<1x32xi32>
    %59 = arith.sitofp %58 : vector<1x32xi32> to vector<1x32xf32>
    %60 = vector.shape_cast %59 : vector<1x32xf32> to vector<1x1x32xf32>
    %61 = vector.broadcast %60 : vector<1x1x32xf32> to vector<4x8x32xf32>
    %62 = arith.mulf %23, %61 : vector<4x8x32xf32>
    %63 = vector.shape_cast %59 : vector<1x32xf32> to vector<1x1x32xf32>
    %64 = vector.broadcast %63 : vector<1x1x32xf32> to vector<4x8x32xf32>
    %65 = arith.mulf %25, %64 : vector<4x8x32xf32>
    %c24_i32_11 = arith.constant 24 : i32
    %66 = vector.broadcast %c24_i32_11 : i32 to vector<1x32xi32>
    %67 = arith.cmpi sge, %26, %66 : vector<1x32xi32>
    %c32_i32 = arith.constant 32 : i32
    %68 = vector.broadcast %c32_i32 : i32 to vector<1x32xi32>
    %69 = arith.cmpi slt, %26, %68 : vector<1x32xi32>
    %70 = arith.andi %67, %69 : vector<1x32xi1>
    %71 = arith.extui %70 : vector<1x32xi1> to vector<1x32xi32>
    %72 = arith.sitofp %71 : vector<1x32xi32> to vector<1x32xf32>
    %73 = vector.shape_cast %72 : vector<1x32xf32> to vector<1x1x32xf32>
    %74 = vector.broadcast %73 : vector<1x1x32xf32> to vector<4x8x32xf32>
    %75 = arith.mulf %23, %74 : vector<4x8x32xf32>
    %76 = vector.shape_cast %72 : vector<1x32xf32> to vector<1x1x32xf32>
    %77 = vector.broadcast %76 : vector<1x1x32xf32> to vector<4x8x32xf32>
    %78 = arith.mulf %25, %77 : vector<4x8x32xf32>
    %79 = tpu.concatenate %36, %49, %62, %75 in 0 : vector<4x8x32xf32>, vector<4x8x32xf32>, vector<4x8x32xf32>, vector<4x8x32xf32> -> vector<16x8x32xf32>
    %80 = tpu.concatenate %39, %52, %65, %78 in 0 : vector<4x8x32xf32>, vector<4x8x32xf32>, vector<4x8x32xf32>, vector<4x8x32xf32> -> vector<16x8x32xf32>
    %81 = tpu.concatenate %24, %24, %24, %24 in 0 : vector<4x8x32xf32>, vector<4x8x32xf32>, vector<4x8x32xf32>, vector<4x8x32xf32> -> vector<16x8x32xf32>
    %82 = arith.truncf %79 : vector<16x8x32xf32> to vector<16x8x32xbf16>
    %83 = arith.truncf %81 : vector<16x8x32xf32> to vector<16x8x32xbf16>
    "tpu.trace_start"() <{level = 10 : i32, message = "bqd,bkd->bqk"}> : () -> ()
    %cst_12 = arith.constant dense<0.000000e+00> : vector<16x8x8xf32>
    %84 = tpu.matmul %82, %83, %cst_12 {dimension_numbers = #tpu.dot_dimension_numbers<[2], [2], [1], [1], [0, 0, 0, 1, 1, 1], [0], [0]>} : vector<16x8x32xbf16>, vector<16x8x32xbf16>, vector<16x8x8xf32> -> vector<16x8x8xf32>
    "tpu.trace_stop"() : () -> ()
    %cst_13 = arith.constant 0.353553385 : f32
    %85 = vector.broadcast %cst_13 : f32 to vector<16x8x8xf32>
    %86 = arith.mulf %84, %85 : vector<16x8x8xf32>
    %c4_i32 = arith.constant 4 : i32
    %87 = arith.muli %arg0, %c4_i32 : i32
    %c0_i32_14 = arith.constant 0 : i32
    %88 = arith.addi %87, %c0_i32_14 : i32
    %89 = arith.index_cast %88 : i32 to index
    %c0_15 = arith.constant 0 : index
    %90 = vector.load %arg3[%89, %c0_15] : memref<4x8xf32, #tpu.memory_space<vmem>>, vector<1x8xf32>
    %cst_16 = arith.constant 1.000000e+00 : f32
    %91 = vector.broadcast %cst_16 : f32 to vector<1x8xf32>
    %92 = arith.subf %91, %90 : vector<1x8xf32>
    %cst_17 = arith.constant -1.000000e+09 : f32
    %93 = vector.broadcast %cst_17 : f32 to vector<1x8xf32>
    %94 = arith.mulf %92, %93 : vector<1x8xf32>
    %c4_i32_18 = arith.constant 4 : i32
    %95 = arith.muli %arg0, %c4_i32_18 : i32
    %c1_i32 = arith.constant 1 : i32
    %96 = arith.addi %95, %c1_i32 : i32
    %97 = arith.index_cast %96 : i32 to index
    %c0_19 = arith.constant 0 : index
    %98 = vector.load %arg3[%97, %c0_19] : memref<4x8xf32, #tpu.memory_space<vmem>>, vector<1x8xf32>
    %cst_20 = arith.constant 1.000000e+00 : f32
    %99 = vector.broadcast %cst_20 : f32 to vector<1x8xf32>
    %100 = arith.subf %99, %98 : vector<1x8xf32>
    %cst_21 = arith.constant -1.000000e+09 : f32
    %101 = vector.broadcast %cst_21 : f32 to vector<1x8xf32>
    %102 = arith.mulf %100, %101 : vector<1x8xf32>
    %c4_i32_22 = arith.constant 4 : i32
    %103 = arith.muli %arg0, %c4_i32_22 : i32
    %c2_i32 = arith.constant 2 : i32
    %104 = arith.addi %103, %c2_i32 : i32
    %105 = arith.index_cast %104 : i32 to index
    %c0_23 = arith.constant 0 : index
    %106 = vector.load %arg3[%105, %c0_23] : memref<4x8xf32, #tpu.memory_space<vmem>>, vector<1x8xf32>
    %cst_24 = arith.constant 1.000000e+00 : f32
    %107 = vector.broadcast %cst_24 : f32 to vector<1x8xf32>
    %108 = arith.subf %107, %106 : vector<1x8xf32>
    %cst_25 = arith.constant -1.000000e+09 : f32
    %109 = vector.broadcast %cst_25 : f32 to vector<1x8xf32>
    %110 = arith.mulf %108, %109 : vector<1x8xf32>
    %c4_i32_26 = arith.constant 4 : i32
    %111 = arith.muli %arg0, %c4_i32_26 : i32
    %c3_i32 = arith.constant 3 : i32
    %112 = arith.addi %111, %c3_i32 : i32
    %113 = arith.index_cast %112 : i32 to index
    %c0_27 = arith.constant 0 : index
    %114 = vector.load %arg3[%113, %c0_27] : memref<4x8xf32, #tpu.memory_space<vmem>>, vector<1x8xf32>
    %cst_28 = arith.constant 1.000000e+00 : f32
    %115 = vector.broadcast %cst_28 : f32 to vector<1x8xf32>
    %116 = arith.subf %115, %114 : vector<1x8xf32>
    %cst_29 = arith.constant -1.000000e+09 : f32
    %117 = vector.broadcast %cst_29 : f32 to vector<1x8xf32>
    %118 = arith.mulf %116, %117 : vector<1x8xf32>
    %119 = vector.shape_cast %94 : vector<1x8xf32> to vector<1x1x8xf32>
    %120 = vector.shape_cast %102 : vector<1x8xf32> to vector<1x1x8xf32>
    %121 = vector.shape_cast %110 : vector<1x8xf32> to vector<1x1x8xf32>
    %122 = vector.shape_cast %118 : vector<1x8xf32> to vector<1x1x8xf32>
    %123 = tpu.concatenate %119, %120, %121, %122 in 0 : vector<1x1x8xf32>, vector<1x1x8xf32>, vector<1x1x8xf32>, vector<1x1x8xf32> -> vector<4x1x8xf32>
    %124 = tpu.concatenate %123, %123, %123, %123 in 0 : vector<4x1x8xf32>, vector<4x1x8xf32>, vector<4x1x8xf32>, vector<4x1x8xf32> -> vector<16x1x8xf32>
    %125 = vector.broadcast %124 : vector<16x1x8xf32> to vector<16x8x8xf32>
    %126 = arith.addf %86, %125 : vector<16x8x8xf32>
    %cst_30 = arith.constant dense<0xFF800000> : vector<16x8xf32>
    %127 = vector.multi_reduction <maximumf>, %126, %cst_30 [2] : vector<16x8x8xf32> to vector<16x8xf32>
    %128 = vector.shape_cast %127 : vector<16x8xf32> to vector<16x8x1xf32>
    %129 = vector.broadcast %128 : vector<16x8x1xf32> to vector<16x8x8xf32>
    %130 = arith.subf %126, %129 : vector<16x8x8xf32>
    %131 = math.exp %130 : vector<16x8x8xf32>
    %cst_31 = arith.constant dense<0.000000e+00> : vector<16x8xf32>
    %132 = vector.multi_reduction <add>, %131, %cst_31 [2] : vector<16x8x8xf32> to vector<16x8xf32>
    %133 = vector.shape_cast %132 : vector<16x8xf32> to vector<16x8x1xf32>
    %134 = vector.broadcast %133 : vector<16x8x1xf32> to vector<16x8x8xf32>
    %135 = arith.divf %131, %134 : vector<16x8x8xf32>
    %136 = arith.truncf %135 : vector<16x8x8xf32> to vector<16x8x8xbf16>
    %137 = arith.truncf %80 : vector<16x8x32xf32> to vector<16x8x32xbf16>
    "tpu.trace_start"() <{level = 10 : i32, message = "bqk,bkd->bqd"}> : () -> ()
    %cst_32 = arith.constant dense<0.000000e+00> : vector<16x8x32xf32>
    %138 = tpu.matmul %136, %137, %cst_32 {dimension_numbers = #tpu.dot_dimension_numbers<[2], [1], [1], [2], [0, 0, 0, 1, 1, 2], [0], [0]>} : vector<16x8x8xbf16>, vector<16x8x32xbf16>, vector<16x8x32xf32> -> vector<16x8x32xf32>
    "tpu.trace_stop"() : () -> ()
    %139 = vector.extract_strided_slice %138 {offsets = [0, 0, 0], sizes = [4, 8, 32], strides = [1, 1, 1]} : vector<16x8x32xf32> to vector<4x8x32xf32>
    %140 = vector.extract_strided_slice %138 {offsets = [4, 0, 0], sizes = [4, 8, 32], strides = [1, 1, 1]} : vector<16x8x32xf32> to vector<4x8x32xf32>
    %141 = arith.addf %139, %140 : vector<4x8x32xf32>
    %142 = vector.extract_strided_slice %138 {offsets = [8, 0, 0], sizes = [4, 8, 32], strides = [1, 1, 1]} : vector<16x8x32xf32> to vector<4x8x32xf32>
    %143 = arith.addf %141, %142 : vector<4x8x32xf32>
    %144 = vector.extract_strided_slice %138 {offsets = [12, 0, 0], sizes = [4, 8, 32], strides = [1, 1, 1]} : vector<16x8x32xf32> to vector<4x8x32xf32>
    %145 = arith.addf %143, %144 : vector<4x8x32xf32>
    %146 = vector.shape_cast %145 : vector<4x8x32xf32> to vector<32x32xf32>
    %c0_33 = arith.constant 0 : index
    %c0_34 = arith.constant 0 : index
    %c0_35 = arith.constant 0 : index
    %147 = vector.load %arg7[%c0_33, %c0_34, %c0_35] : memref<1x32x32xbf16, #tpu.memory_space<vmem>>, vector<1x32x32xbf16>
    %148 = vector.shape_cast %147 : vector<1x32x32xbf16> to vector<32x32xbf16>
    %149 = arith.truncf %146 : vector<32x32xf32> to vector<32x32xbf16>
    %cst_36 = arith.constant dense<0.000000e+00> : vector<32x32xf32>
    %150 = tpu.matmul %149, %148, %cst_36 {dimension_numbers = #tpu.dot_dimension_numbers<[1], [0], [0], [1], [0, 0, 1, 1], [], []>} : vector<32x32xbf16>, vector<32x32xbf16>, vector<32x32xf32> -> vector<32x32xf32>
    %151 = vector.broadcast %6 : vector<1x32xf32> to vector<32x32xf32>
    %152 = arith.addf %150, %151 : vector<32x32xf32>
    %153 = arith.addf %13, %152 : vector<32x32xf32>
    %cst_37 = arith.constant dense<0.000000e+00> : vector<32xf32>
    %154 = vector.multi_reduction <add>, %153, %cst_37 [1] : vector<32x32xf32> to vector<32xf32>
    %155 = vector.shape_cast %154 : vector<32xf32> to vector<32x1xf32>
    %cst_38 = arith.constant 3.200000e+01 : f32
    %156 = vector.broadcast %cst_38 : f32 to vector<32x1xf32>
    %157 = arith.divf %155, %156 : vector<32x1xf32>
    %158 = vector.broadcast %157 : vector<32x1xf32> to vector<32x32xf32>
    %159 = arith.subf %153, %158 : vector<32x32xf32>
    %160 = arith.mulf %159, %159 : vector<32x32xf32>
    %cst_39 = arith.constant dense<0.000000e+00> : vector<32xf32>
    %161 = vector.multi_reduction <add>, %160, %cst_39 [1] : vector<32x32xf32> to vector<32xf32>
    %162 = vector.shape_cast %161 : vector<32xf32> to vector<32x1xf32>
    %cst_40 = arith.constant 3.200000e+01 : f32
    %163 = vector.broadcast %cst_40 : f32 to vector<32x1xf32>
    %164 = arith.divf %162, %163 : vector<32x1xf32>
    %165 = vector.broadcast %157 : vector<32x1xf32> to vector<32x32xf32>
    %166 = arith.subf %153, %165 : vector<32x32xf32>
    %cst_41 = arith.constant 9.99999996E-13 : f32
    %167 = vector.broadcast %cst_41 : f32 to vector<32x1xf32>
    %168 = arith.addf %164, %167 : vector<32x1xf32>
    %169 = math.rsqrt %168 : vector<32x1xf32>
    %170 = vector.broadcast %169 : vector<32x1xf32> to vector<32x32xf32>
    %171 = arith.mulf %166, %170 : vector<32x32xf32>
    %172 = vector.broadcast %7 : vector<1x32xf32> to vector<32x32xf32>
    %173 = arith.mulf %171, %172 : vector<32x32xf32>
    %174 = vector.broadcast %8 : vector<1x32xf32> to vector<32x32xf32>
    %175 = arith.addf %173, %174 : vector<32x32xf32>
    %c0_42 = arith.constant 0 : index
    %c0_43 = arith.constant 0 : index
    %c0_44 = arith.constant 0 : index
    %176 = vector.load %arg8[%c0_42, %c0_43, %c0_44] : memref<1x32x64xbf16, #tpu.memory_space<vmem>>, vector<1x32x64xbf16>
    %177 = vector.shape_cast %176 : vector<1x32x64xbf16> to vector<32x64xbf16>
    %178 = arith.truncf %175 : vector<32x32xf32> to vector<32x32xbf16>
    %cst_45 = arith.constant dense<0.000000e+00> : vector<32x64xf32>
    %179 = tpu.matmul %178, %177, %cst_45 {dimension_numbers = #tpu.dot_dimension_numbers<[1], [0], [0], [1], [0, 0, 1, 1], [], []>} : vector<32x32xbf16>, vector<32x64xbf16>, vector<32x64xf32> -> vector<32x64xf32>
    %180 = vector.broadcast %9 : vector<1x64xf32> to vector<32x64xf32>
    %181 = arith.addf %179, %180 : vector<32x64xf32>
    %182 = arith.mulf %181, %181 : vector<32x64xf32>
    %183 = arith.mulf %181, %182 : vector<32x64xf32>
    %cst_46 = arith.constant 4.471500e-02 : f32
    %184 = vector.broadcast %cst_46 : f32 to vector<32x64xf32>
    %185 = arith.mulf %184, %183 : vector<32x64xf32>
    %186 = arith.addf %181, %185 : vector<32x64xf32>
    %cst_47 = arith.constant 0.797884583 : f32
    %187 = vector.broadcast %cst_47 : f32 to vector<32x64xf32>
    %188 = arith.mulf %187, %186 : vector<32x64xf32>
    %189 = math.tanh %188 : vector<32x64xf32>
    %cst_48 = arith.constant 1.000000e+00 : f32
    %190 = vector.broadcast %cst_48 : f32 to vector<32x64xf32>
    %191 = arith.addf %190, %189 : vector<32x64xf32>
    %cst_49 = arith.constant 5.000000e-01 : f32
    %192 = vector.broadcast %cst_49 : f32 to vector<32x64xf32>
    %193 = arith.mulf %192, %191 : vector<32x64xf32>
    %194 = arith.mulf %181, %193 : vector<32x64xf32>
    %c0_50 = arith.constant 0 : index
    %c0_51 = arith.constant 0 : index
    %c0_52 = arith.constant 0 : index
    %195 = vector.load %arg9[%c0_50, %c0_51, %c0_52] : memref<1x64x32xbf16, #tpu.memory_space<vmem>>, vector<1x64x32xbf16>
    %196 = vector.shape_cast %195 : vector<1x64x32xbf16> to vector<64x32xbf16>
    %197 = arith.truncf %194 : vector<32x64xf32> to vector<32x64xbf16>
    %cst_53 = arith.constant dense<0.000000e+00> : vector<32x32xf32>
    %198 = tpu.matmul %197, %196, %cst_53 {dimension_numbers = #tpu.dot_dimension_numbers<[1], [0], [0], [1], [0, 0, 1, 1], [], []>} : vector<32x64xbf16>, vector<64x32xbf16>, vector<32x32xf32> -> vector<32x32xf32>
    %199 = vector.broadcast %10 : vector<1x32xf32> to vector<32x32xf32>
    %200 = arith.addf %198, %199 : vector<32x32xf32>
    %201 = arith.addf %175, %200 : vector<32x32xf32>
    %cst_54 = arith.constant dense<0.000000e+00> : vector<32xf32>
    %202 = vector.multi_reduction <add>, %201, %cst_54 [1] : vector<32x32xf32> to vector<32xf32>
    %203 = vector.shape_cast %202 : vector<32xf32> to vector<32x1xf32>
    %cst_55 = arith.constant 3.200000e+01 : f32
    %204 = vector.broadcast %cst_55 : f32 to vector<32x1xf32>
    %205 = arith.divf %203, %204 : vector<32x1xf32>
    %206 = vector.broadcast %205 : vector<32x1xf32> to vector<32x32xf32>
    %207 = arith.subf %201, %206 : vector<32x32xf32>
    %208 = arith.mulf %207, %207 : vector<32x32xf32>
    %cst_56 = arith.constant dense<0.000000e+00> : vector<32xf32>
    %209 = vector.multi_reduction <add>, %208, %cst_56 [1] : vector<32x32xf32> to vector<32xf32>
    %210 = vector.shape_cast %209 : vector<32xf32> to vector<32x1xf32>
    %cst_57 = arith.constant 3.200000e+01 : f32
    %211 = vector.broadcast %cst_57 : f32 to vector<32x1xf32>
    %212 = arith.divf %210, %211 : vector<32x1xf32>
    %213 = vector.broadcast %205 : vector<32x1xf32> to vector<32x32xf32>
    %214 = arith.subf %201, %213 : vector<32x32xf32>
    %cst_58 = arith.constant 9.99999996E-13 : f32
    %215 = vector.broadcast %cst_58 : f32 to vector<32x1xf32>
    %216 = arith.addf %212, %215 : vector<32x1xf32>
    %217 = math.rsqrt %216 : vector<32x1xf32>
    %218 = vector.broadcast %217 : vector<32x1xf32> to vector<32x32xf32>
    %219 = arith.mulf %214, %218 : vector<32x32xf32>
    %220 = vector.broadcast %11 : vector<1x32xf32> to vector<32x32xf32>
    %221 = arith.mulf %219, %220 : vector<32x32xf32>
    %222 = vector.broadcast %12 : vector<1x32xf32> to vector<32x32xf32>
    %223 = arith.addf %221, %222 : vector<32x32xf32>
    %c0_59 = arith.constant 0 : index
    %c0_60 = arith.constant 0 : index
    %224 = vector.load %arg12[%c0_59, %c0_60] : memref<32x32xf32, #tpu.memory_space<vmem>>, vector<32x32xf32>
    tpu.vector_store %arg12[%c0_59, %c0_60], %223 {strides = array<i32>} : memref<32x32xf32, #tpu.memory_space<vmem>>, vector<32x32xf32>,
    %c1_i32_61 = arith.constant 1 : i32
    %225 = arith.cmpi eq, %arg1, %c1_i32_61 : i32
    %226 = arith.extui %225 : i1 to i32
    %c0_i32_62 = arith.constant 0 : i32
    %227 = arith.cmpi ne, %226, %c0_i32_62 : i32
    scf.if %227 {
      %228 = arith.truncf %223 : vector<32x32xf32> to vector<32x32xbf16>
      %c0_63 = arith.constant 0 : index
      %c0_64 = arith.constant 0 : index
      %229 = vector.load %arg11[%c0_63, %c0_64] : memref<32x32xbf16, #tpu.memory_space<vmem>>, vector<32x32xbf16>
      tpu.vector_store %arg11[%c0_63, %c0_64], %228 {strides = array<i32>} : memref<32x32xbf16, #tpu.memory_space<vmem>>, vector<32x32xbf16>,
    } else {
    }
    return
  }
  func.func @transform_0(%arg0: i32, %arg1: i32) -> (i32, i32) {
    %c0_i32 = arith.constant 0 : i32
    %c0_i32_0 = arith.constant 0 : i32
    return %arg0, %c0_i32 : i32, i32
  }
  func.func @transform_1(%arg0: i32, %arg1: i32) -> (i32, i32) {
    %c0_i32 = arith.constant 0 : i32
    %c0_i32_0 = arith.constant 0 : i32
    %c0_i32_1 = arith.constant 0 : i32
    return %c0_i32, %c0_i32_0 : i32, i32
  }
  func.func @transform_2(%arg0: i32, %arg1: i32) -> (i32, i32) {
    %c0_i32 = arith.constant 0 : i32
    %c0_i32_0 = arith.constant 0 : i32
    %c0_i32_1 = arith.constant 0 : i32
    return %c0_i32, %c0_i32_0 : i32, i32
  }
  func.func @transform_3(%arg0: i32, %arg1: i32) -> (i32, i32) {
    %c0_i32 = arith.constant 0 : i32
    %c0_i32_0 = arith.constant 0 : i32
    %c0_i32_1 = arith.constant 0 : i32
    return %c0_i32, %c0_i32_0 : i32, i32
  }
  func.func @transform_4(%arg0: i32, %arg1: i32) -> (i32, i32, i32) {
    %c0_i32 = arith.constant 0 : i32
    %c0_i32_0 = arith.constant 0 : i32
    %c0_i32_1 = arith.constant 0 : i32
    return %arg1, %c0_i32, %c0_i32_0 : i32, i32, i32
  }
  func.func @transform_5(%arg0: i32, %arg1: i32) -> (i32, i32, i32) {
    %c0_i32 = arith.constant 0 : i32
    %c0_i32_0 = arith.constant 0 : i32
    %c0_i32_1 = arith.constant 0 : i32
    return %arg1, %c0_i32, %c0_i32_0 : i32, i32, i32
  }
  func.func @transform_6(%arg0: i32, %arg1: i32) -> (i32, i32, i32) {
    %c0_i32 = arith.constant 0 : i32
    %c0_i32_0 = arith.constant 0 : i32
    %c0_i32_1 = arith.constant 0 : i32
    return %arg1, %c0_i32, %c0_i32_0 : i32, i32, i32
  }
  func.func @transform_7(%arg0: i32, %arg1: i32) -> (i32, i32, i32) {
    %c0_i32 = arith.constant 0 : i32
    %c0_i32_0 = arith.constant 0 : i32
    %c0_i32_1 = arith.constant 0 : i32
    return %arg1, %c0_i32, %c0_i32_0 : i32, i32, i32
  }
  func.func @transform_8(%arg0: i32, %arg1: i32) -> (i32, i32, i32) {
    %c0_i32 = arith.constant 0 : i32
    %c0_i32_0 = arith.constant 0 : i32
    %c0_i32_1 = arith.constant 0 : i32
    return %arg1, %c0_i32, %c0_i32_0 : i32, i32, i32
  }
  func.func @transform_9(%arg0: i32, %arg1: i32) -> (i32, i32) {
    %c0_i32 = arith.constant 0 : i32
    %c0_i32_0 = arith.constant 0 : i32
    return %arg0, %c0_i32 : i32, i32
  }
}

</mosaic_0001>

<llo_original>
// kernel: bert_matcher_forward.3
$region0: #{bert_matcher_forward.3}
  #allocation0 [shape = 'u32[]', space=smem, size = 0x4, offset = 0x4, fixed_abs, tag = 'smem constant byte address 0x4 - core index']
  #allocation1 [shape = 'u32[144,128]{1,0:T(1,128)}', space=vmem, size = 0x12000, scoped, tag = 'internal scratch']
  #allocation2 [shape = 'f32[2,128]{1,0:T(2,128)}', space=vmem, size = 0x400, scoped, tag = 'scratch operand']
  %s0 = inlined_call_operand.vmem [shape: bf16[2,512], index: 0, kind: input, shape index: {}]
  %s1 = inlined_call_operand.vmem [shape: bf16[512,128], index: 1, kind: input, shape index: {}]
  %s2 = inlined_call_operand.vmem [shape: f32[1,128], index: 2, kind: input, shape index: {}, may-alias: {2,4}]
  %s3 = inlined_call_operand.vmem [shape: bf16[128,128], index: 3, kind: input, shape index: {}]
  %s4 = inlined_call_operand.vmem [shape: f32[1,128], index: 4, kind: input, shape index: {}, may-alias: {2,4}]
  %s5 = inlined_call_operand.hbm [shape: f32[2,128], index: 5, kind: output, shape index: {}]
  %s6 = sld [smem:[#allocation0]]
  $region61: #{bert_matcher_forward.3} parent=0
    _
  %s8 = ssub.s32 1, %s6
  %s9 = scalar_select 0, %s8, %s6
  $region1: #{bert_matcher_forward.3} parent=0
    #allocation3 [shape = 'u8[1024]{0}', space=vmem, size = 0x400, scoped, tag = 'output window, operand 0, single buffered']
    #allocation4 [shape = 's32[2]{0}', space=sflag, size = 0x8, scoped, tag = 'scoped memory for bert_matcher_forward.3']
    %10 = vsyncpa [#allocation4], 0
    loop: start=0, step=1, limit=6
    $region2: #{bert_matcher_forward.3} parent=1 // loop_pre_header
      _
    $region3: #{bert_matcher_forward.3} parent=1 // loop_header
      %s12 = sphi 0, %s16
      %p13 = scmp.ge.s32.totalorder %s12, 6
      %s22 = sphi 0, %s24
      %s25 = sphi 0, %s22
      %s26 = sphi 0, %s25
      %s42 = sphi 0, %s26
      %s48 = sphi 0, %s50
      %s51 = sphi 0, %s48
      %s52 = sphi 0, %s51
      %s68 = sphi 0, %s52
      %s72 = sphi 0, %s72
      %s74 = sphi 0, %s72
      %s75 = sphi 0, %s74
      %s89 = sphi 0, %s75
      %s93 = sphi 0, %s93
      %s95 = sphi 0, %s93
      %s96 = sphi 0, %s95
      %s110 = sphi 0, %s96
      %s114 = sphi 0, %s114
      %s116 = sphi 0, %s114
      %s117 = sphi 0, %s116
      %s131 = sphi 0, %s117
      %s135 = sphi 0, %s135
      %s137 = sphi 0, %s135
      %s138 = sphi 0, %s137
      %s152 = sphi 0, %s138
    $region4: #{bert_matcher_forward.3} parent=1 // loop_header_branch
      %15 = sbr.rel (%p13) target = $region8
    $region5: #{bert_matcher_forward.3} parent=1 // loop_body
      %s17 = ssub.s32 %s12, 1
      %s18 = ssub.s32 %s12, 2
      %s19 = sadd.s32 %s12, 1
      %s20 = ssub.s32 %s12, %s19
      %p21 = scmp.eq.s32.totalorder %s20, 0
      %s23 = sadd.s32 %s22, 1
      %s24 = scalar_select %p21, %s22, %s23
      %p27 = pneg %p21
      %p28 = scmp.eq.s32.totalorder %s12, 3
      %p29 = por %p27, %p28
      %p30 = scmp.ne.s32.totalorder %s22, %s25
      %p31 = scmp.eq.s32.totalorder %s12, 0
      %p32 = por %p30, %p31
      %p33 = scmp.ne.s32.totalorder %s22, %s25
      %p34 = scmp.eq.s32.totalorder %s17, 3
      %p35 = por %p33, %p34
      %p36 = scmp.ne.s32.totalorder %s25, %s26
      %p37 = scmp.eq.s32.totalorder %s17, 0
      %p38 = por %p36, %p37
      %p39 = scmp.ne.s32.totalorder %s25, %s26
      %p40 = scmp.eq.s32.totalorder %s18, 3
      %p41 = por %p39, %p40
      %p43 = scmp.ne.s32.totalorder %s26, %s42
      %p44 = scmp.eq.s32.totalorder %s18, 0
      %p45 = por %p43, %p44
      %s46 = ssub.s32 %s12, %s19
      %p47 = scmp.eq.s32.totalorder %s46, 0
      %s49 = sadd.s32 %s48, 1
      %s50 = scalar_select %p47, %s48, %s49
      %p53 = pneg %p47
      %p54 = scmp.eq.s32.totalorder %s12, 3
      %p55 = por %p53, %p54
      %p56 = scmp.ne.s32.totalorder %s48, %s51
      %p57 = scmp.eq.s32.totalorder %s12, 0
      %p58 = por %p56, %p57
      %p59 = scmp.ne.s32.totalorder %s48, %s51
      %p60 = scmp.eq.s32.totalorder %s17, 3
      %p61 = por %p59, %p60
      %p62 = scmp.ne.s32.totalorder %s51, %s52
      %p63 = scmp.eq.s32.totalorder %s17, 0
      %p64 = por %p62, %p63
      %p65 = scmp.ne.s32.totalorder %s51, %s52
      %p66 = scmp.eq.s32.totalorder %s18, 3
      %p67 = por %p65, %p66
      %p69 = scmp.ne.s32.totalorder %s52, %s68
      %p70 = scmp.eq.s32.totalorder %s18, 0
      %p71 = por %p69, %p70
      %s73 = sadd.s32 %s72, 1
      %p76 = scmp.eq.s32.totalorder %s12, 3
      %p77 = scmp.ne.s32.totalorder %s72, %s74
      %p78 = scmp.eq.s32.totalorder %s12, 0
      %p79 = por %p77, %p78
      %p80 = scmp.ne.s32.totalorder %s72, %s74
      %p81 = scmp.eq.s32.totalorder %s17, 3
      %p82 = por %p80, %p81
      %p83 = scmp.ne.s32.totalorder %s74, %s75
      %p84 = scmp.eq.s32.totalorder %s17, 0
      %p85 = por %p83, %p84
      %p86 = scmp.ne.s32.totalorder %s74, %s75
      %p87 = scmp.eq.s32.totalorder %s18, 3
      %p88 = por %p86, %p87
      %p90 = scmp.ne.s32.totalorder %s75, %s89
      %p91 = scmp.eq.s32.totalorder %s18, 0
      %p92 = por %p90, %p91
      %s94 = sadd.s32 %s93, 1
      %p97 = scmp.eq.s32.totalorder %s12, 3
      %p98 = scmp.ne.s32.totalorder %s93, %s95
      %p99 = scmp.eq.s32.totalorder %s12, 0
      %p100 = por %p98, %p99
      %p101 = scmp.ne.s32.totalorder %s93, %s95
      %p102 = scmp.eq.s32.totalorder %s17, 3
      %p103 = por %p101, %p102
      %p104 = scmp.ne.s32.totalorder %s95, %s96
      %p105 = scmp.eq.s32.totalorder %s17, 0
      %p106 = por %p104, %p105
      %p107 = scmp.ne.s32.totalorder %s95, %s96
      %p108 = scmp.eq.s32.totalorder %s18, 3
      %p109 = por %p107, %p108
      %p111 = scmp.ne.s32.totalorder %s96, %s110
      %p112 = scmp.eq.s32.totalorder %s18, 0
      %p113 = por %p111, %p112
      %s115 = sadd.s32 %s114, 1
      %p118 = scmp.eq.s32.totalorder %s12, 3
      %p119 = scmp.ne.s32.totalorder %s114, %s116
      %p120 = scmp.eq.s32.totalorder %s12, 0
      %p121 = por %p119, %p120
      %p122 = scmp.ne.s32.totalorder %s114, %s116
      %p123 = scmp.eq.s32.totalorder %s17, 3
      %p124 = por %p122, %p123
      %p125 = scmp.ne.s32.totalorder %s116, %s117
      %p126 = scmp.eq.s32.totalorder %s17, 0
      %p127 = por %p125, %p126
      %p128 = scmp.ne.s32.totalorder %s116, %s117
      %p129 = scmp.eq.s32.totalorder %s18, 3
      %p130 = por %p128, %p129
      %p132 = scmp.ne.s32.totalorder %s117, %s131
      %p133 = scmp.eq.s32.totalorder %s18, 0
      %p134 = por %p132, %p133
      %s136 = sadd.s32 %s135, 1
      %p139 = scmp.eq.s32.totalorder %s12, 3
      %p140 = scmp.ne.s32.totalorder %s135, %s137
      %p141 = scmp.eq.s32.totalorder %s12, 0
      %p142 = por %p140, %p141
      %p143 = scmp.ne.s32.totalorder %s135, %s137
      %p144 = scmp.eq.s32.totalorder %s17, 3
      %p145 = por %p143, %p144
      %p146 = scmp.ne.s32.totalorder %s137, %s138
      %p147 = scmp.eq.s32.totalorder %s17, 0
      %p148 = por %p146, %p147
      %p149 = scmp.ne.s32.totalorder %s137, %s138
      %p150 = scmp.eq.s32.totalorder %s18, 3
      %p151 = por %p149, %p150
      %p153 = scmp.ne.s32.totalorder %s138, %s152
      %p154 = scmp.eq.s32.totalorder %s18, 0
      %p155 = por %p153, %p154
      %p156 = scmp.le.s32.totalorder 1, %s12
      %p157 = scmp.lt.s32.totalorder %s12, 5
      %p158 = pnand %p156, %p157
      %p159 = pneg %p158
      // Predicated region
      $region9: #{bert_matcher_forward.3} parent=5 // pred_check
        _
      $region10: #{bert_matcher_forward.3} parent=5 // pred_check_branch
        %161 = sbr.rel (%p158) target = $region12
      $region11: #{bert_matcher_forward.3} parent=5 // pred_region
        %s162 = ssub.s32 %s12, 1
        // Predicated region
        $region13: #{bert_matcher_forward.3} parent=11 // pred_check
          %p163 = pneg %p85
        $region14: #{bert_matcher_forward.3} parent=11 // pred_check_branch
          %165 = sbr.rel (%p163) target = $region16
        $region15: #{bert_matcher_forward.3} parent=11 // pred_region
          _
        $region16: #{bert_matcher_forward.3} parent=11 // pred_fallthru
          _
        // Predicated region
        $region17: #{bert_matcher_forward.3} parent=11 // pred_check
          %p166 = pneg %p106
        $region18: #{bert_matcher_forward.3} parent=11 // pred_check_branch
          %168 = sbr.rel (%p166) target = $region20
        $region19: #{bert_matcher_forward.3} parent=11 // pred_region
          _
        $region20: #{bert_matcher_forward.3} parent=11 // pred_fallthru
          _
        // Predicated region
        $region21: #{bert_matcher_forward.3} parent=11 // pred_check
          %p169 = pneg %p127
        $region22: #{bert_matcher_forward.3} parent=11 // pred_check_branch
          %171 = sbr.rel (%p169) target = $region24
        $region23: #{bert_matcher_forward.3} parent=11 // pred_region
          _
        $region24: #{bert_matcher_forward.3} parent=11 // pred_fallthru
          _
      $region12: #{bert_matcher_forward.3} parent=5 // pred_fallthru
        _
      %p172 = scmp.lt.s32.totalorder %s12, 4
      // Predicated region
      $region25: #{bert_matcher_forward.3} parent=5 // pred_check
        %p173 = pneg %p172
      $region26: #{bert_matcher_forward.3} parent=5 // pred_check_branch
        %175 = sbr.rel (%p173) target = $region28
      $region27: #{bert_matcher_forward.3} parent=5 // pred_region
        // Predicated region
        $region29: #{bert_matcher_forward.3} parent=27 // pred_check
          %p176 = pneg %p32
        $region30: #{bert_matcher_forward.3} parent=27 // pred_check_branch
          %178 = sbr.rel (%p176) target = $region32
        $region31: #{bert_matcher_forward.3} parent=27 // pred_region
          %p179 = scmp.lt.s32.totalorder %s12, 3
          %s180 = scalar_select %p179, %s12, 3
          %s181 = scalar_lea.vmem %s0, %s180
        $region32: #{bert_matcher_forward.3} parent=27 // pred_fallthru
          _
        // Predicated region
        $region33: #{bert_matcher_forward.3} parent=27 // pred_check
          %p182 = pneg %p58
        $region34: #{bert_matcher_forward.3} parent=27 // pred_check_branch
          %184 = sbr.rel (%p182) target = $region36
        $region35: #{bert_matcher_forward.3} parent=27 // pred_region
          %s185 = smul.u32 16, %s12
          %p186 = scmp.lt.s32.totalorder %s185, 63
          %s187 = scalar_select %p186, %s185, 63
          %s188 = smul.addr %s187, 4
          %s189 = scalar_lea.vmem %s1, %s188
          %s190 = smul.u32 16, %s12
        $region36: #{bert_matcher_forward.3} parent=27 // pred_fallthru
          _
      $region28: #{bert_matcher_forward.3} parent=5 // pred_fallthru
        _
      %p191 = scmp.le.s32.totalorder 1, %s12
      %p192 = scmp.lt.s32.totalorder %s12, 5
      %p193 = pnand %p191, %p192
      %p194 = pneg %p193
      // Predicated region
      $region37: #{bert_matcher_forward.3} parent=5 // pred_check
        _
      $region38: #{bert_matcher_forward.3} parent=5 // pred_check_branch
        %196 = sbr.rel (%p193) target = $region40
      $region39: #{bert_matcher_forward.3} parent=5 // pred_region
        %s197 = ssub.s32 %s12, 1
        %p198 = scmp.lt.s32.totalorder %s17, 3
        %s199 = scalar_select %p198, %s17, 3
        %s200 = scalar_lea.vmem %s0, %s199
        %p201 = pneg %p38
        %p202 = pneg %p35
        %s203 = smul.u32 16, %s17
        %p204 = scmp.lt.s32.totalorder %s203, 63
        %s205 = scalar_select %p204, %s203, 63
        %s206 = smul.addr %s205, 4
        %s207 = scalar_lea.vmem %s1, %s206
        %p208 = pneg %p64
        %p209 = pneg %p61
        %p210 = pneg %p85
        %p211 = pneg %p82
        %p212 = pneg %p106
        %p213 = pneg %p103
        %p214 = pneg %p127
        %p215 = pneg %p124
        %p216 = pneg %p148
        %p217 = pneg %p145
        %p218 = scmp.lt.s32.totalorder %s17, 3
        %s219 = scalar_select %p218, %s17, 3
        %s220 = scalar_lea.vmem %s0, %s219
        %s221 = smul.u32 16, %s17
        %p222 = scmp.lt.s32.totalorder %s221, 63
        %s223 = scalar_select %p222, %s221, 63
        %s224 = smul.addr %s223, 4
        %s225 = scalar_lea.vmem %s1, %s224
        %s226 = smul.u32 16, %s17
        %p228 = scmp.eq.s32.totalorder %s17, 0
        // Predicated region
        $region41: #{bert_matcher_forward.3} parent=39 // pred_check
          %p229 = pneg %p228
        $region42: #{bert_matcher_forward.3} parent=39 // pred_check_branch
          %231 = sbr.rel (%p229) target = $region44
        $region43: #{bert_matcher_forward.3} parent=39 // pred_region
          %232 = vst [vmem:[#allocation2] sm:$0x3] 0.0
        $region44: #{bert_matcher_forward.3} parent=39 // pred_fallthru
          _
        %v233 = vld [vmem:[#allocation2] sm:$0x3]
        %v234 = vld [vmem:[%s220] sm:$0x1]
        %v235 = vld [vmem:[%s225] sm:$0xf]
        %v236 = vld [vmem:[%s225 + $0x4] sm:$0xf]
        %v237 = vld [vmem:[%s225 + $0x8] sm:$0xf]
        %v238 = vld [vmem:[%s225 + $0xc] sm:$0xf]
        %v239 = vld [vmem:[%s225 + $0x10] sm:$0xf]
        %v240 = vld [vmem:[%s225 + $0x14] sm:$0xf]
        %v241 = vld [vmem:[%s225 + $0x18] sm:$0xf]
        %v242 = vld [vmem:[%s225 + $0x1c] sm:$0xf]
        %v243 = vld [vmem:[%s225 + $0x20] sm:$0xf]
        %v244 = vld [vmem:[%s225 + $0x24] sm:$0xf]
        %v245 = vld [vmem:[%s225 + $0x28] sm:$0xf]
        %v246 = vld [vmem:[%s225 + $0x2c] sm:$0xf]
        %v247 = vld [vmem:[%s225 + $0x30] sm:$0xf]
        %v248 = vld [vmem:[%s225 + $0x34] sm:$0xf]
        %v249 = vld [vmem:[%s225 + $0x38] sm:$0xf]
        %v250 = vld [vmem:[%s225 + $0x3c] sm:$0xf]
        %v267 = vunpack.c.l.b16 %v235
        %v268 = vunpack.c.l.b16 %v236
        %v269 = vunpack.c.l.b16 %v237
        %v270 = vunpack.c.l.b16 %v238
        %v271 = vunpack.c.l.b16 %v239
        %v272 = vunpack.c.l.b16 %v240
        %v273 = vunpack.c.l.b16 %v241
        %v274 = vunpack.c.l.b16 %v242
        %v275 = vunpack.c.l.b16 %v243
        %v276 = vunpack.c.l.b16 %v244
        %v277 = vunpack.c.l.b16 %v245
        %v278 = vunpack.c.l.b16 %v246
        %v279 = vunpack.c.l.b16 %v247
        %v280 = vunpack.c.l.b16 %v248
        %v281 = vunpack.c.l.b16 %v249
        %v282 = vunpack.c.l.b16 %v250
        %v283 = vpack.c.b16 %v268, %v267
        %v284 = vpack.c.b16 %v270, %v269
        %v285 = vpack.c.b16 %v272, %v271
        %v286 = vpack.c.b16 %v274, %v273
        %v287 = vpack.c.b16 %v276, %v275
        %v288 = vpack.c.b16 %v278, %v277
        %v289 = vpack.c.b16 %v280, %v279
        %v290 = vpack.c.b16 %v282, %v281
        %299 = vmatprep.subr.bf16.mxu0 0
        %300 = vmatpush1.bf16.msra.mxu0 %v290
        %301 = vmatprep.subr.bf16.mxu0 0
        %302 = vmatpush1.bf16.msra.mxu0 %v289
        %303 = vmatprep.subr.bf16.mxu0 0
        %304 = vmatpush1.bf16.msra.mxu0 %v288
        %305 = vmatprep.subr.bf16.mxu0 0
        %306 = vmatpush1.bf16.msra.mxu0 %v287
        %307 = vmatprep.subr.bf16.mxu0 0
        %308 = vmatpush1.bf16.msra.mxu0 %v286
        %309 = vmatprep.subr.bf16.mxu0 0
        %310 = vmatpush1.bf16.msra.mxu0 %v285
        %311 = vmatprep.subr.bf16.mxu0 0
        %312 = vmatpush1.bf16.msra.mxu0 %v284
        %313 = vmatprep.subr.bf16.mxu0 0
        %314 = vmatpush1.bf16.msra.mxu0 %v283
        %315 = vmatprep.subr.bf16.mxu0 0
        %316 = vmatpush2.bf16.msra.mxu0 0
        %317 = vmatprep.subr.bf16.mxu0 0
        %318 = vmatpush2.bf16.msra.mxu0 0
        %319 = vmatprep.subr.bf16.mxu0 0
        %320 = vmatpush2.bf16.msra.mxu0 0
        %321 = vmatprep.subr.bf16.mxu0 0
        %322 = vmatpush2.bf16.msra.mxu0 0
        %323 = vmatprep.subr.bf16.mxu0 0
        %324 = vmatpush2.bf16.msra.mxu0 0
        %325 = vmatprep.subr.bf16.mxu0 0
        %326 = vmatpush2.bf16.msra.mxu0 0
        %327 = vmatprep.subr.bf16.mxu0 0
        %328 = vmatpush2.bf16.msra.mxu0 0
        %329 = vmatprep.subr.bf16.mxu0 0
        %330 = vmatpush2.bf16.msra.mxu0 0
        %331 = vmatprep.mubr.bf16.mxu0 0
        %332 = vmatmul.mubr.bf16.gmra.mxu0 %v234
        %v333 = vpop.f32.mrf.mxu0
        %v334 = vadd.f32 0.0, %v333
        %v335 = vpop.f32.mrf.mxu0
        %v336 = vpop.f32.mrf.mxu0
        %v337 = vpop.f32.mrf.mxu0
        %338 = vdwg.mxu0
        %v339 = vadd.f32 %v233, %v334
        %340 = vst [vmem:[#allocation2] sm:$0x3] %v339
        %p341 = scmp.eq.s32.totalorder %s17, 3
        // Predicated region
        $region45: #{bert_matcher_forward.3} parent=39 // pred_check
          %p342 = pneg %p341
        $region46: #{bert_matcher_forward.3} parent=39 // pred_check_branch
          %344 = sbr.rel (%p342) target = $region48
        $region47: #{bert_matcher_forward.3} parent=39 // pred_region
          %v345 = vld [vmem:[#allocation2] sm:$0x3]
          %v346 = vld [vmem:[%s2] sm:$0x1]
          %v348 = vlaneseq
          %v349 = vshrl.u32 %v348, 7
          %v350 = vsub.s32 0, %v349
          %v351 = vrot.slane %v346, %v350
          %v353 = vadd.f32 %v345, %v351
          %v354 = vld [vmem:[%s3] sm:$0xf]
          %v355 = vld [vmem:[%s3 + $0x4] sm:$0xf]
          %v356 = vld [vmem:[%s3 + $0x8] sm:$0xf]
          %v357 = vld [vmem:[%s3 + $0xc] sm:$0xf]
          %v358 = vld [vmem:[%s3 + $0x10] sm:$0xf]
          %v359 = vld [vmem:[%s3 + $0x14] sm:$0xf]
          %v360 = vld [vmem:[%s3 + $0x18] sm:$0xf]
          %v361 = vld [vmem:[%s3 + $0x1c] sm:$0xf]
          %v362 = vld [vmem:[%s3 + $0x20] sm:$0xf]
          %v363 = vld [vmem:[%s3 + $0x24] sm:$0xf]
          %v364 = vld [vmem:[%s3 + $0x28] sm:$0xf]
          %v365 = vld [vmem:[%s3 + $0x2c] sm:$0xf]
          %v366 = vld [vmem:[%s3 + $0x30] sm:$0xf]
          %v367 = vld [vmem:[%s3 + $0x34] sm:$0xf]
          %v368 = vld [vmem:[%s3 + $0x38] sm:$0xf]
          %v369 = vld [vmem:[%s3 + $0x3c] sm:$0xf]
          %v370 = vpack.c.bf16 %v353, %v353
          %v371 = vld [vmem:[%s4] sm:$0x1]
          %v373 = vlaneseq
          %v374 = vshrl.u32 %v373, 7
          %v375 = vsub.s32 0, %v374
          %v376 = vrot.slane %v371, %v375
          %v394 = vunpack.c.l.b16 %v354
          %v395 = vunpack.c.l.b16 %v355
          %v396 = vunpack.c.l.b16 %v356
          %v397 = vunpack.c.l.b16 %v357
          %v398 = vunpack.c.l.b16 %v358
          %v399 = vunpack.c.l.b16 %v359
          %v400 = vunpack.c.l.b16 %v360
          %v401 = vunpack.c.l.b16 %v361
          %v402 = vunpack.c.l.b16 %v362
          %v403 = vunpack.c.l.b16 %v363
          %v404 = vunpack.c.l.b16 %v364
          %v405 = vunpack.c.l.b16 %v365
          %v406 = vunpack.c.l.b16 %v366
          %v407 = vunpack.c.l.b16 %v367
          %v408 = vunpack.c.l.b16 %v368
          %v409 = vunpack.c.l.b16 %v369
          %v410 = vpack.c.b16 %v395, %v394
          %v411 = vpack.c.b16 %v397, %v396
          %v412 = vpack.c.b16 %v399, %v398
          %v413 = vpack.c.b16 %v401, %v400
          %v414 = vpack.c.b16 %v403, %v402
          %v415 = vpack.c.b16 %v405, %v404
          %v416 = vpack.c.b16 %v407, %v406
          %v417 = vpack.c.b16 %v409, %v408
          %426 = vmatprep.subr.bf16.mxu0 0
          %427 = vmatpush1.bf16.msra.mxu0 %v417
          %428 = vmatprep.subr.bf16.mxu0 0
          %429 = vmatpush1.bf16.msra.mxu0 %v416
          %430 = vmatprep.subr.bf16.mxu0 0
          %431 = vmatpush1.bf16.msra.mxu0 %v415
          %432 = vmatprep.subr.bf16.mxu0 0
          %433 = vmatpush1.bf16.msra.mxu0 %v414
          %434 = vmatprep.subr.bf16.mxu0 0
          %435 = vmatpush1.bf16.msra.mxu0 %v413
          %436 = vmatprep.subr.bf16.mxu0 0
          %437 = vmatpush1.bf16.msra.mxu0 %v412
          %438 = vmatprep.subr.bf16.mxu0 0
          %439 = vmatpush1.bf16.msra.mxu0 %v411
          %440 = vmatprep.subr.bf16.mxu0 0
          %441 = vmatpush1.bf16.msra.mxu0 %v410
          %442 = vmatprep.subr.bf16.mxu0 0
          %443 = vmatpush2.bf16.msra.mxu0 0
          %444 = vmatprep.subr.bf16.mxu0 0
          %445 = vmatpush2.bf16.msra.mxu0 0
          %446 = vmatprep.subr.bf16.mxu0 0
          %447 = vmatpush2.bf16.msra.mxu0 0
          %448 = vmatprep.subr.bf16.mxu0 0
          %449 = vmatpush2.bf16.msra.mxu0 0
          %450 = vmatprep.subr.bf16.mxu0 0
          %451 = vmatpush2.bf16.msra.mxu0 0
          %452 = vmatprep.subr.bf16.mxu0 0
          %453 = vmatpush2.bf16.msra.mxu0 0
          %454 = vmatprep.subr.bf16.mxu0 0
          %455 = vmatpush2.bf16.msra.mxu0 0
          %456 = vmatprep.subr.bf16.mxu0 0
          %457 = vmatpush2.bf16.msra.mxu0 0
          %458 = vmatprep.mubr.bf16.mxu0 0
          %459 = vmatmul.mubr.bf16.gmra.mxu0 %v370
          %v460 = vpop.f32.mrf.mxu0
          %v461 = vadd.f32 %v376, %v460
          %v462 = vpop.f32.mrf.mxu0
          %v463 = vpop.f32.mrf.mxu0
          %v464 = vpop.f32.mrf.mxu0
          %465 = vdwg.mxu0
          %466 = vst [vmem:[#allocation3] sm:$0x3] %v461
        $region48: #{bert_matcher_forward.3} parent=39 // pred_fallthru
          _
        // Predicated region
        $region49: #{bert_matcher_forward.3} parent=39 // pred_check
          %p467 = pneg %p145
        $region50: #{bert_matcher_forward.3} parent=39 // pred_check_branch
          %469 = sbr.rel (%p467) target = $region52
        $region51: #{bert_matcher_forward.3} parent=39 // pred_region
          %s471 = ssub.s32 32, 32
          %472 = vsyncadd [#allocation4], %s471
          %s474 = sshll.u32 [#allocation3], 4
          %s475 = int_to_ptr.vmem [resolvable:$true] %s474
          %477 = dma.vmem_to_hbm [thread:$0]  %s475, 32, %s5, [#allocation4]
        $region52: #{bert_matcher_forward.3} parent=39 // pred_fallthru
          _
        // Predicated region
        $region53: #{bert_matcher_forward.3} parent=39 // pred_check
          %p478 = pneg %p145
        $region54: #{bert_matcher_forward.3} parent=39 // pred_check_branch
          %480 = sbr.rel (%p478) target = $region56
        $region55: #{bert_matcher_forward.3} parent=39 // pred_region
          %481 = dma.done [#allocation4], 32
        $region56: #{bert_matcher_forward.3} parent=39 // pred_fallthru
          _
      $region40: #{bert_matcher_forward.3} parent=5 // pred_fallthru
        _
      %p482 = scmp.le.s32.totalorder 2, %s12
      // Predicated region
      $region57: #{bert_matcher_forward.3} parent=5 // pred_check
        %p483 = pneg %p482
      $region58: #{bert_matcher_forward.3} parent=5 // pred_check_branch
        %485 = sbr.rel (%p483) target = $region60
      $region59: #{bert_matcher_forward.3} parent=5 // pred_region
        %s486 = ssub.s32 %s12, 2
      $region60: #{bert_matcher_forward.3} parent=5 // pred_fallthru
        _
    $region6: #{bert_matcher_forward.3} parent=1 // loop_footer
      %s16 = sadd.s32 1, %s12
    $region7: #{bert_matcher_forward.3} parent=1 // loop_footer_branch
      %11 = sbr.rel target = $region3
    $region8: #{bert_matcher_forward.3} parent=1 // loop_exit
      _
    %487 = vsyncpa [#allocation4], 1
    %s488 = scalar_lea.sflag [#allocation4], 1
    %489 = vsyncpa %s488, 1

// kernel: bert_matcher_forward.2
$region0: #{bert_matcher_forward.2}
  #allocation0 [shape = 'u32[]', space=smem, size = 0x4, offset = 0x4, fixed_abs, tag = 'smem constant byte address 0x4 - core index']
  #allocation1 [shape = 'u32[144,128]{1,0:T(1,128)}', space=vmem, size = 0x12000, scoped, tag = 'internal scratch']
  #allocation2 [shape = 'f32[32,32]{1,0:T(8,128)}', space=vmem, size = 0x4000, scoped, tag = 'scratch operand']
  %s0 = inlined_call_operand.vmem [shape: f32[32,32], index: 0, kind: input, shape index: {}]
  %s1 = inlined_call_operand.vmem [shape: f32[4,8], index: 1, kind: input, shape index: {}]
  %s2 = inlined_call_operand.vmem [shape: f32[1,32], index: 2, kind: input, shape index: {}]
  %s3 = inlined_call_operand.vmem [shape: f32[1,32], index: 3, kind: input, shape index: {}]
  %s4 = inlined_call_operand.vmem [shape: bf16[2,32,96], index: 4, kind: input, shape index: {}]
  %s5 = inlined_call_operand.vmem [shape: bf16[2,32,32], index: 5, kind: input, shape index: {}]
  %s6 = inlined_call_operand.vmem [shape: bf16[2,32,64], index: 6, kind: input, shape index: {}]
  %s7 = inlined_call_operand.vmem [shape: bf16[2,64,32], index: 7, kind: input, shape index: {}]
  %s8 = inlined_call_operand.vmem [shape: f32[2,8,128], index: 8, kind: input, shape index: {}]
  %s9 = inlined_call_operand.vmem [shape: bf16[32,32], index: 9, kind: output, shape index: {}]
  %s10 = sld [smem:[#allocation0]]
  $region77: #{bert_matcher_forward.2} parent=0
    _
  %s12 = ssub.s32 1, %s10
  %s13 = scalar_select 0, %s12, %s10
  loop: start=0, step=1, limit=4
  $region2: #{bert_matcher_forward.2} parent=0 // loop_pre_header
    _
  $region3: #{bert_matcher_forward.2} parent=0 // loop_header
    %s15 = sphi 0, %s19
    %p16 = scmp.ge.s32.totalorder %s15, 4
    %s22 = sphi 0, %s34
    %s23 = sphi 0, %s30
    %s24 = sphi 0, %s22
    %s25 = sphi 0, %s23
    %s26 = sphi 0, %s24
    %s27 = sphi 0, %s25
    %s37 = sphi 0, %s39
    %s40 = sphi 0, %s37
    %s41 = sphi 0, %s40
    %s57 = sphi 0, %s41
    %s61 = sphi 0, %s61
    %s63 = sphi 0, %s61
    %s64 = sphi 0, %s63
    %s78 = sphi 0, %s64
    %s82 = sphi 0, %s82
    %s84 = sphi 0, %s82
    %s85 = sphi 0, %s84
    %s99 = sphi 0, %s85
    %s103 = sphi 0, %s103
    %s105 = sphi 0, %s103
    %s106 = sphi 0, %s105
    %s120 = sphi 0, %s106
    %s126 = sphi 0, %s128
    %s129 = sphi 0, %s126
    %s130 = sphi 0, %s129
    %s146 = sphi 0, %s130
    %s152 = sphi 0, %s154
    %s155 = sphi 0, %s152
    %s156 = sphi 0, %s155
    %s172 = sphi 0, %s156
    %s178 = sphi 0, %s180
    %s181 = sphi 0, %s178
    %s182 = sphi 0, %s181
    %s198 = sphi 0, %s182
    %s204 = sphi 0, %s206
    %s207 = sphi 0, %s204
    %s208 = sphi 0, %s207
    %s224 = sphi 0, %s208
    %s230 = sphi 0, %s232
    %s233 = sphi 0, %s230
    %s234 = sphi 0, %s233
    %s250 = sphi 0, %s234
    %s256 = sphi 0, %s258
    %s259 = sphi 0, %s256
    %s260 = sphi 0, %s259
    %s276 = sphi 0, %s260
  $region4: #{bert_matcher_forward.2} parent=0 // loop_header_branch
    %18 = sbr.rel (%p16) target = $region8
  $region5: #{bert_matcher_forward.2} parent=0 // loop_body
    %s20 = ssub.s32 %s15, 1
    %s21 = ssub.s32 %s15, 2
    %s28 = sadd.s32 1, %s23
    %p29 = scmp.ge.s32.totalorder %s28, 2
    %s30 = scalar_select %p29, 0, %s28
    %s31 = sadd.s32 1, %s22
    %s32 = scalar_select %p29, %s31, %s22
    %p33 = scmp.ge.s32.totalorder %s32, 1
    %s34 = scalar_select %p33, 0, %s32
    %s35 = ssub.s32 %s22, %s34
    %p36 = scmp.eq.s32.totalorder %s35, 0
    %s38 = sadd.s32 %s37, 1
    %s39 = scalar_select %p36, %s37, %s38
    %p42 = pneg %p36
    %p43 = scmp.eq.s32.totalorder %s15, 1
    %p44 = por %p42, %p43
    %p45 = scmp.ne.s32.totalorder %s37, %s40
    %p46 = scmp.eq.s32.totalorder %s15, 0
    %p47 = por %p45, %p46
    %p48 = scmp.ne.s32.totalorder %s37, %s40
    %p49 = scmp.eq.s32.totalorder %s20, 1
    %p50 = por %p48, %p49
    %p51 = scmp.ne.s32.totalorder %s40, %s41
    %p52 = scmp.eq.s32.totalorder %s20, 0
    %p53 = por %p51, %p52
    %p54 = scmp.ne.s32.totalorder %s40, %s41
    %p55 = scmp.eq.s32.totalorder %s21, 1
    %p56 = por %p54, %p55
    %p58 = scmp.ne.s32.totalorder %s41, %s57
    %p59 = scmp.eq.s32.totalorder %s21, 0
    %p60 = por %p58, %p59
    %s62 = sadd.s32 %s61, 1
    %p65 = scmp.eq.s32.totalorder %s15, 1
    %p66 = scmp.ne.s32.totalorder %s61, %s63
    %p67 = scmp.eq.s32.totalorder %s15, 0
    %p68 = por %p66, %p67
    %p69 = scmp.ne.s32.totalorder %s61, %s63
    %p70 = scmp.eq.s32.totalorder %s20, 1
    %p71 = por %p69, %p70
    %p72 = scmp.ne.s32.totalorder %s63, %s64
    %p73 = scmp.eq.s32.totalorder %s20, 0
    %p74 = por %p72, %p73
    %p75 = scmp.ne.s32.totalorder %s63, %s64
    %p76 = scmp.eq.s32.totalorder %s21, 1
    %p77 = por %p75, %p76
    %p79 = scmp.ne.s32.totalorder %s64, %s78
    %p80 = scmp.eq.s32.totalorder %s21, 0
    %p81 = por %p79, %p80
    %s83 = sadd.s32 %s82, 1
    %p86 = scmp.eq.s32.totalorder %s15, 1
    %p87 = scmp.ne.s32.totalorder %s82, %s84
    %p88 = scmp.eq.s32.totalorder %s15, 0
    %p89 = por %p87, %p88
    %p90 = scmp.ne.s32.totalorder %s82, %s84
    %p91 = scmp.eq.s32.totalorder %s20, 1
    %p92 = por %p90, %p91
    %p93 = scmp.ne.s32.totalorder %s84, %s85
    %p94 = scmp.eq.s32.totalorder %s20, 0
    %p95 = por %p93, %p94
    %p96 = scmp.ne.s32.totalorder %s84, %s85
    %p97 = scmp.eq.s32.totalorder %s21, 1
    %p98 = por %p96, %p97
    %p100 = scmp.ne.s32.totalorder %s85, %s99
    %p101 = scmp.eq.s32.totalorder %s21, 0
    %p102 = por %p100, %p101
    %s104 = sadd.s32 %s103, 1
    %p107 = scmp.eq.s32.totalorder %s15, 1
    %p108 = scmp.ne.s32.totalorder %s103, %s105
    %p109 = scmp.eq.s32.totalorder %s15, 0
    %p110 = por %p108, %p109
    %p111 = scmp.ne.s32.totalorder %s103, %s105
    %p112 = scmp.eq.s32.totalorder %s20, 1
    %p113 = por %p111, %p112
    %p114 = scmp.ne.s32.totalorder %s105, %s106
    %p115 = scmp.eq.s32.totalorder %s20, 0
    %p116 = por %p114, %p115
    %p117 = scmp.ne.s32.totalorder %s105, %s106
    %p118 = scmp.eq.s32.totalorder %s21, 1
    %p119 = por %p117, %p118
    %p121 = scmp.ne.s32.totalorder %s106, %s120
    %p122 = scmp.eq.s32.totalorder %s21, 0
    %p123 = por %p121, %p122
    %s124 = ssub.s32 %s23, %s30
    %p125 = scmp.eq.s32.totalorder %s124, 0
    %s127 = sadd.s32 %s126, 1
    %s128 = scalar_select %p125, %s126, %s127
    %p131 = pneg %p125
    %p132 = scmp.eq.s32.totalorder %s15, 1
    %p133 = por %p131, %p132
    %p134 = scmp.ne.s32.totalorder %s126, %s129
    %p135 = scmp.eq.s32.totalorder %s15, 0
    %p136 = por %p134, %p135
    %p137 = scmp.ne.s32.totalorder %s126, %s129
    %p138 = scmp.eq.s32.totalorder %s20, 1
    %p139 = por %p137, %p138
    %p140 = scmp.ne.s32.totalorder %s129, %s130
    %p141 = scmp.eq.s32.totalorder %s20, 0
    %p142 = por %p140, %p141
    %p143 = scmp.ne.s32.totalorder %s129, %s130
    %p144 = scmp.eq.s32.totalorder %s21, 1
    %p145 = por %p143, %p144
    %p147 = scmp.ne.s32.totalorder %s130, %s146
    %p148 = scmp.eq.s32.totalorder %s21, 0
    %p149 = por %p147, %p148
    %s150 = ssub.s32 %s23, %s30
    %p151 = scmp.eq.s32.totalorder %s150, 0
    %s153 = sadd.s32 %s152, 1
    %s154 = scalar_select %p151, %s152, %s153
    %p157 = pneg %p151
    %p158 = scmp.eq.s32.totalorder %s15, 1
    %p159 = por %p157, %p158
    %p160 = scmp.ne.s32.totalorder %s152, %s155
    %p161 = scmp.eq.s32.totalorder %s15, 0
    %p162 = por %p160, %p161
    %p163 = scmp.ne.s32.totalorder %s152, %s155
    %p164 = scmp.eq.s32.totalorder %s20, 1
    %p165 = por %p163, %p164
    %p166 = scmp.ne.s32.totalorder %s155, %s156
    %p167 = scmp.eq.s32.totalorder %s20, 0
    %p168 = por %p166, %p167
    %p169 = scmp.ne.s32.totalorder %s155, %s156
    %p170 = scmp.eq.s32.totalorder %s21, 1
    %p171 = por %p169, %p170
    %p173 = scmp.ne.s32.totalorder %s156, %s172
    %p174 = scmp.eq.s32.totalorder %s21, 0
    %p175 = por %p173, %p174
    %s176 = ssub.s32 %s23, %s30
    %p177 = scmp.eq.s32.totalorder %s176, 0
    %s179 = sadd.s32 %s178, 1
    %s180 = scalar_select %p177, %s178, %s179
    %p183 = pneg %p177
    %p184 = scmp.eq.s32.totalorder %s15, 1
    %p185 = por %p183, %p184
    %p186 = scmp.ne.s32.totalorder %s178, %s181
    %p187 = scmp.eq.s32.totalorder %s15, 0
    %p188 = por %p186, %p187
    %p189 = scmp.ne.s32.totalorder %s178, %s181
    %p190 = scmp.eq.s32.totalorder %s20, 1
    %p191 = por %p189, %p190
    %p192 = scmp.ne.s32.totalorder %s181, %s182
    %p193 = scmp.eq.s32.totalorder %s20, 0
    %p194 = por %p192, %p193
    %p195 = scmp.ne.s32.totalorder %s181, %s182
    %p196 = scmp.eq.s32.totalorder %s21, 1
    %p197 = por %p195, %p196
    %p199 = scmp.ne.s32.totalorder %s182, %s198
    %p200 = scmp.eq.s32.totalorder %s21, 0
    %p201 = por %p199, %p200
    %s202 = ssub.s32 %s23, %s30
    %p203 = scmp.eq.s32.totalorder %s202, 0
    %s205 = sadd.s32 %s204, 1
    %s206 = scalar_select %p203, %s204, %s205
    %p209 = pneg %p203
    %p210 = scmp.eq.s32.totalorder %s15, 1
    %p211 = por %p209, %p210
    %p212 = scmp.ne.s32.totalorder %s204, %s207
    %p213 = scmp.eq.s32.totalorder %s15, 0
    %p214 = por %p212, %p213
    %p215 = scmp.ne.s32.totalorder %s204, %s207
    %p216 = scmp.eq.s32.totalorder %s20, 1
    %p217 = por %p215, %p216
    %p218 = scmp.ne.s32.totalorder %s207, %s208
    %p219 = scmp.eq.s32.totalorder %s20, 0
    %p220 = por %p218, %p219
    %p221 = scmp.ne.s32.totalorder %s207, %s208
    %p222 = scmp.eq.s32.totalorder %s21, 1
    %p223 = por %p221, %p222
    %p225 = scmp.ne.s32.totalorder %s208, %s224
    %p226 = scmp.eq.s32.totalorder %s21, 0
    %p227 = por %p225, %p226
    %s228 = ssub.s32 %s23, %s30
    %p229 = scmp.eq.s32.totalorder %s228, 0
    %s231 = sadd.s32 %s230, 1
    %s232 = scalar_select %p229, %s230, %s231
    %p235 = pneg %p229
    %p236 = scmp.eq.s32.totalorder %s15, 1
    %p237 = por %p235, %p236
    %p238 = scmp.ne.s32.totalorder %s230, %s233
    %p239 = scmp.eq.s32.totalorder %s15, 0
    %p240 = por %p238, %p239
    %p241 = scmp.ne.s32.totalorder %s230, %s233
    %p242 = scmp.eq.s32.totalorder %s20, 1
    %p243 = por %p241, %p242
    %p244 = scmp.ne.s32.totalorder %s233, %s234
    %p245 = scmp.eq.s32.totalorder %s20, 0
    %p246 = por %p244, %p245
    %p247 = scmp.ne.s32.totalorder %s233, %s234
    %p248 = scmp.eq.s32.totalorder %s21, 1
    %p249 = por %p247, %p248
    %p251 = scmp.ne.s32.totalorder %s234, %s250
    %p252 = scmp.eq.s32.totalorder %s21, 0
    %p253 = por %p251, %p252
    %s254 = ssub.s32 %s22, %s34
    %p255 = scmp.eq.s32.totalorder %s254, 0
    %s257 = sadd.s32 %s256, 1
    %s258 = scalar_select %p255, %s256, %s257
    %p261 = pneg %p255
    %p262 = scmp.eq.s32.totalorder %s15, 1
    %p263 = por %p261, %p262
    %p264 = scmp.ne.s32.totalorder %s256, %s259
    %p265 = scmp.eq.s32.totalorder %s15, 0
    %p266 = por %p264, %p265
    %p267 = scmp.ne.s32.totalorder %s256, %s259
    %p268 = scmp.eq.s32.totalorder %s20, 1
    %p269 = por %p267, %p268
    %p270 = scmp.ne.s32.totalorder %s259, %s260
    %p271 = scmp.eq.s32.totalorder %s20, 0
    %p272 = por %p270, %p271
    %p273 = scmp.ne.s32.totalorder %s259, %s260
    %p274 = scmp.eq.s32.totalorder %s21, 1
    %p275 = por %p273, %p274
    %p277 = scmp.ne.s32.totalorder %s260, %s276
    %p278 = scmp.eq.s32.totalorder %s21, 0
    %p279 = por %p277, %p278
    %p280 = scmp.le.s32.totalorder 1, %s15
    %p281 = scmp.lt.s32.totalorder %s15, 3
    %p282 = pnand %p280, %p281
    %p283 = pneg %p282
    // Predicated region
    $region9: #{bert_matcher_forward.2} parent=5 // pred_check
      _
    $region10: #{bert_matcher_forward.2} parent=5 // pred_check_branch
      %285 = sbr.rel (%p282) target = $region12
    $region11: #{bert_matcher_forward.2} parent=5 // pred_region
      %s286 = ssub.s32 %s15, 1
      // Predicated region
      $region13: #{bert_matcher_forward.2} parent=11 // pred_check
        %p287 = pneg %p53
      $region14: #{bert_matcher_forward.2} parent=11 // pred_check_branch
        %289 = sbr.rel (%p287) target = $region16
      $region15: #{bert_matcher_forward.2} parent=11 // pred_region
        %s290 = smul.u32 4, %s24
        %p291 = scmp.lt.s32.totalorder %s290, 3
        %s292 = scalar_select %p291, %s290, 3
        %s293 = smul.addr %s292, 8
        %s294 = scalar_lea.vmem %s0, %s293
        %s295 = smul.u32 4, %s24
      $region16: #{bert_matcher_forward.2} parent=11 // pred_fallthru
        _
      // Predicated region
      $region17: #{bert_matcher_forward.2} parent=11 // pred_check
        %p296 = pneg %p74
      $region18: #{bert_matcher_forward.2} parent=11 // pred_check_branch
        %298 = sbr.rel (%p296) target = $region20
      $region19: #{bert_matcher_forward.2} parent=11 // pred_region
        _
      $region20: #{bert_matcher_forward.2} parent=11 // pred_fallthru
        _
      // Predicated region
      $region21: #{bert_matcher_forward.2} parent=11 // pred_check
        %p299 = pneg %p95
      $region22: #{bert_matcher_forward.2} parent=11 // pred_check_branch
        %301 = sbr.rel (%p299) target = $region24
      $region23: #{bert_matcher_forward.2} parent=11 // pred_region
        _
      $region24: #{bert_matcher_forward.2} parent=11 // pred_fallthru
        _
      // Predicated region
      $region25: #{bert_matcher_forward.2} parent=11 // pred_check
        %p302 = pneg %p116
      $region26: #{bert_matcher_forward.2} parent=11 // pred_check_branch
        %304 = sbr.rel (%p302) target = $region28
      $region27: #{bert_matcher_forward.2} parent=11 // pred_region
        _
      $region28: #{bert_matcher_forward.2} parent=11 // pred_fallthru
        _
    $region12: #{bert_matcher_forward.2} parent=5 // pred_fallthru
      _
    %p305 = scmp.lt.s32.totalorder %s15, 2
    // Predicated region
    $region29: #{bert_matcher_forward.2} parent=5 // pred_check
      %p306 = pneg %p305
    $region30: #{bert_matcher_forward.2} parent=5 // pred_check_branch
      %308 = sbr.rel (%p306) target = $region32
    $region31: #{bert_matcher_forward.2} parent=5 // pred_region
      // Predicated region
      $region33: #{bert_matcher_forward.2} parent=31 // pred_check
        %p309 = pneg %p136
      $region34: #{bert_matcher_forward.2} parent=31 // pred_check_branch
        %311 = sbr.rel (%p309) target = $region36
      $region35: #{bert_matcher_forward.2} parent=31 // pred_region
        %p312 = scmp.lt.s32.totalorder %s23, 1
        %s313 = scalar_select %p312, %s23, 1
        %s314 = smul.addr %s313, 4
        %s315 = smul.addr %s314, 4
        %s316 = scalar_lea.vmem %s4, %s315
      $region36: #{bert_matcher_forward.2} parent=31 // pred_fallthru
        _
      // Predicated region
      $region37: #{bert_matcher_forward.2} parent=31 // pred_check
        %p317 = pneg %p162
      $region38: #{bert_matcher_forward.2} parent=31 // pred_check_branch
        %319 = sbr.rel (%p317) target = $region40
      $region39: #{bert_matcher_forward.2} parent=31 // pred_region
        %p320 = scmp.lt.s32.totalorder %s23, 1
        %s321 = scalar_select %p320, %s23, 1
        %s322 = smul.addr %s321, 4
        %s323 = smul.addr %s322, 4
        %s324 = scalar_lea.vmem %s5, %s323
      $region40: #{bert_matcher_forward.2} parent=31 // pred_fallthru
        _
      // Predicated region
      $region41: #{bert_matcher_forward.2} parent=31 // pred_check
        %p325 = pneg %p188
      $region42: #{bert_matcher_forward.2} parent=31 // pred_check_branch
        %327 = sbr.rel (%p325) target = $region44
      $region43: #{bert_matcher_forward.2} parent=31 // pred_region
        %p328 = scmp.lt.s32.totalorder %s23, 1
        %s329 = scalar_select %p328, %s23, 1
        %s330 = smul.addr %s329, 4
        %s331 = smul.addr %s330, 4
        %s332 = scalar_lea.vmem %s6, %s331
      $region44: #{bert_matcher_forward.2} parent=31 // pred_fallthru
        _
      // Predicated region
      $region45: #{bert_matcher_forward.2} parent=31 // pred_check
        %p333 = pneg %p214
      $region46: #{bert_matcher_forward.2} parent=31 // pred_check_branch
        %335 = sbr.rel (%p333) target = $region48
      $region47: #{bert_matcher_forward.2} parent=31 // pred_region
        %p336 = scmp.lt.s32.totalorder %s23, 1
        %s337 = scalar_select %p336, %s23, 1
        %s338 = smul.addr %s337, 8
        %s339 = smul.addr %s338, 4
        %s340 = scalar_lea.vmem %s7, %s339
      $region48: #{bert_matcher_forward.2} parent=31 // pred_fallthru
        _
      // Predicated region
      $region49: #{bert_matcher_forward.2} parent=31 // pred_check
        %p341 = pneg %p240
      $region50: #{bert_matcher_forward.2} parent=31 // pred_check_branch
        %343 = sbr.rel (%p341) target = $region52
      $region51: #{bert_matcher_forward.2} parent=31 // pred_region
        %p344 = scmp.lt.s32.totalorder %s23, 1
        %s345 = scalar_select %p344, %s23, 1
        %s346 = smul.addr %s345, 8
        %s347 = scalar_lea.vmem %s8, %s346
      $region52: #{bert_matcher_forward.2} parent=31 // pred_fallthru
        _
    $region32: #{bert_matcher_forward.2} parent=5 // pred_fallthru
      _
    %p348 = scmp.le.s32.totalorder 1, %s15
    %p349 = scmp.lt.s32.totalorder %s15, 3
    %p350 = pnand %p348, %p349
    %p351 = pneg %p350
    // Predicated region
    $region53: #{bert_matcher_forward.2} parent=5 // pred_check
      _
    $region54: #{bert_matcher_forward.2} parent=5 // pred_check_branch
      %353 = sbr.rel (%p350) target = $region56
    $region55: #{bert_matcher_forward.2} parent=5 // pred_region
      %s354 = ssub.s32 %s15, 1
      %s355 = smul.u32 4, %s24
      %p356 = scmp.lt.s32.totalorder %s355, 3
      %s357 = scalar_select %p356, %s355, 3
      %s358 = smul.addr %s357, 8
      %s359 = scalar_lea.vmem %s0, %s358
      %p360 = pneg %p53
      %p361 = pneg %p50
      %p362 = pneg %p74
      %p363 = pneg %p71
      %p364 = pneg %p95
      %p365 = pneg %p92
      %p366 = pneg %p116
      %p367 = pneg %p113
      %p368 = scmp.lt.s32.totalorder %s25, 1
      %s369 = scalar_select %p368, %s25, 1
      %s370 = smul.addr %s369, 4
      %s371 = smul.addr %s370, 4
      %s372 = scalar_lea.vmem %s4, %s371
      %p373 = pneg %p142
      %p374 = pneg %p139
      %p375 = scmp.lt.s32.totalorder %s25, 1
      %s376 = scalar_select %p375, %s25, 1
      %s377 = smul.addr %s376, 4
      %s378 = smul.addr %s377, 4
      %s379 = scalar_lea.vmem %s5, %s378
      %p380 = pneg %p168
      %p381 = pneg %p165
      %p382 = scmp.lt.s32.totalorder %s25, 1
      %s383 = scalar_select %p382, %s25, 1
      %s384 = smul.addr %s383, 4
      %s385 = smul.addr %s384, 4
      %s386 = scalar_lea.vmem %s6, %s385
      %p387 = pneg %p194
      %p388 = pneg %p191
      %p389 = scmp.lt.s32.totalorder %s25, 1
      %s390 = scalar_select %p389, %s25, 1
      %s391 = smul.addr %s390, 8
      %s392 = smul.addr %s391, 4
      %s393 = scalar_lea.vmem %s7, %s392
      %p394 = pneg %p220
      %p395 = pneg %p217
      %p396 = scmp.lt.s32.totalorder %s25, 1
      %s397 = scalar_select %p396, %s25, 1
      %s398 = smul.addr %s397, 8
      %s399 = scalar_lea.vmem %s8, %s398
      %p400 = pneg %p246
      %p401 = pneg %p243
      %p402 = pneg %p272
      %p403 = pneg %p269
      %s404 = smul.u32 4, %s24
      %p405 = scmp.lt.s32.totalorder %s404, 3
      %s406 = scalar_select %p405, %s404, 3
      %s407 = smul.addr %s406, 4
      %s408 = scalar_lea.vmem %s9, %s407
      %s409 = smul.u32 4, %s24
      %p410 = scmp.lt.s32.totalorder %s409, 3
      %s411 = scalar_select %p410, %s409, 3
      %s412 = smul.addr %s411, 8
      %s413 = scalar_lea.vmem %s0, %s412
      %s414 = smul.u32 4, %s24
      %p415 = scmp.lt.s32.totalorder %s25, 1
      %s416 = scalar_select %p415, %s25, 1
      %s417 = smul.addr %s416, 4
      %s418 = smul.addr %s417, 4
      %s419 = scalar_lea.vmem %s4, %s418
      %p420 = scmp.lt.s32.totalorder %s25, 1
      %s421 = scalar_select %p420, %s25, 1
      %s422 = smul.addr %s421, 4
      %s423 = smul.addr %s422, 4
      %s424 = scalar_lea.vmem %s5, %s423
      %p425 = scmp.lt.s32.totalorder %s25, 1
      %s426 = scalar_select %p425, %s25, 1
      %s427 = smul.addr %s426, 4
      %s428 = smul.addr %s427, 4
      %s429 = scalar_lea.vmem %s6, %s428
      %p430 = scmp.lt.s32.totalorder %s25, 1
      %s431 = scalar_select %p430, %s25, 1
      %s432 = smul.addr %s431, 8
      %s433 = smul.addr %s432, 4
      %s434 = scalar_lea.vmem %s7, %s433
      %p435 = scmp.lt.s32.totalorder %s25, 1
      %s436 = scalar_select %p435, %s25, 1
      %s437 = smul.addr %s436, 8
      %s438 = scalar_lea.vmem %s8, %s437
      %s439 = smul.u32 4, %s24
      %p440 = scmp.lt.s32.totalorder %s439, 3
      %s441 = scalar_select %p440, %s439, 3
      %s442 = smul.addr %s441, 4
      %s443 = scalar_lea.vmem %s9, %s442
      %s444 = smul.u32 4, %s24
      %p446 = scmp.eq.s32.totalorder %s25, 0
      // Predicated region
      $region57: #{bert_matcher_forward.2} parent=55 // pred_check
        %p447 = pneg %p446
      $region58: #{bert_matcher_forward.2} parent=55 // pred_check_branch
        %449 = sbr.rel (%p447) target = $region60
      $region59: #{bert_matcher_forward.2} parent=55 // pred_region
        %v450 = vld [vmem:[%s413] sm:$0xff]
        %v451 = vld [vmem:[%s413 + $0x8] sm:$0xff]
        %v452 = vld [vmem:[%s413 + $0x10] sm:$0xff]
        %v453 = vld [vmem:[%s413 + $0x18] sm:$0xff]
        %v454 = vld [vmem:[%s2] sm:$0x1]
        %v455 = vld [vmem:[%s3] sm:$0x1]
        %vm456 = vcmask 261120
        %v457 = vsel %vm456, %v450, 0.0
        %458 = vadd.xlane.f32.xlu0 %v457
        %v459 = vpop.xlane.xlu0 %458
        %v460 = vsel %vm456, %v451, 0.0
        %461 = vadd.xlane.f32.xlu0 %v460
        %v462 = vpop.xlane.xlu0 %461
        %v463 = vsel %vm456, %v452, 0.0
        %464 = vadd.xlane.f32.xlu0 %v463
        %v465 = vpop.xlane.xlu0 %464
        %v466 = vsel %vm456, %v453, 0.0
        %467 = vadd.xlane.f32.xlu0 %v466
        %v468 = vpop.xlane.xlu0 %467
        %v469 = vrcp.pop 32.0
        %v470 = vmul.f32 %v459, %v469
        %v471 = vmul.f32 %v462, %v469
        %v472 = vmul.f32 %v465, %v469
        %v473 = vmul.f32 %v468, %v469
        %v474 = vsub.f32 %v450, %v470
        %v475 = vsub.f32 %v451, %v471
        %v476 = vsub.f32 %v452, %v472
        %v477 = vsub.f32 %v453, %v473
        %v478 = vmul.f32 %v474, %v474
        %v479 = vmul.f32 %v475, %v475
        %v480 = vmul.f32 %v476, %v476
        %v481 = vmul.f32 %v477, %v477
        %v482 = vsel %vm456, %v478, 0.0
        %483 = vadd.xlane.f32.xlu0 %v482
        %v484 = vpop.xlane.xlu0 %483
        %v485 = vsel %vm456, %v479, 0.0
        %486 = vadd.xlane.f32.xlu0 %v485
        %v487 = vpop.xlane.xlu0 %486
        %v488 = vsel %vm456, %v480, 0.0
        %489 = vadd.xlane.f32.xlu0 %v488
        %v490 = vpop.xlane.xlu0 %489
        %v491 = vsel %vm456, %v481, 0.0
        %492 = vadd.xlane.f32.xlu0 %v491
        %v493 = vpop.xlane.xlu0 %492
        %v494 = vmul.f32 %v484, %v469
        %v495 = vmul.f32 %v487, %v469
        %v496 = vmul.f32 %v490, %v469
        %v497 = vmul.f32 %v493, %v469
        %v498 = vadd.f32 %v494, 1e-12
        %v499 = vadd.f32 %v495, 1e-12
        %v500 = vadd.f32 %v496, 1e-12
        %v501 = vadd.f32 %v497, 1e-12
        %v502 = vrsqrt.pop %v498
        %v503 = vrsqrt.pop %v499
        %v504 = vrsqrt.pop %v500
        %v505 = vrsqrt.pop %v501
        %v506 = vmul.f32 %v474, %v502
        %v507 = vmul.f32 %v475, %v503
        %v508 = vmul.f32 %v476, %v504
        %v509 = vmul.f32 %v477, %v505
        %v511 = vlaneseq
        %v512 = vshrl.u32 %v511, 7
        %v513 = vsub.s32 0, %v512
        %v514 = vrot.slane %v454, %v513
        %v516 = vmul.f32 %v506, %v514
        %v517 = vmul.f32 %v507, %v514
        %v518 = vmul.f32 %v508, %v514
        %v519 = vmul.f32 %v509, %v514
        %v521 = vlaneseq
        %v522 = vshrl.u32 %v521, 7
        %v523 = vsub.s32 0, %v522
        %v524 = vrot.slane %v455, %v523
        %v526 = vadd.f32 %v516, %v524
        %v527 = vadd.f32 %v517, %v524
        %v528 = vadd.f32 %v518, %v524
        %v529 = vadd.f32 %v519, %v524
        %530 = vst.msk [vmem:[#allocation2] sm:$0xff] %vm456, %v526
        %531 = vst.msk [vmem:[#allocation2 + $0x8] sm:$0xff] %vm456, %v527
        %532 = vst.msk [vmem:[#allocation2 + $0x10] sm:$0xff] %vm456, %v528
        %533 = vst.msk [vmem:[#allocation2 + $0x18] sm:$0xff] %vm456, %v529
      $region60: #{bert_matcher_forward.2} parent=55 // pred_fallthru
        _
      %v534 = vld [vmem:[%s438] sm:$0xff]
      %v535 = vld [vmem:[#allocation2] sm:$0xff]
      %v536 = vld [vmem:[#allocation2 + $0x8] sm:$0xff]
      %v537 = vld [vmem:[#allocation2 + $0x10] sm:$0xff]
      %v538 = vld [vmem:[#allocation2 + $0x18] sm:$0xff]
      %v539 = vld [vmem:[%s419] sm:$0xf]
      %v540 = vld [vmem:[%s419 + $0x4] sm:$0xf]
      %v541 = vld [vmem:[%s419 + $0x8] sm:$0xf]
      %v542 = vld [vmem:[%s419 + $0xc] sm:$0xf]
      %v543 = vpack.c.bf16 %v536, %v535
      %v544 = vpack.c.bf16 %v538, %v537
      %v545 = vlaneseq
      %v546 = vshrl.u32 %v545, 7
      %v547 = vsub.s32 0, %v546
      %v548 = vrot.slane %v534, %v547
      %v553 = vunpack.c.l.b16 %v539
      %v554 = vunpack.c.l.b16 %v540
      %v555 = vunpack.c.l.b16 %v541
      %v556 = vunpack.c.l.b16 %v542
      %v557 = vpack.c.b16 %v554, %v553
      %v558 = vpack.c.b16 %v556, %v555
      %vm561 = vcmask 261120
      %v563 = vsel %vm561, %v543, 0
      %v566 = vsel %vm561, %v544, 0
      %568 = vmatprep.subr.bf16.mxu0 0
      %569 = vmatpush1.bf16.msra.mxu0 0
      %570 = vmatprep.subr.bf16.mxu0 0
      %571 = vmatpush1.bf16.msra.mxu0 0
      %572 = vmatprep.subr.bf16.mxu0 0
      %573 = vmatpush1.bf16.msra.mxu0 0
      %574 = vmatprep.subr.bf16.mxu0 0
      %575 = vmatpush1.bf16.msra.mxu0 0
      %576 = vmatprep.subr.bf16.mxu0 0
      %577 = vmatpush1.bf16.msra.mxu0 0
      %578 = vmatprep.subr.bf16.mxu0 0
      %579 = vmatpush1.bf16.msra.mxu0 0
      %580 = vmatprep.subr.bf16.mxu0 0
      %581 = vmatpush1.bf16.msra.mxu0 %v558
      %582 = vmatprep.subr.bf16.mxu0 0
      %583 = vmatpush1.bf16.msra.mxu0 %v557
      %584 = vmatprep.subr.bf16.mxu0 0
      %585 = vmatpush2.bf16.msra.mxu0 0
      %586 = vmatprep.subr.bf16.mxu0 0
      %587 = vmatpush2.bf16.msra.mxu0 0
      %588 = vmatprep.subr.bf16.mxu0 0
      %589 = vmatpush2.bf16.msra.mxu0 0
      %590 = vmatprep.subr.bf16.mxu0 0
      %591 = vmatpush2.bf16.msra.mxu0 0
      %592 = vmatprep.subr.bf16.mxu0 0
      %593 = vmatpush2.bf16.msra.mxu0 0
      %594 = vmatprep.subr.bf16.mxu0 0
      %595 = vmatpush2.bf16.msra.mxu0 0
      %596 = vmatprep.subr.bf16.mxu0 0
      %597 = vmatpush2.bf16.msra.mxu0 0
      %598 = vmatprep.subr.bf16.mxu0 0
      %599 = vmatpush2.bf16.msra.mxu0 0
      %600 = vmatprep.mubr.bf16.mxu0 0
      %601 = vmatmul.mubr.bf16.gmra.mxu0 %v563
      %v602 = vpop.f32.mrf.mxu0
      %v603 = vadd.f32 %v548, %v602
      %v604 = vpop.f32.mrf.mxu0
      %v605 = vpop.f32.mrf.mxu0
      %v606 = vadd.f32 %v548, %v605
      %v607 = vpop.f32.mrf.mxu0
      %608 = vmatprep.mubr.bf16.mxu0 0
      %609 = vmatmul.mubr.bf16.gmra.mxu0 %v566
      %v610 = vpop.f32.mrf.mxu0
      %v611 = vadd.f32 %v548, %v610
      %v612 = vpop.f32.mrf.mxu0
      %v613 = vpop.f32.mrf.mxu0
      %v614 = vadd.f32 %v548, %v613
      %v615 = vpop.f32.mrf.mxu0
      %616 = vdwg.mxu0
      %v617 = vlaneseq
      %v618 = vand.u32 %v617, 127
      %vm619 = vcmp.ge.s32.totalorder %v618, 0
      %vm620 = vcmp.lt.s32.totalorder %v618, 8
      %vm621 = vmand %vm619, %vm620
      %v622 = vsel %vm621, 1, 0
      %v623 = vcvt.s32.f32 %v622
      %v624 = vmul.f32 %v603, %v623
      %v625 = vmul.f32 %v606, %v623
      %v626 = vmul.f32 %v611, %v623
      %v627 = vmul.f32 %v614, %v623
      %629 = vrot.lane.b32.xlu0 %v623, 64
      %v630 = vpop.permute.xlu0 %629
      %v632 = vmul.f32 %v603, %v630
      %v633 = vmul.f32 %v606, %v630
      %v634 = vmul.f32 %v611, %v630
      %v635 = vmul.f32 %v614, %v630
      %vm636 = vcmp.ge.s32.totalorder %v618, 8
      %vm637 = vcmp.lt.s32.totalorder %v618, 16
      %vm638 = vmand %vm636, %vm637
      %v639 = vsel %vm638, 1, 0
      %v640 = vcvt.s32.f32 %v639
      %v641 = vmul.f32 %v603, %v640
      %v642 = vmul.f32 %v606, %v640
      %v643 = vmul.f32 %v611, %v640
      %v644 = vmul.f32 %v614, %v640
      %646 = vrot.lane.b32.xlu0 %v640, 64
      %v647 = vpop.permute.xlu0 %646
      %v649 = vmul.f32 %v603, %v647
      %v650 = vmul.f32 %v606, %v647
      %v651 = vmul.f32 %v611, %v647
      %v652 = vmul.f32 %v614, %v647
      %vm653 = vcmp.ge.s32.totalorder %v618, 16
      %vm654 = vcmp.lt.s32.totalorder %v618, 24
      %vm655 = vmand %vm653, %vm654
      %v656 = vsel %vm655, 1, 0
      %v657 = vcvt.s32.f32 %v656
      %v658 = vmul.f32 %v603, %v657
      %v659 = vmul.f32 %v606, %v657
      %v660 = vmul.f32 %v611, %v657
      %v661 = vmul.f32 %v614, %v657
      %663 = vrot.lane.b32.xlu0 %v657, 64
      %v664 = vpop.permute.xlu0 %663
      %v666 = vmul.f32 %v603, %v664
      %v667 = vmul.f32 %v606, %v664
      %v668 = vmul.f32 %v611, %v664
      %v669 = vmul.f32 %v614, %v664
      %vm670 = vcmp.ge.s32.totalorder %v618, 24
      %vm671 = vcmp.lt.s32.totalorder %v618, 32
      %vm672 = vmand %vm670, %vm671
      %v673 = vsel %vm672, 1, 0
      %v674 = vcvt.s32.f32 %v673
      %v675 = vmul.f32 %v603, %v674
      %v676 = vmul.f32 %v606, %v674
      %v677 = vmul.f32 %v611, %v674
      %v678 = vmul.f32 %v614, %v674
      %680 = vrot.lane.b32.xlu0 %v674, 64
      %v681 = vpop.permute.xlu0 %680
      %v683 = vmul.f32 %v603, %v681
      %v684 = vmul.f32 %v606, %v681
      %v685 = vmul.f32 %v611, %v681
      %v686 = vmul.f32 %v614, %v681
      %v687 = vpack.c.bf16 %v624, %v624
      %v688 = vpack.c.bf16 %v625, %v625
      %v689 = vpack.c.bf16 %v626, %v626
      %v690 = vpack.c.bf16 %v627, %v627
      %v691 = vpack.c.bf16 %v641, %v641
      %v692 = vpack.c.bf16 %v642, %v642
      %v693 = vpack.c.bf16 %v643, %v643
      %v694 = vpack.c.bf16 %v644, %v644
      %v695 = vpack.c.bf16 %v658, %v658
      %v696 = vpack.c.bf16 %v659, %v659
      %v697 = vpack.c.bf16 %v660, %v660
      %v698 = vpack.c.bf16 %v661, %v661
      %v699 = vpack.c.bf16 %v675, %v675
      %v700 = vpack.c.bf16 %v676, %v676
      %v701 = vpack.c.bf16 %v677, %v677
      %v702 = vpack.c.bf16 %v678, %v678
      %v703 = vpack.c.bf16 %v603, %v603
      %v704 = vpack.c.bf16 %v606, %v606
      %v705 = vpack.c.bf16 %v611, %v611
      %v706 = vpack.c.bf16 %v614, %v614
      %708 = vrot.lane.b32.xlu0 %v703, 96
      %v709 = vpop.permute.xlu0 %708
      %v711 = vsel %vm561, %v687, 0
      %v714 = vsel %vm561, %v709, 0
      %716 = vmatprep.subr.bf16.mxu0 0
      %717 = vmatpush1.bf16.xpose.msra.mxu0 0
      %718 = vmatprep.subr.bf16.mxu0 0
      %719 = vmatpush1.bf16.xpose.msra.mxu0 0
      %720 = vmatprep.subr.bf16.mxu0 0
      %721 = vmatpush1.bf16.xpose.msra.mxu0 0
      %722 = vmatprep.subr.bf16.mxu0 0
      %723 = vmatpush1.bf16.xpose.msra.mxu0 0
      %724 = vmatprep.subr.bf16.mxu0 0
      %725 = vmatpush1.bf16.xpose.msra.mxu0 0
      %726 = vmatprep.subr.bf16.mxu0 0
      %727 = vmatpush1.bf16.xpose.msra.mxu0 0
      %728 = vmatprep.subr.bf16.mxu0 0
      %729 = vmatpush1.bf16.xpose.msra.mxu0 0
      %730 = vmatprep.subr.bf16.mxu0 0
      %731 = vmatpush1.bf16.xpose.msra.mxu0 %v714
      %732 = vmatprep.subr.bf16.mxu0 0
      %733 = vmatpush2.bf16.xpose.msra.mxu0 0
      %734 = vmatprep.subr.bf16.mxu0 0
      %735 = vmatpush2.bf16.xpose.msra.mxu0 0
      %736 = vmatprep.subr.bf16.mxu0 0
      %737 = vmatpush2.bf16.xpose.msra.mxu0 0
      %738 = vmatprep.subr.bf16.mxu0 0
      %739 = vmatpush2.bf16.xpose.msra.mxu0 0
      %740 = vmatprep.subr.bf16.mxu0 0
      %741 = vmatpush2.bf16.xpose.msra.mxu0 0
      %742 = vmatprep.subr.bf16.mxu0 0
      %743 = vmatpush2.bf16.xpose.msra.mxu0 0
      %744 = vmatprep.subr.bf16.mxu0 0
      %745 = vmatpush2.bf16.xpose.msra.mxu0 0
      %746 = vmatprep.subr.bf16.mxu0 0
      %747 = vmatpush2.bf16.xpose.msra.mxu0 0
      %748 = vmatprep.mubr.bf16.mxu0 0
      %749 = vmatmul.mubr.bf16.gmra.mxu0 %v711
      %v750 = vpop.f32.mrf.mxu0
      %v751 = vadd.f32 0.0, %v750
      %v752 = vpop.f32.mrf.mxu0
      %v753 = vpop.f32.mrf.mxu0
      %v754 = vpop.f32.mrf.mxu0
      %755 = vdwg.mxu0
      %757 = vrot.lane.b32.xlu0 %v704, 96
      %v758 = vpop.permute.xlu0 %757
      %v760 = vsel %vm561, %v688, 0
      %v763 = vsel %vm561, %v758, 0
      %765 = vmatprep.subr.bf16.mxu0 0
      %766 = vmatpush1.bf16.xpose.msra.mxu0 0
      %767 = vmatprep.subr.bf16.mxu0 0
      %768 = vmatpush1.bf16.xpose.msra.mxu0 0
      %769 = vmatprep.subr.bf16.mxu0 0
      %770 = vmatpush1.bf16.xpose.msra.mxu0 0
      %771 = vmatprep.subr.bf16.mxu0 0
      %772 = vmatpush1.bf16.xpose.msra.mxu0 0
      %773 = vmatprep.subr.bf16.mxu0 0
      %774 = vmatpush1.bf16.xpose.msra.mxu0 0
      %775 = vmatprep.subr.bf16.mxu0 0
      %776 = vmatpush1.bf16.xpose.msra.mxu0 0
      %777 = vmatprep.subr.bf16.mxu0 0
      %778 = vmatpush1.bf16.xpose.msra.mxu0 0
      %779 = vmatprep.subr.bf16.mxu0 0
      %780 = vmatpush1.bf16.xpose.msra.mxu0 %v763
      %781 = vmatprep.subr.bf16.mxu0 0
      %782 = vmatpush2.bf16.xpose.msra.mxu0 0
      %783 = vmatprep.subr.bf16.mxu0 0
      %784 = vmatpush2.bf16.xpose.msra.mxu0 0
      %785 = vmatprep.subr.bf16.mxu0 0
      %786 = vmatpush2.bf16.xpose.msra.mxu0 0
      %787 = vmatprep.subr.bf16.mxu0 0
      %788 = vmatpush2.bf16.xpose.msra.mxu0 0
      %789 = vmatprep.subr.bf16.mxu0 0
      %790 = vmatpush2.bf16.xpose.msra.mxu0 0
      %791 = vmatprep.subr.bf16.mxu0 0
      %792 = vmatpush2.bf16.xpose.msra.mxu0 0
      %793 = vmatprep.subr.bf16.mxu0 0
      %794 = vmatpush2.bf16.xpose.msra.mxu0 0
      %795 = vmatprep.subr.bf16.mxu0 0
      %796 = vmatpush2.bf16.xpose.msra.mxu0 0
      %797 = vmatprep.mubr.bf16.mxu0 0
      %798 = vmatmul.mubr.bf16.gmra.mxu0 %v760
      %v799 = vpop.f32.mrf.mxu0
      %v800 = vadd.f32 0.0, %v799
      %v801 = vpop.f32.mrf.mxu0
      %v802 = vpop.f32.mrf.mxu0
      %v803 = vpop.f32.mrf.mxu0
      %804 = vdwg.mxu0
      %806 = vrot.lane.b32.xlu0 %v705, 96
      %v807 = vpop.permute.xlu0 %806
      %v809 = vsel %vm561, %v689, 0
      %v812 = vsel %vm561, %v807, 0
      %814 = vmatprep.subr.bf16.mxu0 0
      %815 = vmatpush1.bf16.xpose.msra.mxu0 0
      %816 = vmatprep.subr.bf16.mxu0 0
      %817 = vmatpush1.bf16.xpose.msra.mxu0 0
      %818 = vmatprep.subr.bf16.mxu0 0
      %819 = vmatpush1.bf16.xpose.msra.mxu0 0
      %820 = vmatprep.subr.bf16.mxu0 0
      %821 = vmatpush1.bf16.xpose.msra.mxu0 0
      %822 = vmatprep.subr.bf16.mxu0 0
      %823 = vmatpush1.bf16.xpose.msra.mxu0 0
      %824 = vmatprep.subr.bf16.mxu0 0
      %825 = vmatpush1.bf16.xpose.msra.mxu0 0
      %826 = vmatprep.subr.bf16.mxu0 0
      %827 = vmatpush1.bf16.xpose.msra.mxu0 0
      %828 = vmatprep.subr.bf16.mxu0 0
      %829 = vmatpush1.bf16.xpose.msra.mxu0 %v812
      %830 = vmatprep.subr.bf16.mxu0 0
      %831 = vmatpush2.bf16.xpose.msra.mxu0 0
      %832 = vmatprep.subr.bf16.mxu0 0
      %833 = vmatpush2.bf16.xpose.msra.mxu0 0
      %834 = vmatprep.subr.bf16.mxu0 0
      %835 = vmatpush2.bf16.xpose.msra.mxu0 0
      %836 = vmatprep.subr.bf16.mxu0 0
      %837 = vmatpush2.bf16.xpose.msra.mxu0 0
      %838 = vmatprep.subr.bf16.mxu0 0
      %839 = vmatpush2.bf16.xpose.msra.mxu0 0
      %840 = vmatprep.subr.bf16.mxu0 0
      %841 = vmatpush2.bf16.xpose.msra.mxu0 0
      %842 = vmatprep.subr.bf16.mxu0 0
      %843 = vmatpush2.bf16.xpose.msra.mxu0 0
      %844 = vmatprep.subr.bf16.mxu0 0
      %845 = vmatpush2.bf16.xpose.msra.mxu0 0
      %846 = vmatprep.mubr.bf16.mxu0 0
      %847 = vmatmul.mubr.bf16.gmra.mxu0 %v809
      %v848 = vpop.f32.mrf.mxu0
      %v849 = vadd.f32 0.0, %v848
      %v850 = vpop.f32.mrf.mxu0
      %v851 = vpop.f32.mrf.mxu0
      %v852 = vpop.f32.mrf.mxu0
      %853 = vdwg.mxu0
      %855 = vrot.lane.b32.xlu0 %v706, 96
      %v856 = vpop.permute.xlu0 %855
      %v858 = vsel %vm561, %v690, 0
      %v861 = vsel %vm561, %v856, 0
      %863 = vmatprep.subr.bf16.mxu0 0
      %864 = vmatpush1.bf16.xpose.msra.mxu0 0
      %865 = vmatprep.subr.bf16.mxu0 0
      %866 = vmatpush1.bf16.xpose.msra.mxu0 0
      %867 = vmatprep.subr.bf16.mxu0 0
      %868 = vmatpush1.bf16.xpose.msra.mxu0 0
      %869 = vmatprep.subr.bf16.mxu0 0
      %870 = vmatpush1.bf16.xpose.msra.mxu0 0
      %871 = vmatprep.subr.bf16.mxu0 0
      %872 = vmatpush1.bf16.xpose.msra.mxu0 0
      %873 = vmatprep.subr.bf16.mxu0 0
      %874 = vmatpush1.bf16.xpose.msra.mxu0 0
      %875 = vmatprep.subr.bf16.mxu0 0
      %876 = vmatpush1.bf16.xpose.msra.mxu0 0
      %877 = vmatprep.subr.bf16.mxu0 0
      %878 = vmatpush1.bf16.xpose.msra.mxu0 %v861
      %879 = vmatprep.subr.bf16.mxu0 0
      %880 = vmatpush2.bf16.xpose.msra.mxu0 0
      %881 = vmatprep.subr.bf16.mxu0 0
      %882 = vmatpush2.bf16.xpose.msra.mxu0 0
      %883 = vmatprep.subr.bf16.mxu0 0
      %884 = vmatpush2.bf16.xpose.msra.mxu0 0
      %885 = vmatprep.subr.bf16.mxu0 0
      %886 = vmatpush2.bf16.xpose.msra.mxu0 0
      %887 = vmatprep.subr.bf16.mxu0 0
      %888 = vmatpush2.bf16.xpose.msra.mxu0 0
      %889 = vmatprep.subr.bf16.mxu0 0
      %890 = vmatpush2.bf16.xpose.msra.mxu0 0
      %891 = vmatprep.subr.bf16.mxu0 0
      %892 = vmatpush2.bf16.xpose.msra.mxu0 0
      %893 = vmatprep.subr.bf16.mxu0 0
      %894 = vmatpush2.bf16.xpose.msra.mxu0 0
      %895 = vmatprep.mubr.bf16.mxu0 0
      %896 = vmatmul.mubr.bf16.gmra.mxu0 %v858
      %v897 = vpop.f32.mrf.mxu0
      %v898 = vadd.f32 0.0, %v897
      %v899 = vpop.f32.mrf.mxu0
      %v900 = vpop.f32.mrf.mxu0
      %v901 = vpop.f32.mrf.mxu0
      %902 = vdwg.mxu0
      %v904 = vsel %vm561, %v691, 0
      %906 = vmatprep.subr.bf16.mxu0 0
      %907 = vmatpush1.bf16.xpose.msra.mxu0 0
      %908 = vmatprep.subr.bf16.mxu0 0
      %909 = vmatpush1.bf16.xpose.msra.mxu0 0
      %910 = vmatprep.subr.bf16.mxu0 0
      %911 = vmatpush1.bf16.xpose.msra.mxu0 0
      %912 = vmatprep.subr.bf16.mxu0 0
      %913 = vmatpush1.bf16.xpose.msra.mxu0 0
      %914 = vmatprep.subr.bf16.mxu0 0
      %915 = vmatpush1.bf16.xpose.msra.mxu0 0
      %916 = vmatprep.subr.bf16.mxu0 0
      %917 = vmatpush1.bf16.xpose.msra.mxu0 0
      %918 = vmatprep.subr.bf16.mxu0 0
      %919 = vmatpush1.bf16.xpose.msra.mxu0 0
      %920 = vmatprep.subr.bf16.mxu0 0
      %921 = vmatpush1.bf16.xpose.msra.mxu0 %v714
      %922 = vmatprep.subr.bf16.mxu0 0
      %923 = vmatpush2.bf16.xpose.msra.mxu0 0
      %924 = vmatprep.subr.bf16.mxu0 0
      %925 = vmatpush2.bf16.xpose.msra.mxu0 0
      %926 = vmatprep.subr.bf16.mxu0 0
      %927 = vmatpush2.bf16.xpose.msra.mxu0 0
      %928 = vmatprep.subr.bf16.mxu0 0
      %929 = vmatpush2.bf16.xpose.msra.mxu0 0
      %930 = vmatprep.subr.bf16.mxu0 0
      %931 = vmatpush2.bf16.xpose.msra.mxu0 0
      %932 = vmatprep.subr.bf16.mxu0 0
      %933 = vmatpush2.bf16.xpose.msra.mxu0 0
      %934 = vmatprep.subr.bf16.mxu0 0
      %935 = vmatpush2.bf16.xpose.msra.mxu0 0
      %936 = vmatprep.subr.bf16.mxu0 0
      %937 = vmatpush2.bf16.xpose.msra.mxu0 0
      %938 = vmatprep.mubr.bf16.mxu0 0
      %939 = vmatmul.mubr.bf16.gmra.mxu0 %v904
      %v940 = vpop.f32.mrf.mxu0
      %v941 = vadd.f32 0.0, %v940
      %v942 = vpop.f32.mrf.mxu0
      %v943 = vpop.f32.mrf.mxu0
      %v944 = vpop.f32.mrf.mxu0
      %945 = vdwg.mxu0
      %v947 = vsel %vm561, %v692, 0
      %949 = vmatprep.subr.bf16.mxu0 0
      %950 = vmatpush1.bf16.xpose.msra.mxu0 0
      %951 = vmatprep.subr.bf16.mxu0 0
      %952 = vmatpush1.bf16.xpose.msra.mxu0 0
      %953 = vmatprep.subr.bf16.mxu0 0
      %954 = vmatpush1.bf16.xpose.msra.mxu0 0
      %955 = vmatprep.subr.bf16.mxu0 0
      %956 = vmatpush1.bf16.xpose.msra.mxu0 0
      %957 = vmatprep.subr.bf16.mxu0 0
      %958 = vmatpush1.bf16.xpose.msra.mxu0 0
      %959 = vmatprep.subr.bf16.mxu0 0
      %960 = vmatpush1.bf16.xpose.msra.mxu0 0
      %961 = vmatprep.subr.bf16.mxu0 0
      %962 = vmatpush1.bf16.xpose.msra.mxu0 0
      %963 = vmatprep.subr.bf16.mxu0 0
      %964 = vmatpush1.bf16.xpose.msra.mxu0 %v763
      %965 = vmatprep.subr.bf16.mxu0 0
      %966 = vmatpush2.bf16.xpose.msra.mxu0 0
      %967 = vmatprep.subr.bf16.mxu0 0
      %968 = vmatpush2.bf16.xpose.msra.mxu0 0
      %969 = vmatprep.subr.bf16.mxu0 0
      %970 = vmatpush2.bf16.xpose.msra.mxu0 0
      %971 = vmatprep.subr.bf16.mxu0 0
      %972 = vmatpush2.bf16.xpose.msra.mxu0 0
      %973 = vmatprep.subr.bf16.mxu0 0
      %974 = vmatpush2.bf16.xpose.msra.mxu0 0
      %975 = vmatprep.subr.bf16.mxu0 0
      %976 = vmatpush2.bf16.xpose.msra.mxu0 0
      %977 = vmatprep.subr.bf16.mxu0 0
      %978 = vmatpush2.bf16.xpose.msra.mxu0 0
      %979 = vmatprep.subr.bf16.mxu0 0
      %980 = vmatpush2.bf16.xpose.msra.mxu0 0
      %981 = vmatprep.mubr.bf16.mxu0 0
      %982 = vmatmul.mubr.bf16.gmra.mxu0 %v947
      %v983 = vpop.f32.mrf.mxu0
      %v984 = vadd.f32 0.0, %v983
      %v985 = vpop.f32.mrf.mxu0
      %v986 = vpop.f32.mrf.mxu0
      %v987 = vpop.f32.mrf.mxu0
      %988 = vdwg.mxu0
      %v990 = vsel %vm561, %v693, 0
      %992 = vmatprep.subr.bf16.mxu0 0
      %993 = vmatpush1.bf16.xpose.msra.mxu0 0
      %994 = vmatprep.subr.bf16.mxu0 0
      %995 = vmatpush1.bf16.xpose.msra.mxu0 0
      %996 = vmatprep.subr.bf16.mxu0 0
      %997 = vmatpush1.bf16.xpose.msra.mxu0 0
      %998 = vmatprep.subr.bf16.mxu0 0
      %999 = vmatpush1.bf16.xpose.msra.mxu0 0
      %1000 = vmatprep.subr.bf16.mxu0 0
      %1001 = vmatpush1.bf16.xpose.msra.mxu0 0
      %1002 = vmatprep.subr.bf16.mxu0 0
      %1003 = vmatpush1.bf16.xpose.msra.mxu0 0
      %1004 = vmatprep.subr.bf16.mxu0 0
      %1005 = vmatpush1.bf16.xpose.msra.mxu0 0
      %1006 = vmatprep.subr.bf16.mxu0 0
      %1007 = vmatpush1.bf16.xpose.msra.mxu0 %v812
      %1008 = vmatprep.subr.bf16.mxu0 0
      %1009 = vmatpush2.bf16.xpose.msra.mxu0 0
      %1010 = vmatprep.subr.bf16.mxu0 0
      %1011 = vmatpush2.bf16.xpose.msra.mxu0 0
      %1012 = vmatprep.subr.bf16.mxu0 0
      %1013 = vmatpush2.bf16.xpose.msra.mxu0 0
      %1014 = vmatprep.subr.bf16.mxu0 0
      %1015 = vmatpush2.bf16.xpose.msra.mxu0 0
      %1016 = vmatprep.subr.bf16.mxu0 0
      %1017 = vmatpush2.bf16.xpose.msra.mxu0 0
      %1018 = vmatprep.subr.bf16.mxu0 0
      %1019 = vmatpush2.bf16.xpose.msra.mxu0 0
      %1020 = vmatprep.subr.bf16.mxu0 0
      %1021 = vmatpush2.bf16.xpose.msra.mxu0 0
      %1022 = vmatprep.subr.bf16.mxu0 0
      %1023 = vmatpush2.bf16.xpose.msra.mxu0 0
      %1024 = vmatprep.mubr.bf16.mxu0 0
      %1025 = vmatmul.mubr.bf16.gmra.mxu0 %v990
      %v1026 = vpop.f32.mrf.mxu0
      %v1027 = vadd.f32 0.0, %v1026
      %v1028 = vpop.f32.mrf.mxu0
      %v1029 = vpop.f32.mrf.mxu0
      %v1030 = vpop.f32.mrf.mxu0
      %1031 = vdwg.mxu0
      %v1033 = vsel %vm561, %v694, 0
      %1035 = vmatprep.subr.bf16.mxu0 0
      %1036 = vmatpush1.bf16.xpose.msra.mxu0 0
      %1037 = vmatprep.subr.bf16.mxu0 0
      %1038 = vmatpush1.bf16.xpose.msra.mxu0 0
      %1039 = vmatprep.subr.bf16.mxu0 0
      %1040 = vmatpush1.bf16.xpose.msra.mxu0 0
      %1041 = vmatprep.subr.bf16.mxu0 0
      %1042 = vmatpush1.bf16.xpose.msra.mxu0 0
      %1043 = vmatprep.subr.bf16.mxu0 0
      %1044 = vmatpush1.bf16.xpose.msra.mxu0 0
      %1045 = vmatprep.subr.bf16.mxu0 0
      %1046 = vmatpush1.bf16.xpose.msra.mxu0 0
      %1047 = vmatprep.subr.bf16.mxu0 0
      %1048 = vmatpush1.bf16.xpose.msra.mxu0 0
      %1049 = vmatprep.subr.bf16.mxu0 0
      %1050 = vmatpush1.bf16.xpose.msra.mxu0 %v861
      %1051 = vmatprep.subr.bf16.mxu0 0
      %1052 = vmatpush2.bf16.xpose.msra.mxu0 0
      %1053 = vmatprep.subr.bf16.mxu0 0
      %1054 = vmatpush2.bf16.xpose.msra.mxu0 0
      %1055 = vmatprep.subr.bf16.mxu0 0
      %1056 = vmatpush2.bf16.xpose.msra.mxu0 0
      %1057 = vmatprep.subr.bf16.mxu0 0
      %1058 = vmatpush2.bf16.xpose.msra.mxu0 0
      %1059 = vmatprep.subr.bf16.mxu0 0
      %1060 = vmatpush2.bf16.xpose.msra.mxu0 0
      %1061 = vmatprep.subr.bf16.mxu0 0
      %1062 = vmatpush2.bf16.xpose.msra.mxu0 0
      %1063 = vmatprep.subr.bf16.mxu0 0
      %1064 = vmatpush2.bf16.xpose.msra.mxu0 0
      %1065 = vmatprep.subr.bf16.mxu0 0
      %1066 = vmatpush2.bf16.xpose.msra.mxu0 0
      %1067 = vmatprep.mubr.bf16.mxu0 0
      %1068 = vmatmul.mubr.bf16.gmra.mxu0 %v1033
      %v1069 = vpop.f32.mrf.mxu0
      %v1070 = vadd.f32 0.0, %v1069
      %v1071 = vpop.f32.mrf.mxu0
      %v1072 = vpop.f32.mrf.mxu0
      %v1073 = vpop.f32.mrf.mxu0
      %1074 = vdwg.mxu0
      %v1076 = vsel %vm561, %v695, 0
      %1078 = vmatprep.subr.bf16.mxu0 0
      %1079 = vmatpush1.bf16.xpose.msra.mxu0 0
      %1080 = vmatprep.subr.bf16.mxu0 0
      %1081 = vmatpush1.bf16.xpose.msra.mxu0 0
      %1082 = vmatprep.subr.bf16.mxu0 0
      %1083 = vmatpush1.bf16.xpose.msra.mxu0 0
      %1084 = vmatprep.subr.bf16.mxu0 0
      %1085 = vmatpush1.bf16.xpose.msra.mxu0 0
      %1086 = vmatprep.subr.bf16.mxu0 0
      %1087 = vmatpush1.bf16.xpose.msra.mxu0 0
      %1088 = vmatprep.subr.bf16.mxu0 0
      %1089 = vmatpush1.bf16.xpose.msra.mxu0 0
      %1090 = vmatprep.subr.bf16.mxu0 0
      %1091 = vmatpush1.bf16.xpose.msra.mxu0 0
      %1092 = vmatprep.subr.bf16.mxu0 0
      %1093 = vmatpush1.bf16.xpose.msra.mxu0 %v714
      %1094 = vmatprep.subr.bf16.mxu0 0
      %1095 = vmatpush2.bf16.xpose.msra.mxu0 0
      %1096 = vmatprep.subr.bf16.mxu0 0
      %1097 = vmatpush2.bf16.xpose.msra.mxu0 0
      %1098 = vmatprep.subr.bf16.mxu0 0
      %1099 = vmatpush2.bf16.xpose.msra.mxu0 0
      %1100 = vmatprep.subr.bf16.mxu0 0
      %1101 = vmatpush2.bf16.xpose.msra.mxu0 0
      %1102 = vmatprep.subr.bf16.mxu0 0
      %1103 = vmatpush2.bf16.xpose.msra.mxu0 0
      %1104 = vmatprep.subr.bf16.mxu0 0
      %1105 = vmatpush2.bf16.xpose.msra.mxu0 0
      %1106 = vmatprep.subr.bf16.mxu0 0
      %1107 = vmatpush2.bf16.xpose.msra.mxu0 0
      %1108 = vmatprep.subr.bf16.mxu0 0
      %1109 = vmatpush2.bf16.xpose.msra.mxu0 0
      %1110 = vmatprep.mubr.bf16.mxu0 0
      %1111 = vmatmul.mubr.bf16.gmra.mxu0 %v1076
      %v1112 = vpop.f32.mrf.mxu0
      %v1113 = vadd.f32 0.0, %v1112
      %v1114 = vpop.f32.mrf.mxu0
      %v1115 = vpop.f32.mrf.mxu0
      %v1116 = vpop.f32.mrf.mxu0
      %1117 = vdwg.mxu0
      %v1119 = vsel %vm561, %v696, 0
      %1121 = vmatprep.subr.bf16.mxu0 0
      %1122 = vmatpush1.bf16.xpose.msra.mxu0 0
      %1123 = vmatprep.subr.bf16.mxu0 0
      %1124 = vmatpush1.bf16.xpose.msra.mxu0 0
      %1125 = vmatprep.subr.bf16.mxu0 0
      %1126 = vmatpush1.bf16.xpose.msra.mxu0 0
      %1127 = vmatprep.subr.bf16.mxu0 0
      %1128 = vmatpush1.bf16.xpose.msra.mxu0 0
      %1129 = vmatprep.subr.bf16.mxu0 0
      %1130 = vmatpush1.bf16.xpose.msra.mxu0 0
      %1131 = vmatprep.subr.bf16.mxu0 0
      %1132 = vmatpush1.bf16.xpose.msra.mxu0 0
      %1133 = vmatprep.subr.bf16.mxu0 0
      %1134 = vmatpush1.bf16.xpose.msra.mxu0 0
      %1135 = vmatprep.subr.bf16.mxu0 0
      %1136 = vmatpush1.bf16.xpose.msra.mxu0 %v763
      %1137 = vmatprep.subr.bf16.mxu0 0
      %1138 = vmatpush2.bf16.xpose.msra.mxu0 0
      %1139 = vmatprep.subr.bf16.mxu0 0
      %1140 = vmatpush2.bf16.xpose.msra.mxu0 0
      %1141 = vmatprep.subr.bf16.mxu0 0
      %1142 = vmatpush2.bf16.xpose.msra.mxu0 0
      %1143 = vmatprep.subr.bf16.mxu0 0
      %1144 = vmatpush2.bf16.xpose.msra.mxu0 0
      %1145 = vmatprep.subr.bf16.mxu0 0
      %1146 = vmatpush2.bf16.xpose.msra.mxu0 0
      %1147 = vmatprep.subr.bf16.mxu0 0
      %1148 = vmatpush2.bf16.xpose.msra.mxu0 0
      %1149 = vmatprep.subr.bf16.mxu0 0
      %1150 = vmatpush2.bf16.xpose.msra.mxu0 0
      %1151 = vmatprep.subr.bf16.mxu0 0
      %1152 = vmatpush2.bf16.xpose.msra.mxu0 0
      %1153 = vmatprep.mubr.bf16.mxu0 0
      %1154 = vmatmul.mubr.bf16.gmra.mxu0 %v1119
      %v1155 = vpop.f32.mrf.mxu0
      %v1156 = vadd.f32 0.0, %v1155
      %v1157 = vpop.f32.mrf.mxu0
      %v1158 = vpop.f32.mrf.mxu0
      %v1159 = vpop.f32.mrf.mxu0
      %1160 = vdwg.mxu0
      %v1162 = vsel %vm561, %v697, 0
      %1164 = vmatprep.subr.bf16.mxu0 0
      %1165 = vmatpush1.bf16.xpose.msra.mxu0 0
      %1166 = vmatprep.subr.bf16.mxu0 0
      %1167 = vmatpush1.bf16.xpose.msra.mxu0 0
      %1168 = vmatprep.subr.bf16.mxu0 0
      %1169 = vmatpush1.bf16.xpose.msra.mxu0 0
      %1170 = vmatprep.subr.bf16.mxu0 0
      %1171 = vmatpush1.bf16.xpose.msra.mxu0 0
      %1172 = vmatprep.subr.bf16.mxu0 0
      %1173 = vmatpush1.bf16.xpose.msra.mxu0 0
      %1174 = vmatprep.subr.bf16.mxu0 0
      %1175 = vmatpush1.bf16.xpose.msra.mxu0 0
      %1176 = vmatprep.subr.bf16.mxu0 0
      %1177 = vmatpush1.bf16.xpose.msra.mxu0 0
      %1178 = vmatprep.subr.bf16.mxu0 0
      %1179 = vmatpush1.bf16.xpose.msra.mxu0 %v812
      %1180 = vmatprep.subr.bf16.mxu0 0
      %1181 = vmatpush2.bf16.xpose.msra.mxu0 0
      %1182 = vmatprep.subr.bf16.mxu0 0
      %1183 = vmatpush2.bf16.xpose.msra.mxu0 0
      %1184 = vmatprep.subr.bf16.mxu0 0
      %1185 = vmatpush2.bf16.xpose.msra.mxu0 0
      %1186 = vmatprep.subr.bf16.mxu0 0
      %1187 = vmatpush2.bf16.xpose.msra.mxu0 0
      %1188 = vmatprep.subr.bf16.mxu0 0
      %1189 = vmatpush2.bf16.xpose.msra.mxu0 0
      %1190 = vmatprep.subr.bf16.mxu0 0
      %1191 = vmatpush2.bf16.xpose.msra.mxu0 0
      %1192 = vmatprep.subr.bf16.mxu0 0
      %1193 = vmatpush2.bf16.xpose.msra.mxu0 0
      %1194 = vmatprep.subr.bf16.mxu0 0
      %1195 = vmatpush2.bf16.xpose.msra.mxu0 0
      %1196 = vmatprep.mubr.bf16.mxu0 0
      %1197 = vmatmul.mubr.bf16.gmra.mxu0 %v1162
      %v1198 = vpop.f32.mrf.mxu0
      %v1199 = vadd.f32 0.0, %v1198
      %v1200 = vpop.f32.mrf.mxu0
      %v1201 = vpop.f32.mrf.mxu0
      %v1202 = vpop.f32.mrf.mxu0
      %1203 = vdwg.mxu0
      %v1205 = vsel %vm561, %v698, 0
      %1207 = vmatprep.subr.bf16.mxu0 0
      %1208 = vmatpush1.bf16.xpose.msra.mxu0 0
      %1209 = vmatprep.subr.bf16.mxu0 0
      %1210 = vmatpush1.bf16.xpose.msra.mxu0 0
      %1211 = vmatprep.subr.bf16.mxu0 0
      %1212 = vmatpush1.bf16.xpose.msra.mxu0 0
      %1213 = vmatprep.subr.bf16.mxu0 0
      %1214 = vmatpush1.bf16.xpose.msra.mxu0 0
      %1215 = vmatprep.subr.bf16.mxu0 0
      %1216 = vmatpush1.bf16.xpose.msra.mxu0 0
      %1217 = vmatprep.subr.bf16.mxu0 0
      %1218 = vmatpush1.bf16.xpose.msra.mxu0 0
      %1219 = vmatprep.subr.bf16.mxu0 0
      %1220 = vmatpush1.bf16.xpose.msra.mxu0 0
      %1221 = vmatprep.subr.bf16.mxu0 0
      %1222 = vmatpush1.bf16.xpose.msra.mxu0 %v861
      %1223 = vmatprep.subr.bf16.mxu0 0
      %1224 = vmatpush2.bf16.xpose.msra.mxu0 0
      %1225 = vmatprep.subr.bf16.mxu0 0
      %1226 = vmatpush2.bf16.xpose.msra.mxu0 0
      %1227 = vmatprep.subr.bf16.mxu0 0
      %1228 = vmatpush2.bf16.xpose.msra.mxu0 0
      %1229 = vmatprep.subr.bf16.mxu0 0
      %1230 = vmatpush2.bf16.xpose.msra.mxu0 0
      %1231 = vmatprep.subr.bf16.mxu0 0
      %1232 = vmatpush2.bf16.xpose.msra.mxu0 0
      %1233 = vmatprep.subr.bf16.mxu0 0
      %1234 = vmatpush2.bf16.xpose.msra.mxu0 0
      %1235 = vmatprep.subr.bf16.mxu0 0
      %1236 = vmatpush2.bf16.xpose.msra.mxu0 0
      %1237 = vmatprep.subr.bf16.mxu0 0
      %1238 = vmatpush2.bf16.xpose.msra.mxu0 0
      %1239 = vmatprep.mubr.bf16.mxu0 0
      %1240 = vmatmul.mubr.bf16.gmra.mxu0 %v1205
      %v1241 = vpop.f32.mrf.mxu0
      %v1242 = vadd.f32 0.0, %v1241
      %v1243 = vpop.f32.mrf.mxu0
      %v1244 = vpop.f32.mrf.mxu0
      %v1245 = vpop.f32.mrf.mxu0
      %1246 = vdwg.mxu0
      %v1248 = vsel %vm561, %v699, 0
      %1250 = vmatprep.subr.bf16.mxu0 0
      %1251 = vmatpush1.bf16.xpose.msra.mxu0 0
      %1252 = vmatprep.subr.bf16.mxu0 0
      %1253 = vmatpush1.bf16.xpose.msra.mxu0 0
      %1254 = vmatprep.subr.bf16.mxu0 0
      %1255 = vmatpush1.bf16.xpose.msra.mxu0 0
      %1256 = vmatprep.subr.bf16.mxu0 0
      %1257 = vmatpush1.bf16.xpose.msra.mxu0 0
      %1258 = vmatprep.subr.bf16.mxu0 0
      %1259 = vmatpush1.bf16.xpose.msra.mxu0 0
      %1260 = vmatprep.subr.bf16.mxu0 0
      %1261 = vmatpush1.bf16.xpose.msra.mxu0 0
      %1262 = vmatprep.subr.bf16.mxu0 0
      %1263 = vmatpush1.bf16.xpose.msra.mxu0 0
      %1264 = vmatprep.subr.bf16.mxu0 0
      %1265 = vmatpush1.bf16.xpose.msra.mxu0 %v714
      %1266 = vmatprep.subr.bf16.mxu0 0
      %1267 = vmatpush2.bf16.xpose.msra.mxu0 0
      %1268 = vmatprep.subr.bf16.mxu0 0
      %1269 = vmatpush2.bf16.xpose.msra.mxu0 0
      %1270 = vmatprep.subr.bf16.mxu0 0
      %1271 = vmatpush2.bf16.xpose.msra.mxu0 0
      %1272 = vmatprep.subr.bf16.mxu0 0
      %1273 = vmatpush2.bf16.xpose.msra.mxu0 0
      %1274 = vmatprep.subr.bf16.mxu0 0
      %1275 = vmatpush2.bf16.xpose.msra.mxu0 0
      %1276 = vmatprep.subr.bf16.mxu0 0
      %1277 = vmatpush2.bf16.xpose.msra.mxu0 0
      %1278 = vmatprep.subr.bf16.mxu0 0
      %1279 = vmatpush2.bf16.xpose.msra.mxu0 0
      %1280 = vmatprep.subr.bf16.mxu0 0
      %1281 = vmatpush2.bf16.xpose.msra.mxu0 0
      %1282 = vmatprep.mubr.bf16.mxu0 0
      %1283 = vmatmul.mubr.bf16.gmra.mxu0 %v1248
      %v1284 = vpop.f32.mrf.mxu0
      %v1285 = vadd.f32 0.0, %v1284
      %v1286 = vpop.f32.mrf.mxu0
      %v1287 = vpop.f32.mrf.mxu0
      %v1288 = vpop.f32.mrf.mxu0
      %1289 = vdwg.mxu0
      %v1291 = vsel %vm561, %v700, 0
      %1293 = vmatprep.subr.bf16.mxu0 0
      %1294 = vmatpush1.bf16.xpose.msra.mxu0 0
      %1295 = vmatprep.subr.bf16.mxu0 0
      %1296 = vmatpush1.bf16.xpose.msra.mxu0 0
      %1297 = vmatprep.subr.bf16.mxu0 0
      %1298 = vmatpush1.bf16.xpose.msra.mxu0 0
      %1299 = vmatprep.subr.bf16.mxu0 0
      %1300 = vmatpush1.bf16.xpose.msra.mxu0 0
      %1301 = vmatprep.subr.bf16.mxu0 0
      %1302 = vmatpush1.bf16.xpose.msra.mxu0 0
      %1303 = vmatprep.subr.bf16.mxu0 0
      %1304 = vmatpush1.bf16.xpose.msra.mxu0 0
      %1305 = vmatprep.subr.bf16.mxu0 0
      %1306 = vmatpush1.bf16.xpose.msra.mxu0 0
      %1307 = vmatprep.subr.bf16.mxu0 0
      %1308 = vmatpush1.bf16.xpose.msra.mxu0 %v763
      %1309 = vmatprep.subr.bf16.mxu0 0
      %1310 = vmatpush2.bf16.xpose.msra.mxu0 0
      %1311 = vmatprep.subr.bf16.mxu0 0
      %1312 = vmatpush2.bf16.xpose.msra.mxu0 0
      %1313 = vmatprep.subr.bf16.mxu0 0
      %1314 = vmatpush2.bf16.xpose.msra.mxu0 0
      %1315 = vmatprep.subr.bf16.mxu0 0
      %1316 = vmatpush2.bf16.xpose.msra.mxu0 0
      %1317 = vmatprep.subr.bf16.mxu0 0
      %1318 = vmatpush2.bf16.xpose.msra.mxu0 0
      %1319 = vmatprep.subr.bf16.mxu0 0
      %1320 = vmatpush2.bf16.xpose.msra.mxu0 0
      %1321 = vmatprep.subr.bf16.mxu0 0
      %1322 = vmatpush2.bf16.xpose.msra.mxu0 0
      %1323 = vmatprep.subr.bf16.mxu0 0
      %1324 = vmatpush2.bf16.xpose.msra.mxu0 0
      %1325 = vmatprep.mubr.bf16.mxu0 0
      %1326 = vmatmul.mubr.bf16.gmra.mxu0 %v1291
      %v1327 = vpop.f32.mrf.mxu0
      %v1328 = vadd.f32 0.0, %v1327
      %v1329 = vpop.f32.mrf.mxu0
      %v1330 = vpop.f32.mrf.mxu0
      %v1331 = vpop.f32.mrf.mxu0
      %1332 = vdwg.mxu0
      %v1334 = vsel %vm561, %v701, 0
      %1336 = vmatprep.subr.bf16.mxu0 0
      %1337 = vmatpush1.bf16.xpose.msra.mxu0 0
      %1338 = vmatprep.subr.bf16.mxu0 0
      %1339 = vmatpush1.bf16.xpose.msra.mxu0 0
      %1340 = vmatprep.subr.bf16.mxu0 0
      %1341 = vmatpush1.bf16.xpose.msra.mxu0 0
      %1342 = vmatprep.subr.bf16.mxu0 0
      %1343 = vmatpush1.bf16.xpose.msra.mxu0 0
      %1344 = vmatprep.subr.bf16.mxu0 0
      %1345 = vmatpush1.bf16.xpose.msra.mxu0 0
      %1346 = vmatprep.subr.bf16.mxu0 0
      %1347 = vmatpush1.bf16.xpose.msra.mxu0 0
      %1348 = vmatprep.subr.bf16.mxu0 0
      %1349 = vmatpush1.bf16.xpose.msra.mxu0 0
      %1350 = vmatprep.subr.bf16.mxu0 0
      %1351 = vmatpush1.bf16.xpose.msra.mxu0 %v812
      %1352 = vmatprep.subr.bf16.mxu0 0
      %1353 = vmatpush2.bf16.xpose.msra.mxu0 0
      %1354 = vmatprep.subr.bf16.mxu0 0
      %1355 = vmatpush2.bf16.xpose.msra.mxu0 0
      %1356 = vmatprep.subr.bf16.mxu0 0
      %1357 = vmatpush2.bf16.xpose.msra.mxu0 0
      %1358 = vmatprep.subr.bf16.mxu0 0
      %1359 = vmatpush2.bf16.xpose.msra.mxu0 0
      %1360 = vmatprep.subr.bf16.mxu0 0
      %1361 = vmatpush2.bf16.xpose.msra.mxu0 0
      %1362 = vmatprep.subr.bf16.mxu0 0
      %1363 = vmatpush2.bf16.xpose.msra.mxu0 0
      %1364 = vmatprep.subr.bf16.mxu0 0
      %1365 = vmatpush2.bf16.xpose.msra.mxu0 0
      %1366 = vmatprep.subr.bf16.mxu0 0
      %1367 = vmatpush2.bf16.xpose.msra.mxu0 0
      %1368 = vmatprep.mubr.bf16.mxu0 0
      %1369 = vmatmul.mubr.bf16.gmra.mxu0 %v1334
      %v1370 = vpop.f32.mrf.mxu0
      %v1371 = vadd.f32 0.0, %v1370
      %v1372 = vpop.f32.mrf.mxu0
      %v1373 = vpop.f32.mrf.mxu0
      %v1374 = vpop.f32.mrf.mxu0
      %1375 = vdwg.mxu0
      %v1377 = vsel %vm561, %v702, 0
      %1379 = vmatprep.subr.bf16.mxu0 0
      %1380 = vmatpush1.bf16.xpose.msra.mxu0 0
      %1381 = vmatprep.subr.bf16.mxu0 0
      %1382 = vmatpush1.bf16.xpose.msra.mxu0 0
      %1383 = vmatprep.subr.bf16.mxu0 0
      %1384 = vmatpush1.bf16.xpose.msra.mxu0 0
      %1385 = vmatprep.subr.bf16.mxu0 0
      %1386 = vmatpush1.bf16.xpose.msra.mxu0 0
      %1387 = vmatprep.subr.bf16.mxu0 0
      %1388 = vmatpush1.bf16.xpose.msra.mxu0 0
      %1389 = vmatprep.subr.bf16.mxu0 0
      %1390 = vmatpush1.bf16.xpose.msra.mxu0 0
      %1391 = vmatprep.subr.bf16.mxu0 0
      %1392 = vmatpush1.bf16.xpose.msra.mxu0 0
      %1393 = vmatprep.subr.bf16.mxu0 0
      %1394 = vmatpush1.bf16.xpose.msra.mxu0 %v861
      %1395 = vmatprep.subr.bf16.mxu0 0
      %1396 = vmatpush2.bf16.xpose.msra.mxu0 0
      %1397 = vmatprep.subr.bf16.mxu0 0
      %1398 = vmatpush2.bf16.xpose.msra.mxu0 0
      %1399 = vmatprep.subr.bf16.mxu0 0
      %1400 = vmatpush2.bf16.xpose.msra.mxu0 0
      %1401 = vmatprep.subr.bf16.mxu0 0
      %1402 = vmatpush2.bf16.xpose.msra.mxu0 0
      %1403 = vmatprep.subr.bf16.mxu0 0
      %1404 = vmatpush2.bf16.xpose.msra.mxu0 0
      %1405 = vmatprep.subr.bf16.mxu0 0
      %1406 = vmatpush2.bf16.xpose.msra.mxu0 0
      %1407 = vmatprep.subr.bf16.mxu0 0
      %1408 = vmatpush2.bf16.xpose.msra.mxu0 0
      %1409 = vmatprep.subr.bf16.mxu0 0
      %1410 = vmatpush2.bf16.xpose.msra.mxu0 0
      %1411 = vmatprep.mubr.bf16.mxu0 0
      %1412 = vmatmul.mubr.bf16.gmra.mxu0 %v1377
      %v1413 = vpop.f32.mrf.mxu0
      %v1414 = vadd.f32 0.0, %v1413
      %v1415 = vpop.f32.mrf.mxu0
      %v1416 = vpop.f32.mrf.mxu0
      %v1417 = vpop.f32.mrf.mxu0
      %1418 = vdwg.mxu0
      %v1419 = vmul.f32 %v751, 0.35355338
      %v1420 = vmul.f32 %v800, 0.35355338
      %v1421 = vmul.f32 %v849, 0.35355338
      %v1422 = vmul.f32 %v898, 0.35355338
      %v1423 = vmul.f32 %v941, 0.35355338
      %v1424 = vmul.f32 %v984, 0.35355338
      %v1425 = vmul.f32 %v1027, 0.35355338
      %v1426 = vmul.f32 %v1070, 0.35355338
      %v1427 = vmul.f32 %v1113, 0.35355338
      %v1428 = vmul.f32 %v1156, 0.35355338
      %v1429 = vmul.f32 %v1199, 0.35355338
      %v1430 = vmul.f32 %v1242, 0.35355338
      %v1431 = vmul.f32 %v1285, 0.35355338
      %v1432 = vmul.f32 %v1328, 0.35355338
      %v1433 = vmul.f32 %v1371, 0.35355338
      %v1434 = vmul.f32 %v1414, 0.35355338
      %s1435 = smul.u32 %s24, 4
      %s1436 = scalar_lea.vmem %s1, %s1435
      %v1437 = vld [vmem:[%s1436] sm:$0x1]
      %v1438 = vsub.f32 1.0, %v1437
      %v1439 = vmul.f32 %v1438, -1e+09
      %s1440 = sadd.s32 %s1435, 1
      %s1441 = scalar_lea.vmem %s1, %s1440
      %v1442 = vld [vmem:[%s1441] sm:$0x1]
      %v1443 = vsub.f32 1.0, %v1442
      %v1444 = vmul.f32 %v1443, -1e+09
      %s1445 = sadd.s32 %s1435, 2
      %s1446 = scalar_lea.vmem %s1, %s1445
      %v1447 = vld [vmem:[%s1446] sm:$0x1]
      %v1448 = vsub.f32 1.0, %v1447
      %v1449 = vmul.f32 %v1448, -1e+09
      %s1450 = sadd.s32 %s1435, 3
      %s1451 = scalar_lea.vmem %s1, %s1450
      %v1452 = vld [vmem:[%s1451] sm:$0x1]
      %v1453 = vsub.f32 1.0, %v1452
      %v1454 = vmul.f32 %v1453, -1e+09
      %v1455 = vlaneseq
      %v1456 = vshrl.u32 %v1455, 7
      %v1457 = vsub.s32 0, %v1456
      %v1458 = vrot.slane %v1439, %v1457
      %v1459 = vlaneseq
      %v1460 = vshrl.u32 %v1459, 7
      %v1461 = vsub.s32 0, %v1460
      %v1462 = vrot.slane %v1444, %v1461
      %v1463 = vlaneseq
      %v1464 = vshrl.u32 %v1463, 7
      %v1465 = vsub.s32 0, %v1464
      %v1466 = vrot.slane %v1449, %v1465
      %v1467 = vlaneseq
      %v1468 = vshrl.u32 %v1467, 7
      %v1469 = vsub.s32 0, %v1468
      %v1470 = vrot.slane %v1454, %v1469
      %v1471 = vadd.f32 %v1419, %v1458
      %v1472 = vadd.f32 %v1420, %v1462
      %v1473 = vadd.f32 %v1421, %v1466
      %v1474 = vadd.f32 %v1422, %v1470
      %v1475 = vadd.f32 %v1423, %v1458
      %v1476 = vadd.f32 %v1424, %v1462
      %v1477 = vadd.f32 %v1425, %v1466
      %v1478 = vadd.f32 %v1426, %v1470
      %v1479 = vadd.f32 %v1427, %v1458
      %v1480 = vadd.f32 %v1428, %v1462
      %v1481 = vadd.f32 %v1429, %v1466
      %v1482 = vadd.f32 %v1430, %v1470
      %v1483 = vadd.f32 %v1431, %v1458
      %v1484 = vadd.f32 %v1432, %v1462
      %v1485 = vadd.f32 %v1433, %v1466
      %v1486 = vadd.f32 %v1434, %v1470
      %vm1487 = vcmask 64512
      %v1488 = vsel %vm1487, %v1471, -inf
      %1489 = vmax.xlane.f32.xlu0 %v1488
      %v1490 = vpop.xlane.xlu0 %1489
      %v1491 = vsel %vm1487, %v1472, -inf
      %1492 = vmax.xlane.f32.xlu0 %v1491
      %v1493 = vpop.xlane.xlu0 %1492
      %v1494 = vsel %vm1487, %v1473, -inf
      %1495 = vmax.xlane.f32.xlu0 %v1494
      %v1496 = vpop.xlane.xlu0 %1495
      %v1497 = vsel %vm1487, %v1474, -inf
      %1498 = vmax.xlane.f32.xlu0 %v1497
      %v1499 = vpop.xlane.xlu0 %1498
      %v1500 = vsel %vm1487, %v1475, -inf
      %1501 = vmax.xlane.f32.xlu0 %v1500
      %v1502 = vpop.xlane.xlu0 %1501
      %v1503 = vsel %vm1487, %v1476, -inf
      %1504 = vmax.xlane.f32.xlu0 %v1503
      %v1505 = vpop.xlane.xlu0 %1504
      %v1506 = vsel %vm1487, %v1477, -inf
      %1507 = vmax.xlane.f32.xlu0 %v1506
      %v1508 = vpop.xlane.xlu0 %1507
      %v1509 = vsel %vm1487, %v1478, -inf
      %1510 = vmax.xlane.f32.xlu0 %v1509
      %v1511 = vpop.xlane.xlu0 %1510
      %v1512 = vsel %vm1487, %v1479, -inf
      %1513 = vmax.xlane.f32.xlu0 %v1512
      %v1514 = vpop.xlane.xlu0 %1513
      %v1515 = vsel %vm1487, %v1480, -inf
      %1516 = vmax.xlane.f32.xlu0 %v1515
      %v1517 = vpop.xlane.xlu0 %1516
      %v1518 = vsel %vm1487, %v1481, -inf
      %1519 = vmax.xlane.f32.xlu0 %v1518
      %v1520 = vpop.xlane.xlu0 %1519
      %v1521 = vsel %vm1487, %v1482, -inf
      %1522 = vmax.xlane.f32.xlu0 %v1521
      %v1523 = vpop.xlane.xlu0 %1522
      %v1524 = vsel %vm1487, %v1483, -inf
      %1525 = vmax.xlane.f32.xlu0 %v1524
      %v1526 = vpop.xlane.xlu0 %1525
      %v1527 = vsel %vm1487, %v1484, -inf
      %1528 = vmax.xlane.f32.xlu0 %v1527
      %v1529 = vpop.xlane.xlu0 %1528
      %v1530 = vsel %vm1487, %v1485, -inf
      %1531 = vmax.xlane.f32.xlu0 %v1530
      %v1532 = vpop.xlane.xlu0 %1531
      %v1533 = vsel %vm1487, %v1486, -inf
      %1534 = vmax.xlane.f32.xlu0 %v1533
      %v1535 = vpop.xlane.xlu0 %1534
      %v1536 = vsub.f32 %v1471, %v1490
      %v1537 = vsub.f32 %v1472, %v1493
      %v1538 = vsub.f32 %v1473, %v1496
      %v1539 = vsub.f32 %v1474, %v1499
      %v1540 = vsub.f32 %v1475, %v1502
      %v1541 = vsub.f32 %v1476, %v1505
      %v1542 = vsub.f32 %v1477, %v1508
      %v1543 = vsub.f32 %v1478, %v1511
      %v1544 = vsub.f32 %v1479, %v1514
      %v1545 = vsub.f32 %v1480, %v1517
      %v1546 = vsub.f32 %v1481, %v1520
      %v1547 = vsub.f32 %v1482, %v1523
      %v1548 = vsub.f32 %v1483, %v1526
      %v1549 = vsub.f32 %v1484, %v1529
      %v1550 = vsub.f32 %v1485, %v1532
      %v1551 = vsub.f32 %v1486, %v1535
      %v1552 = vmul.f32 %v1536, 1.442695
      %v1553 = vpow.pop %v1552
      %v1554 = vmul.f32 %v1537, 1.442695
      %v1555 = vpow.pop %v1554
      %v1556 = vmul.f32 %v1538, 1.442695
      %v1557 = vpow.pop %v1556
      %v1558 = vmul.f32 %v1539, 1.442695
      %v1559 = vpow.pop %v1558
      %v1560 = vmul.f32 %v1540, 1.442695
      %v1561 = vpow.pop %v1560
      %v1562 = vmul.f32 %v1541, 1.442695
      %v1563 = vpow.pop %v1562
      %v1564 = vmul.f32 %v1542, 1.442695
      %v1565 = vpow.pop %v1564
      %v1566 = vmul.f32 %v1543, 1.442695
      %v1567 = vpow.pop %v1566
      %v1568 = vmul.f32 %v1544, 1.442695
      %v1569 = vpow.pop %v1568
      %v1570 = vmul.f32 %v1545, 1.442695
      %v1571 = vpow.pop %v1570
      %v1572 = vmul.f32 %v1546, 1.442695
      %v1573 = vpow.pop %v1572
      %v1574 = vmul.f32 %v1547, 1.442695
      %v1575 = vpow.pop %v1574
      %v1576 = vmul.f32 %v1548, 1.442695
      %v1577 = vpow.pop %v1576
      %v1578 = vmul.f32 %v1549, 1.442695
      %v1579 = vpow.pop %v1578
      %v1580 = vmul.f32 %v1550, 1.442695
      %v1581 = vpow.pop %v1580
      %v1582 = vmul.f32 %v1551, 1.442695
      %v1583 = vpow.pop %v1582
      %v1584 = vsel %vm1487, %v1553, 0.0
      %1585 = vadd.xlane.f32.xlu0 %v1584
      %v1586 = vpop.xlane.xlu0 %1585
      %v1587 = vsel %vm1487, %v1555, 0.0
      %1588 = vadd.xlane.f32.xlu0 %v1587
      %v1589 = vpop.xlane.xlu0 %1588
      %v1590 = vsel %vm1487, %v1557, 0.0
      %1591 = vadd.xlane.f32.xlu0 %v1590
      %v1592 = vpop.xlane.xlu0 %1591
      %v1593 = vsel %vm1487, %v1559, 0.0
      %1594 = vadd.xlane.f32.xlu0 %v1593
      %v1595 = vpop.xlane.xlu0 %1594
      %v1596 = vsel %vm1487, %v1561, 0.0
      %1597 = vadd.xlane.f32.xlu0 %v1596
      %v1598 = vpop.xlane.xlu0 %1597
      %v1599 = vsel %vm1487, %v1563, 0.0
      %1600 = vadd.xlane.f32.xlu0 %v1599
      %v1601 = vpop.xlane.xlu0 %1600
      %v1602 = vsel %vm1487, %v1565, 0.0
      %1603 = vadd.xlane.f32.xlu0 %v1602
      %v1604 = vpop.xlane.xlu0 %1603
      %v1605 = vsel %vm1487, %v1567, 0.0
      %1606 = vadd.xlane.f32.xlu0 %v1605
      %v1607 = vpop.xlane.xlu0 %1606
      %v1608 = vsel %vm1487, %v1569, 0.0
      %1609 = vadd.xlane.f32.xlu0 %v1608
      %v1610 = vpop.xlane.xlu0 %1609
      %v1611 = vsel %vm1487, %v1571, 0.0
      %1612 = vadd.xlane.f32.xlu0 %v1611
      %v1613 = vpop.xlane.xlu0 %1612
      %v1614 = vsel %vm1487, %v1573, 0.0
      %1615 = vadd.xlane.f32.xlu0 %v1614
      %v1616 = vpop.xlane.xlu0 %1615
      %v1617 = vsel %vm1487, %v1575, 0.0
      %1618 = vadd.xlane.f32.xlu0 %v1617
      %v1619 = vpop.xlane.xlu0 %1618
      %v1620 = vsel %vm1487, %v1577, 0.0
      %1621 = vadd.xlane.f32.xlu0 %v1620
      %v1622 = vpop.xlane.xlu0 %1621
      %v1623 = vsel %vm1487, %v1579, 0.0
      %1624 = vadd.xlane.f32.xlu0 %v1623
      %v1625 = vpop.xlane.xlu0 %1624
      %v1626 = vsel %vm1487, %v1581, 0.0
      %1627 = vadd.xlane.f32.xlu0 %v1626
      %v1628 = vpop.xlane.xlu0 %1627
      %v1629 = vsel %vm1487, %v1583, 0.0
      %1630 = vadd.xlane.f32.xlu0 %v1629
      %v1631 = vpop.xlane.xlu0 %1630
      %v1632 = vrcp.pop %v1586
      %v1633 = vmul.f32 %v1553, %v1632
      %v1634 = vrcp.pop %v1589
      %v1635 = vmul.f32 %v1555, %v1634
      %v1636 = vrcp.pop %v1592
      %v1637 = vmul.f32 %v1557, %v1636
      %v1638 = vrcp.pop %v1595
      %v1639 = vmul.f32 %v1559, %v1638
      %v1640 = vrcp.pop %v1598
      %v1641 = vmul.f32 %v1561, %v1640
      %v1642 = vrcp.pop %v1601
      %v1643 = vmul.f32 %v1563, %v1642
      %v1644 = vrcp.pop %v1604
      %v1645 = vmul.f32 %v1565, %v1644
      %v1646 = vrcp.pop %v1607
      %v1647 = vmul.f32 %v1567, %v1646
      %v1648 = vrcp.pop %v1610
      %v1649 = vmul.f32 %v1569, %v1648
      %v1650 = vrcp.pop %v1613
      %v1651 = vmul.f32 %v1571, %v1650
      %v1652 = vrcp.pop %v1616
      %v1653 = vmul.f32 %v1573, %v1652
      %v1654 = vrcp.pop %v1619
      %v1655 = vmul.f32 %v1575, %v1654
      %v1656 = vrcp.pop %v1622
      %v1657 = vmul.f32 %v1577, %v1656
      %v1658 = vrcp.pop %v1625
      %v1659 = vmul.f32 %v1579, %v1658
      %v1660 = vrcp.pop %v1628
      %v1661 = vmul.f32 %v1581, %v1660
      %v1662 = vrcp.pop %v1631
      %v1663 = vmul.f32 %v1583, %v1662
      %v1664 = vpack.c.bf16 %v1633, %v1633
      %v1665 = vpack.c.bf16 %v1635, %v1635
      %v1666 = vpack.c.bf16 %v1637, %v1637
      %v1667 = vpack.c.bf16 %v1639, %v1639
      %v1668 = vpack.c.bf16 %v1641, %v1641
      %v1669 = vpack.c.bf16 %v1643, %v1643
      %v1670 = vpack.c.bf16 %v1645, %v1645
      %v1671 = vpack.c.bf16 %v1647, %v1647
      %v1672 = vpack.c.bf16 %v1649, %v1649
      %v1673 = vpack.c.bf16 %v1651, %v1651
      %v1674 = vpack.c.bf16 %v1653, %v1653
      %v1675 = vpack.c.bf16 %v1655, %v1655
      %v1676 = vpack.c.bf16 %v1657, %v1657
      %v1677 = vpack.c.bf16 %v1659, %v1659
      %v1678 = vpack.c.bf16 %v1661, %v1661
      %v1679 = vpack.c.bf16 %v1663, %v1663
      %v1680 = vpack.c.bf16 %v632, %v632
      %v1681 = vpack.c.bf16 %v633, %v633
      %v1682 = vpack.c.bf16 %v634, %v634
      %v1683 = vpack.c.bf16 %v635, %v635
      %v1684 = vpack.c.bf16 %v649, %v649
      %v1685 = vpack.c.bf16 %v650, %v650
      %v1686 = vpack.c.bf16 %v651, %v651
      %v1687 = vpack.c.bf16 %v652, %v652
      %v1688 = vpack.c.bf16 %v666, %v666
      %v1689 = vpack.c.bf16 %v667, %v667
      %v1690 = vpack.c.bf16 %v668, %v668
      %v1691 = vpack.c.bf16 %v669, %v669
      %v1692 = vpack.c.bf16 %v683, %v683
      %v1693 = vpack.c.bf16 %v684, %v684
      %v1694 = vpack.c.bf16 %v685, %v685
      %v1695 = vpack.c.bf16 %v686, %v686
      %1697 = vrot.lane.b32.xlu0 %v1680, 64
      %v1698 = vpop.permute.xlu0 %1697
      %v1700 = vsel %vm1487, %v1664, 0
      %vm1702 = vcmask 1043456
      %v1704 = vsel %vm1702, %v1698, 0
      %1706 = vmatprep.subr.bf16.mxu0 0
      %1707 = vmatpush1.bf16.msra.mxu0 0
      %1708 = vmatprep.subr.bf16.mxu0 0
      %1709 = vmatpush1.bf16.msra.mxu0 0
      %1710 = vmatprep.subr.bf16.mxu0 0
      %1711 = vmatpush1.bf16.msra.mxu0 0
      %1712 = vmatprep.subr.bf16.mxu0 0
      %1713 = vmatpush1.bf16.msra.mxu0 0
      %1714 = vmatprep.subr.bf16.mxu0 0
      %1715 = vmatpush1.bf16.msra.mxu0 0
      %1716 = vmatprep.subr.bf16.mxu0 0
      %1717 = vmatpush1.bf16.msra.mxu0 0
      %1718 = vmatprep.subr.bf16.mxu0 0
      %1719 = vmatpush1.bf16.msra.mxu0 0
      %1720 = vmatprep.subr.bf16.mxu0 0
      %1721 = vmatpush1.bf16.msra.mxu0 %v1704
      %1722 = vmatprep.subr.bf16.mxu0 0
      %1723 = vmatpush2.bf16.msra.mxu0 0
      %1724 = vmatprep.subr.bf16.mxu0 0
      %1725 = vmatpush2.bf16.msra.mxu0 0
      %1726 = vmatprep.subr.bf16.mxu0 0
      %1727 = vmatpush2.bf16.msra.mxu0 0
      %1728 = vmatprep.subr.bf16.mxu0 0
      %1729 = vmatpush2.bf16.msra.mxu0 0
      %1730 = vmatprep.subr.bf16.mxu0 0
      %1731 = vmatpush2.bf16.msra.mxu0 0
      %1732 = vmatprep.subr.bf16.mxu0 0
      %1733 = vmatpush2.bf16.msra.mxu0 0
      %1734 = vmatprep.subr.bf16.mxu0 0
      %1735 = vmatpush2.bf16.msra.mxu0 0
      %1736 = vmatprep.subr.bf16.mxu0 0
      %1737 = vmatpush2.bf16.msra.mxu0 0
      %1738 = vmatprep.mubr.bf16.mxu0 0
      %1739 = vmatmul.mubr.bf16.gmra.mxu0 %v1700
      %v1740 = vpop.f32.mrf.mxu0
      %v1741 = vadd.f32 0.0, %v1740
      %v1742 = vpop.f32.mrf.mxu0
      %v1743 = vpop.f32.mrf.mxu0
      %v1744 = vpop.f32.mrf.mxu0
      %1745 = vdwg.mxu0
      %1747 = vrot.lane.b32.xlu0 %v1681, 64
      %v1748 = vpop.permute.xlu0 %1747
      %v1750 = vsel %vm1487, %v1665, 0
      %v1753 = vsel %vm1702, %v1748, 0
      %1755 = vmatprep.subr.bf16.mxu0 0
      %1756 = vmatpush1.bf16.msra.mxu0 0
      %1757 = vmatprep.subr.bf16.mxu0 0
      %1758 = vmatpush1.bf16.msra.mxu0 0
      %1759 = vmatprep.subr.bf16.mxu0 0
      %1760 = vmatpush1.bf16.msra.mxu0 0
      %1761 = vmatprep.subr.bf16.mxu0 0
      %1762 = vmatpush1.bf16.msra.mxu0 0
      %1763 = vmatprep.subr.bf16.mxu0 0
      %1764 = vmatpush1.bf16.msra.mxu0 0
      %1765 = vmatprep.subr.bf16.mxu0 0
      %1766 = vmatpush1.bf16.msra.mxu0 0
      %1767 = vmatprep.subr.bf16.mxu0 0
      %1768 = vmatpush1.bf16.msra.mxu0 0
      %1769 = vmatprep.subr.bf16.mxu0 0
      %1770 = vmatpush1.bf16.msra.mxu0 %v1753
      %1771 = vmatprep.subr.bf16.mxu0 0
      %1772 = vmatpush2.bf16.msra.mxu0 0
      %1773 = vmatprep.subr.bf16.mxu0 0
      %1774 = vmatpush2.bf16.msra.mxu0 0
      %1775 = vmatprep.subr.bf16.mxu0 0
      %1776 = vmatpush2.bf16.msra.mxu0 0
      %1777 = vmatprep.subr.bf16.mxu0 0
      %1778 = vmatpush2.bf16.msra.mxu0 0
      %1779 = vmatprep.subr.bf16.mxu0 0
      %1780 = vmatpush2.bf16.msra.mxu0 0
      %1781 = vmatprep.subr.bf16.mxu0 0
      %1782 = vmatpush2.bf16.msra.mxu0 0
      %1783 = vmatprep.subr.bf16.mxu0 0
      %1784 = vmatpush2.bf16.msra.mxu0 0
      %1785 = vmatprep.subr.bf16.mxu0 0
      %1786 = vmatpush2.bf16.msra.mxu0 0
      %1787 = vmatprep.mubr.bf16.mxu0 0
      %1788 = vmatmul.mubr.bf16.gmra.mxu0 %v1750
      %v1789 = vpop.f32.mrf.mxu0
      %v1790 = vadd.f32 0.0, %v1789
      %v1791 = vpop.f32.mrf.mxu0
      %v1792 = vpop.f32.mrf.mxu0
      %v1793 = vpop.f32.mrf.mxu0
      %1794 = vdwg.mxu0
      %1796 = vrot.lane.b32.xlu0 %v1682, 64
      %v1797 = vpop.permute.xlu0 %1796
      %v1799 = vsel %vm1487, %v1666, 0
      %v1802 = vsel %vm1702, %v1797, 0
      %1804 = vmatprep.subr.bf16.mxu0 0
      %1805 = vmatpush1.bf16.msra.mxu0 0
      %1806 = vmatprep.subr.bf16.mxu0 0
      %1807 = vmatpush1.bf16.msra.mxu0 0
      %1808 = vmatprep.subr.bf16.mxu0 0
      %1809 = vmatpush1.bf16.msra.mxu0 0
      %1810 = vmatprep.subr.bf16.mxu0 0
      %1811 = vmatpush1.bf16.msra.mxu0 0
      %1812 = vmatprep.subr.bf16.mxu0 0
      %1813 = vmatpush1.bf16.msra.mxu0 0
      %1814 = vmatprep.subr.bf16.mxu0 0
      %1815 = vmatpush1.bf16.msra.mxu0 0
      %1816 = vmatprep.subr.bf16.mxu0 0
      %1817 = vmatpush1.bf16.msra.mxu0 0
      %1818 = vmatprep.subr.bf16.mxu0 0
      %1819 = vmatpush1.bf16.msra.mxu0 %v1802
      %1820 = vmatprep.subr.bf16.mxu0 0
      %1821 = vmatpush2.bf16.msra.mxu0 0
      %1822 = vmatprep.subr.bf16.mxu0 0
      %1823 = vmatpush2.bf16.msra.mxu0 0
      %1824 = vmatprep.subr.bf16.mxu0 0
      %1825 = vmatpush2.bf16.msra.mxu0 0
      %1826 = vmatprep.subr.bf16.mxu0 0
      %1827 = vmatpush2.bf16.msra.mxu0 0
      %1828 = vmatprep.subr.bf16.mxu0 0
      %1829 = vmatpush2.bf16.msra.mxu0 0
      %1830 = vmatprep.subr.bf16.mxu0 0
      %1831 = vmatpush2.bf16.msra.mxu0 0
      %1832 = vmatprep.subr.bf16.mxu0 0
      %1833 = vmatpush2.bf16.msra.mxu0 0
      %1834 = vmatprep.subr.bf16.mxu0 0
      %1835 = vmatpush2.bf16.msra.mxu0 0
      %1836 = vmatprep.mubr.bf16.mxu0 0
      %1837 = vmatmul.mubr.bf16.gmra.mxu0 %v1799
      %v1838 = vpop.f32.mrf.mxu0
      %v1839 = vadd.f32 0.0, %v1838
      %v1840 = vpop.f32.mrf.mxu0
      %v1841 = vpop.f32.mrf.mxu0
      %v1842 = vpop.f32.mrf.mxu0
      %1843 = vdwg.mxu0
      %1845 = vrot.lane.b32.xlu0 %v1683, 64
      %v1846 = vpop.permute.xlu0 %1845
      %v1848 = vsel %vm1487, %v1667, 0
      %v1851 = vsel %vm1702, %v1846, 0
      %1853 = vmatprep.subr.bf16.mxu0 0
      %1854 = vmatpush1.bf16.msra.mxu0 0
      %1855 = vmatprep.subr.bf16.mxu0 0
      %1856 = vmatpush1.bf16.msra.mxu0 0
      %1857 = vmatprep.subr.bf16.mxu0 0
      %1858 = vmatpush1.bf16.msra.mxu0 0
      %1859 = vmatprep.subr.bf16.mxu0 0
      %1860 = vmatpush1.bf16.msra.mxu0 0
      %1861 = vmatprep.subr.bf16.mxu0 0
      %1862 = vmatpush1.bf16.msra.mxu0 0
      %1863 = vmatprep.subr.bf16.mxu0 0
      %1864 = vmatpush1.bf16.msra.mxu0 0
      %1865 = vmatprep.subr.bf16.mxu0 0
      %1866 = vmatpush1.bf16.msra.mxu0 0
      %1867 = vmatprep.subr.bf16.mxu0 0
      %1868 = vmatpush1.bf16.msra.mxu0 %v1851
      %1869 = vmatprep.subr.bf16.mxu0 0
      %1870 = vmatpush2.bf16.msra.mxu0 0
      %1871 = vmatprep.subr.bf16.mxu0 0
      %1872 = vmatpush2.bf16.msra.mxu0 0
      %1873 = vmatprep.subr.bf16.mxu0 0
      %1874 = vmatpush2.bf16.msra.mxu0 0
      %1875 = vmatprep.subr.bf16.mxu0 0
      %1876 = vmatpush2.bf16.msra.mxu0 0
      %1877 = vmatprep.subr.bf16.mxu0 0
      %1878 = vmatpush2.bf16.msra.mxu0 0
      %1879 = vmatprep.subr.bf16.mxu0 0
      %1880 = vmatpush2.bf16.msra.mxu0 0
      %1881 = vmatprep.subr.bf16.mxu0 0
      %1882 = vmatpush2.bf16.msra.mxu0 0
      %1883 = vmatprep.subr.bf16.mxu0 0
      %1884 = vmatpush2.bf16.msra.mxu0 0
      %1885 = vmatprep.mubr.bf16.mxu0 0
      %1886 = vmatmul.mubr.bf16.gmra.mxu0 %v1848
      %v1887 = vpop.f32.mrf.mxu0
      %v1888 = vadd.f32 0.0, %v1887
      %v1889 = vpop.f32.mrf.mxu0
      %v1890 = vpop.f32.mrf.mxu0
      %v1891 = vpop.f32.mrf.mxu0
      %1892 = vdwg.mxu0
      %1894 = vrot.lane.b32.xlu0 %v1684, 64
      %v1895 = vpop.permute.xlu0 %1894
      %v1897 = vsel %vm1487, %v1668, 0
      %v1900 = vsel %vm1702, %v1895, 0
      %1902 = vmatprep.subr.bf16.mxu0 0
      %1903 = vmatpush1.bf16.msra.mxu0 0
      %1904 = vmatprep.subr.bf16.mxu0 0
      %1905 = vmatpush1.bf16.msra.mxu0 0
      %1906 = vmatprep.subr.bf16.mxu0 0
      %1907 = vmatpush1.bf16.msra.mxu0 0
      %1908 = vmatprep.subr.bf16.mxu0 0
      %1909 = vmatpush1.bf16.msra.mxu0 0
      %1910 = vmatprep.subr.bf16.mxu0 0
      %1911 = vmatpush1.bf16.msra.mxu0 0
      %1912 = vmatprep.subr.bf16.mxu0 0
      %1913 = vmatpush1.bf16.msra.mxu0 0
      %1914 = vmatprep.subr.bf16.mxu0 0
      %1915 = vmatpush1.bf16.msra.mxu0 0
      %1916 = vmatprep.subr.bf16.mxu0 0
      %1917 = vmatpush1.bf16.msra.mxu0 %v1900
      %1918 = vmatprep.subr.bf16.mxu0 0
      %1919 = vmatpush2.bf16.msra.mxu0 0
      %1920 = vmatprep.subr.bf16.mxu0 0
      %1921 = vmatpush2.bf16.msra.mxu0 0
      %1922 = vmatprep.subr.bf16.mxu0 0
      %1923 = vmatpush2.bf16.msra.mxu0 0
      %1924 = vmatprep.subr.bf16.mxu0 0
      %1925 = vmatpush2.bf16.msra.mxu0 0
      %1926 = vmatprep.subr.bf16.mxu0 0
      %1927 = vmatpush2.bf16.msra.mxu0 0
      %1928 = vmatprep.subr.bf16.mxu0 0
      %1929 = vmatpush2.bf16.msra.mxu0 0
      %1930 = vmatprep.subr.bf16.mxu0 0
      %1931 = vmatpush2.bf16.msra.mxu0 0
      %1932 = vmatprep.subr.bf16.mxu0 0
      %1933 = vmatpush2.bf16.msra.mxu0 0
      %1934 = vmatprep.mubr.bf16.mxu0 0
      %1935 = vmatmul.mubr.bf16.gmra.mxu0 %v1897
      %v1936 = vpop.f32.mrf.mxu0
      %v1937 = vadd.f32 0.0, %v1936
      %v1938 = vpop.f32.mrf.mxu0
      %v1939 = vpop.f32.mrf.mxu0
      %v1940 = vpop.f32.mrf.mxu0
      %1941 = vdwg.mxu0
      %1943 = vrot.lane.b32.xlu0 %v1685, 64
      %v1944 = vpop.permute.xlu0 %1943
      %v1946 = vsel %vm1487, %v1669, 0
      %v1949 = vsel %vm1702, %v1944, 0
      %1951 = vmatprep.subr.bf16.mxu0 0
      %1952 = vmatpush1.bf16.msra.mxu0 0
      %1953 = vmatprep.subr.bf16.mxu0 0
      %1954 = vmatpush1.bf16.msra.mxu0 0
      %1955 = vmatprep.subr.bf16.mxu0 0
      %1956 = vmatpush1.bf16.msra.mxu0 0
      %1957 = vmatprep.subr.bf16.mxu0 0
      %1958 = vmatpush1.bf16.msra.mxu0 0
      %1959 = vmatprep.subr.bf16.mxu0 0
      %1960 = vmatpush1.bf16.msra.mxu0 0
      %1961 = vmatprep.subr.bf16.mxu0 0
      %1962 = vmatpush1.bf16.msra.mxu0 0
      %1963 = vmatprep.subr.bf16.mxu0 0
      %1964 = vmatpush1.bf16.msra.mxu0 0
      %1965 = vmatprep.subr.bf16.mxu0 0
      %1966 = vmatpush1.bf16.msra.mxu0 %v1949
      %1967 = vmatprep.subr.bf16.mxu0 0
      %1968 = vmatpush2.bf16.msra.mxu0 0
      %1969 = vmatprep.subr.bf16.mxu0 0
      %1970 = vmatpush2.bf16.msra.mxu0 0
      %1971 = vmatprep.subr.bf16.mxu0 0
      %1972 = vmatpush2.bf16.msra.mxu0 0
      %1973 = vmatprep.subr.bf16.mxu0 0
      %1974 = vmatpush2.bf16.msra.mxu0 0
      %1975 = vmatprep.subr.bf16.mxu0 0
      %1976 = vmatpush2.bf16.msra.mxu0 0
      %1977 = vmatprep.subr.bf16.mxu0 0
      %1978 = vmatpush2.bf16.msra.mxu0 0
      %1979 = vmatprep.subr.bf16.mxu0 0
      %1980 = vmatpush2.bf16.msra.mxu0 0
      %1981 = vmatprep.subr.bf16.mxu0 0
      %1982 = vmatpush2.bf16.msra.mxu0 0
      %1983 = vmatprep.mubr.bf16.mxu0 0
      %1984 = vmatmul.mubr.bf16.gmra.mxu0 %v1946
      %v1985 = vpop.f32.mrf.mxu0
      %v1986 = vadd.f32 0.0, %v1985
      %v1987 = vpop.f32.mrf.mxu0
      %v1988 = vpop.f32.mrf.mxu0
      %v1989 = vpop.f32.mrf.mxu0
      %1990 = vdwg.mxu0
      %1992 = vrot.lane.b32.xlu0 %v1686, 64
      %v1993 = vpop.permute.xlu0 %1992
      %v1995 = vsel %vm1487, %v1670, 0
      %v1998 = vsel %vm1702, %v1993, 0
      %2000 = vmatprep.subr.bf16.mxu0 0
      %2001 = vmatpush1.bf16.msra.mxu0 0
      %2002 = vmatprep.subr.bf16.mxu0 0
      %2003 = vmatpush1.bf16.msra.mxu0 0
      %2004 = vmatprep.subr.bf16.mxu0 0
      %2005 = vmatpush1.bf16.msra.mxu0 0
      %2006 = vmatprep.subr.bf16.mxu0 0
      %2007 = vmatpush1.bf16.msra.mxu0 0
      %2008 = vmatprep.subr.bf16.mxu0 0
      %2009 = vmatpush1.bf16.msra.mxu0 0
      %2010 = vmatprep.subr.bf16.mxu0 0
      %2011 = vmatpush1.bf16.msra.mxu0 0
      %2012 = vmatprep.subr.bf16.mxu0 0
      %2013 = vmatpush1.bf16.msra.mxu0 0
      %2014 = vmatprep.subr.bf16.mxu0 0
      %2015 = vmatpush1.bf16.msra.mxu0 %v1998
      %2016 = vmatprep.subr.bf16.mxu0 0
      %2017 = vmatpush2.bf16.msra.mxu0 0
      %2018 = vmatprep.subr.bf16.mxu0 0
      %2019 = vmatpush2.bf16.msra.mxu0 0
      %2020 = vmatprep.subr.bf16.mxu0 0
      %2021 = vmatpush2.bf16.msra.mxu0 0
      %2022 = vmatprep.subr.bf16.mxu0 0
      %2023 = vmatpush2.bf16.msra.mxu0 0
      %2024 = vmatprep.subr.bf16.mxu0 0
      %2025 = vmatpush2.bf16.msra.mxu0 0
      %2026 = vmatprep.subr.bf16.mxu0 0
      %2027 = vmatpush2.bf16.msra.mxu0 0
      %2028 = vmatprep.subr.bf16.mxu0 0
      %2029 = vmatpush2.bf16.msra.mxu0 0
      %2030 = vmatprep.subr.bf16.mxu0 0
      %2031 = vmatpush2.bf16.msra.mxu0 0
      %2032 = vmatprep.mubr.bf16.mxu0 0
      %2033 = vmatmul.mubr.bf16.gmra.mxu0 %v1995
      %v2034 = vpop.f32.mrf.mxu0
      %v2035 = vadd.f32 0.0, %v2034
      %v2036 = vpop.f32.mrf.mxu0
      %v2037 = vpop.f32.mrf.mxu0
      %v2038 = vpop.f32.mrf.mxu0
      %2039 = vdwg.mxu0
      %2041 = vrot.lane.b32.xlu0 %v1687, 64
      %v2042 = vpop.permute.xlu0 %2041
      %v2044 = vsel %vm1487, %v1671, 0
      %v2047 = vsel %vm1702, %v2042, 0
      %2049 = vmatprep.subr.bf16.mxu0 0
      %2050 = vmatpush1.bf16.msra.mxu0 0
      %2051 = vmatprep.subr.bf16.mxu0 0
      %2052 = vmatpush1.bf16.msra.mxu0 0
      %2053 = vmatprep.subr.bf16.mxu0 0
      %2054 = vmatpush1.bf16.msra.mxu0 0
      %2055 = vmatprep.subr.bf16.mxu0 0
      %2056 = vmatpush1.bf16.msra.mxu0 0
      %2057 = vmatprep.subr.bf16.mxu0 0
      %2058 = vmatpush1.bf16.msra.mxu0 0
      %2059 = vmatprep.subr.bf16.mxu0 0
      %2060 = vmatpush1.bf16.msra.mxu0 0
      %2061 = vmatprep.subr.bf16.mxu0 0
      %2062 = vmatpush1.bf16.msra.mxu0 0
      %2063 = vmatprep.subr.bf16.mxu0 0
      %2064 = vmatpush1.bf16.msra.mxu0 %v2047
      %2065 = vmatprep.subr.bf16.mxu0 0
      %2066 = vmatpush2.bf16.msra.mxu0 0
      %2067 = vmatprep.subr.bf16.mxu0 0
      %2068 = vmatpush2.bf16.msra.mxu0 0
      %2069 = vmatprep.subr.bf16.mxu0 0
      %2070 = vmatpush2.bf16.msra.mxu0 0
      %2071 = vmatprep.subr.bf16.mxu0 0
      %2072 = vmatpush2.bf16.msra.mxu0 0
      %2073 = vmatprep.subr.bf16.mxu0 0
      %2074 = vmatpush2.bf16.msra.mxu0 0
      %2075 = vmatprep.subr.bf16.mxu0 0
      %2076 = vmatpush2.bf16.msra.mxu0 0
      %2077 = vmatprep.subr.bf16.mxu0 0
      %2078 = vmatpush2.bf16.msra.mxu0 0
      %2079 = vmatprep.subr.bf16.mxu0 0
      %2080 = vmatpush2.bf16.msra.mxu0 0
      %2081 = vmatprep.mubr.bf16.mxu0 0
      %2082 = vmatmul.mubr.bf16.gmra.mxu0 %v2044
      %v2083 = vpop.f32.mrf.mxu0
      %v2084 = vadd.f32 0.0, %v2083
      %v2085 = vpop.f32.mrf.mxu0
      %v2086 = vpop.f32.mrf.mxu0
      %v2087 = vpop.f32.mrf.mxu0
      %2088 = vdwg.mxu0
      %2090 = vrot.lane.b32.xlu0 %v1688, 64
      %v2091 = vpop.permute.xlu0 %2090
      %v2093 = vsel %vm1487, %v1672, 0
      %v2096 = vsel %vm1702, %v2091, 0
      %2098 = vmatprep.subr.bf16.mxu0 0
      %2099 = vmatpush1.bf16.msra.mxu0 0
      %2100 = vmatprep.subr.bf16.mxu0 0
      %2101 = vmatpush1.bf16.msra.mxu0 0
      %2102 = vmatprep.subr.bf16.mxu0 0
      %2103 = vmatpush1.bf16.msra.mxu0 0
      %2104 = vmatprep.subr.bf16.mxu0 0
      %2105 = vmatpush1.bf16.msra.mxu0 0
      %2106 = vmatprep.subr.bf16.mxu0 0
      %2107 = vmatpush1.bf16.msra.mxu0 0
      %2108 = vmatprep.subr.bf16.mxu0 0
      %2109 = vmatpush1.bf16.msra.mxu0 0
      %2110 = vmatprep.subr.bf16.mxu0 0
      %2111 = vmatpush1.bf16.msra.mxu0 0
      %2112 = vmatprep.subr.bf16.mxu0 0
      %2113 = vmatpush1.bf16.msra.mxu0 %v2096
      %2114 = vmatprep.subr.bf16.mxu0 0
      %2115 = vmatpush2.bf16.msra.mxu0 0
      %2116 = vmatprep.subr.bf16.mxu0 0
      %2117 = vmatpush2.bf16.msra.mxu0 0
      %2118 = vmatprep.subr.bf16.mxu0 0
      %2119 = vmatpush2.bf16.msra.mxu0 0
      %2120 = vmatprep.subr.bf16.mxu0 0
      %2121 = vmatpush2.bf16.msra.mxu0 0
      %2122 = vmatprep.subr.bf16.mxu0 0
      %2123 = vmatpush2.bf16.msra.mxu0 0
      %2124 = vmatprep.subr.bf16.mxu0 0
      %2125 = vmatpush2.bf16.msra.mxu0 0
      %2126 = vmatprep.subr.bf16.mxu0 0
      %2127 = vmatpush2.bf16.msra.mxu0 0
      %2128 = vmatprep.subr.bf16.mxu0 0
      %2129 = vmatpush2.bf16.msra.mxu0 0
      %2130 = vmatprep.mubr.bf16.mxu0 0
      %2131 = vmatmul.mubr.bf16.gmra.mxu0 %v2093
      %v2132 = vpop.f32.mrf.mxu0
      %v2133 = vadd.f32 0.0, %v2132
      %v2134 = vpop.f32.mrf.mxu0
      %v2135 = vpop.f32.mrf.mxu0
      %v2136 = vpop.f32.mrf.mxu0
      %2137 = vdwg.mxu0
      %2139 = vrot.lane.b32.xlu0 %v1689, 64
      %v2140 = vpop.permute.xlu0 %2139
      %v2142 = vsel %vm1487, %v1673, 0
      %v2145 = vsel %vm1702, %v2140, 0
      %2147 = vmatprep.subr.bf16.mxu0 0
      %2148 = vmatpush1.bf16.msra.mxu0 0
      %2149 = vmatprep.subr.bf16.mxu0 0
      %2150 = vmatpush1.bf16.msra.mxu0 0
      %2151 = vmatprep.subr.bf16.mxu0 0
      %2152 = vmatpush1.bf16.msra.mxu0 0
      %2153 = vmatprep.subr.bf16.mxu0 0
      %2154 = vmatpush1.bf16.msra.mxu0 0
      %2155 = vmatprep.subr.bf16.mxu0 0
      %2156 = vmatpush1.bf16.msra.mxu0 0
      %2157 = vmatprep.subr.bf16.mxu0 0
      %2158 = vmatpush1.bf16.msra.mxu0 0
      %2159 = vmatprep.subr.bf16.mxu0 0
      %2160 = vmatpush1.bf16.msra.mxu0 0
      %2161 = vmatprep.subr.bf16.mxu0 0
      %2162 = vmatpush1.bf16.msra.mxu0 %v2145
      %2163 = vmatprep.subr.bf16.mxu0 0
      %2164 = vmatpush2.bf16.msra.mxu0 0
      %2165 = vmatprep.subr.bf16.mxu0 0
      %2166 = vmatpush2.bf16.msra.mxu0 0
      %2167 = vmatprep.subr.bf16.mxu0 0
      %2168 = vmatpush2.bf16.msra.mxu0 0
      %2169 = vmatprep.subr.bf16.mxu0 0
      %2170 = vmatpush2.bf16.msra.mxu0 0
      %2171 = vmatprep.subr.bf16.mxu0 0
      %2172 = vmatpush2.bf16.msra.mxu0 0
      %2173 = vmatprep.subr.bf16.mxu0 0
      %2174 = vmatpush2.bf16.msra.mxu0 0
      %2175 = vmatprep.subr.bf16.mxu0 0
      %2176 = vmatpush2.bf16.msra.mxu0 0
      %2177 = vmatprep.subr.bf16.mxu0 0
      %2178 = vmatpush2.bf16.msra.mxu0 0
      %2179 = vmatprep.mubr.bf16.mxu0 0
      %2180 = vmatmul.mubr.bf16.gmra.mxu0 %v2142
      %v2181 = vpop.f32.mrf.mxu0
      %v2182 = vadd.f32 0.0, %v2181
      %v2183 = vpop.f32.mrf.mxu0
      %v2184 = vpop.f32.mrf.mxu0
      %v2185 = vpop.f32.mrf.mxu0
      %2186 = vdwg.mxu0
      %2188 = vrot.lane.b32.xlu0 %v1690, 64
      %v2189 = vpop.permute.xlu0 %2188
      %v2191 = vsel %vm1487, %v1674, 0
      %v2194 = vsel %vm1702, %v2189, 0
      %2196 = vmatprep.subr.bf16.mxu0 0
      %2197 = vmatpush1.bf16.msra.mxu0 0
      %2198 = vmatprep.subr.bf16.mxu0 0
      %2199 = vmatpush1.bf16.msra.mxu0 0
      %2200 = vmatprep.subr.bf16.mxu0 0
      %2201 = vmatpush1.bf16.msra.mxu0 0
      %2202 = vmatprep.subr.bf16.mxu0 0
      %2203 = vmatpush1.bf16.msra.mxu0 0
      %2204 = vmatprep.subr.bf16.mxu0 0
      %2205 = vmatpush1.bf16.msra.mxu0 0
      %2206 = vmatprep.subr.bf16.mxu0 0
      %2207 = vmatpush1.bf16.msra.mxu0 0
      %2208 = vmatprep.subr.bf16.mxu0 0
      %2209 = vmatpush1.bf16.msra.mxu0 0
      %2210 = vmatprep.subr.bf16.mxu0 0
      %2211 = vmatpush1.bf16.msra.mxu0 %v2194
      %2212 = vmatprep.subr.bf16.mxu0 0
      %2213 = vmatpush2.bf16.msra.mxu0 0
      %2214 = vmatprep.subr.bf16.mxu0 0
      %2215 = vmatpush2.bf16.msra.mxu0 0
      %2216 = vmatprep.subr.bf16.mxu0 0
      %2217 = vmatpush2.bf16.msra.mxu0 0
      %2218 = vmatprep.subr.bf16.mxu0 0
      %2219 = vmatpush2.bf16.msra.mxu0 0
      %2220 = vmatprep.subr.bf16.mxu0 0
      %2221 = vmatpush2.bf16.msra.mxu0 0
      %2222 = vmatprep.subr.bf16.mxu0 0
      %2223 = vmatpush2.bf16.msra.mxu0 0
      %2224 = vmatprep.subr.bf16.mxu0 0
      %2225 = vmatpush2.bf16.msra.mxu0 0
      %2226 = vmatprep.subr.bf16.mxu0 0
      %2227 = vmatpush2.bf16.msra.mxu0 0
      %2228 = vmatprep.mubr.bf16.mxu0 0
      %2229 = vmatmul.mubr.bf16.gmra.mxu0 %v2191
      %v2230 = vpop.f32.mrf.mxu0
      %v2231 = vadd.f32 0.0, %v2230
      %v2232 = vpop.f32.mrf.mxu0
      %v2233 = vpop.f32.mrf.mxu0
      %v2234 = vpop.f32.mrf.mxu0
      %2235 = vdwg.mxu0
      %2237 = vrot.lane.b32.xlu0 %v1691, 64
      %v2238 = vpop.permute.xlu0 %2237
      %v2240 = vsel %vm1487, %v1675, 0
      %v2243 = vsel %vm1702, %v2238, 0
      %2245 = vmatprep.subr.bf16.mxu0 0
      %2246 = vmatpush1.bf16.msra.mxu0 0
      %2247 = vmatprep.subr.bf16.mxu0 0
      %2248 = vmatpush1.bf16.msra.mxu0 0
      %2249 = vmatprep.subr.bf16.mxu0 0
      %2250 = vmatpush1.bf16.msra.mxu0 0
      %2251 = vmatprep.subr.bf16.mxu0 0
      %2252 = vmatpush1.bf16.msra.mxu0 0
      %2253 = vmatprep.subr.bf16.mxu0 0
      %2254 = vmatpush1.bf16.msra.mxu0 0
      %2255 = vmatprep.subr.bf16.mxu0 0
      %2256 = vmatpush1.bf16.msra.mxu0 0
      %2257 = vmatprep.subr.bf16.mxu0 0
      %2258 = vmatpush1.bf16.msra.mxu0 0
      %2259 = vmatprep.subr.bf16.mxu0 0
      %2260 = vmatpush1.bf16.msra.mxu0 %v2243
      %2261 = vmatprep.subr.bf16.mxu0 0
      %2262 = vmatpush2.bf16.msra.mxu0 0
      %2263 = vmatprep.subr.bf16.mxu0 0
      %2264 = vmatpush2.bf16.msra.mxu0 0
      %2265 = vmatprep.subr.bf16.mxu0 0
      %2266 = vmatpush2.bf16.msra.mxu0 0
      %2267 = vmatprep.subr.bf16.mxu0 0
      %2268 = vmatpush2.bf16.msra.mxu0 0
      %2269 = vmatprep.subr.bf16.mxu0 0
      %2270 = vmatpush2.bf16.msra.mxu0 0
      %2271 = vmatprep.subr.bf16.mxu0 0
      %2272 = vmatpush2.bf16.msra.mxu0 0
      %2273 = vmatprep.subr.bf16.mxu0 0
      %2274 = vmatpush2.bf16.msra.mxu0 0
      %2275 = vmatprep.subr.bf16.mxu0 0
      %2276 = vmatpush2.bf16.msra.mxu0 0
      %2277 = vmatprep.mubr.bf16.mxu0 0
      %2278 = vmatmul.mubr.bf16.gmra.mxu0 %v2240
      %v2279 = vpop.f32.mrf.mxu0
      %v2280 = vadd.f32 0.0, %v2279
      %v2281 = vpop.f32.mrf.mxu0
      %v2282 = vpop.f32.mrf.mxu0
      %v2283 = vpop.f32.mrf.mxu0
      %2284 = vdwg.mxu0
      %2286 = vrot.lane.b32.xlu0 %v1692, 64
      %v2287 = vpop.permute.xlu0 %2286
      %v2289 = vsel %vm1487, %v1676, 0
      %v2292 = vsel %vm1702, %v2287, 0
      %2294 = vmatprep.subr.bf16.mxu0 0
      %2295 = vmatpush1.bf16.msra.mxu0 0
      %2296 = vmatprep.subr.bf16.mxu0 0
      %2297 = vmatpush1.bf16.msra.mxu0 0
      %2298 = vmatprep.subr.bf16.mxu0 0
      %2299 = vmatpush1.bf16.msra.mxu0 0
      %2300 = vmatprep.subr.bf16.mxu0 0
      %2301 = vmatpush1.bf16.msra.mxu0 0
      %2302 = vmatprep.subr.bf16.mxu0 0
      %2303 = vmatpush1.bf16.msra.mxu0 0
      %2304 = vmatprep.subr.bf16.mxu0 0
      %2305 = vmatpush1.bf16.msra.mxu0 0
      %2306 = vmatprep.subr.bf16.mxu0 0
      %2307 = vmatpush1.bf16.msra.mxu0 0
      %2308 = vmatprep.subr.bf16.mxu0 0
      %2309 = vmatpush1.bf16.msra.mxu0 %v2292
      %2310 = vmatprep.subr.bf16.mxu0 0
      %2311 = vmatpush2.bf16.msra.mxu0 0
      %2312 = vmatprep.subr.bf16.mxu0 0
      %2313 = vmatpush2.bf16.msra.mxu0 0
      %2314 = vmatprep.subr.bf16.mxu0 0
      %2315 = vmatpush2.bf16.msra.mxu0 0
      %2316 = vmatprep.subr.bf16.mxu0 0
      %2317 = vmatpush2.bf16.msra.mxu0 0
      %2318 = vmatprep.subr.bf16.mxu0 0
      %2319 = vmatpush2.bf16.msra.mxu0 0
      %2320 = vmatprep.subr.bf16.mxu0 0
      %2321 = vmatpush2.bf16.msra.mxu0 0
      %2322 = vmatprep.subr.bf16.mxu0 0
      %2323 = vmatpush2.bf16.msra.mxu0 0
      %2324 = vmatprep.subr.bf16.mxu0 0
      %2325 = vmatpush2.bf16.msra.mxu0 0
      %2326 = vmatprep.mubr.bf16.mxu0 0
      %2327 = vmatmul.mubr.bf16.gmra.mxu0 %v2289
      %v2328 = vpop.f32.mrf.mxu0
      %v2329 = vadd.f32 0.0, %v2328
      %v2330 = vpop.f32.mrf.mxu0
      %v2331 = vpop.f32.mrf.mxu0
      %v2332 = vpop.f32.mrf.mxu0
      %2333 = vdwg.mxu0
      %2335 = vrot.lane.b32.xlu0 %v1693, 64
      %v2336 = vpop.permute.xlu0 %2335
      %v2338 = vsel %vm1487, %v1677, 0
      %v2341 = vsel %vm1702, %v2336, 0
      %2343 = vmatprep.subr.bf16.mxu0 0
      %2344 = vmatpush1.bf16.msra.mxu0 0
      %2345 = vmatprep.subr.bf16.mxu0 0
      %2346 = vmatpush1.bf16.msra.mxu0 0
      %2347 = vmatprep.subr.bf16.mxu0 0
      %2348 = vmatpush1.bf16.msra.mxu0 0
      %2349 = vmatprep.subr.bf16.mxu0 0
      %2350 = vmatpush1.bf16.msra.mxu0 0
      %2351 = vmatprep.subr.bf16.mxu0 0
      %2352 = vmatpush1.bf16.msra.mxu0 0
      %2353 = vmatprep.subr.bf16.mxu0 0
      %2354 = vmatpush1.bf16.msra.mxu0 0
      %2355 = vmatprep.subr.bf16.mxu0 0
      %2356 = vmatpush1.bf16.msra.mxu0 0
      %2357 = vmatprep.subr.bf16.mxu0 0
      %2358 = vmatpush1.bf16.msra.mxu0 %v2341
      %2359 = vmatprep.subr.bf16.mxu0 0
      %2360 = vmatpush2.bf16.msra.mxu0 0
      %2361 = vmatprep.subr.bf16.mxu0 0
      %2362 = vmatpush2.bf16.msra.mxu0 0
      %2363 = vmatprep.subr.bf16.mxu0 0
      %2364 = vmatpush2.bf16.msra.mxu0 0
      %2365 = vmatprep.subr.bf16.mxu0 0
      %2366 = vmatpush2.bf16.msra.mxu0 0
      %2367 = vmatprep.subr.bf16.mxu0 0
      %2368 = vmatpush2.bf16.msra.mxu0 0
      %2369 = vmatprep.subr.bf16.mxu0 0
      %2370 = vmatpush2.bf16.msra.mxu0 0
      %2371 = vmatprep.subr.bf16.mxu0 0
      %2372 = vmatpush2.bf16.msra.mxu0 0
      %2373 = vmatprep.subr.bf16.mxu0 0
      %2374 = vmatpush2.bf16.msra.mxu0 0
      %2375 = vmatprep.mubr.bf16.mxu0 0
      %2376 = vmatmul.mubr.bf16.gmra.mxu0 %v2338
      %v2377 = vpop.f32.mrf.mxu0
      %v2378 = vadd.f32 0.0, %v2377
      %v2379 = vpop.f32.mrf.mxu0
      %v2380 = vpop.f32.mrf.mxu0
      %v2381 = vpop.f32.mrf.mxu0
      %2382 = vdwg.mxu0
      %2384 = vrot.lane.b32.xlu0 %v1694, 64
      %v2385 = vpop.permute.xlu0 %2384
      %v2387 = vsel %vm1487, %v1678, 0
      %v2390 = vsel %vm1702, %v2385, 0
      %2392 = vmatprep.subr.bf16.mxu0 0
      %2393 = vmatpush1.bf16.msra.mxu0 0
      %2394 = vmatprep.subr.bf16.mxu0 0
      %2395 = vmatpush1.bf16.msra.mxu0 0
      %2396 = vmatprep.subr.bf16.mxu0 0
      %2397 = vmatpush1.bf16.msra.mxu0 0
      %2398 = vmatprep.subr.bf16.mxu0 0
      %2399 = vmatpush1.bf16.msra.mxu0 0
      %2400 = vmatprep.subr.bf16.mxu0 0
      %2401 = vmatpush1.bf16.msra.mxu0 0
      %2402 = vmatprep.subr.bf16.mxu0 0
      %2403 = vmatpush1.bf16.msra.mxu0 0
      %2404 = vmatprep.subr.bf16.mxu0 0
      %2405 = vmatpush1.bf16.msra.mxu0 0
      %2406 = vmatprep.subr.bf16.mxu0 0
      %2407 = vmatpush1.bf16.msra.mxu0 %v2390
      %2408 = vmatprep.subr.bf16.mxu0 0
      %2409 = vmatpush2.bf16.msra.mxu0 0
      %2410 = vmatprep.subr.bf16.mxu0 0
      %2411 = vmatpush2.bf16.msra.mxu0 0
      %2412 = vmatprep.subr.bf16.mxu0 0
      %2413 = vmatpush2.bf16.msra.mxu0 0
      %2414 = vmatprep.subr.bf16.mxu0 0
      %2415 = vmatpush2.bf16.msra.mxu0 0
      %2416 = vmatprep.subr.bf16.mxu0 0
      %2417 = vmatpush2.bf16.msra.mxu0 0
      %2418 = vmatprep.subr.bf16.mxu0 0
      %2419 = vmatpush2.bf16.msra.mxu0 0
      %2420 = vmatprep.subr.bf16.mxu0 0
      %2421 = vmatpush2.bf16.msra.mxu0 0
      %2422 = vmatprep.subr.bf16.mxu0 0
      %2423 = vmatpush2.bf16.msra.mxu0 0
      %2424 = vmatprep.mubr.bf16.mxu0 0
      %2425 = vmatmul.mubr.bf16.gmra.mxu0 %v2387
      %v2426 = vpop.f32.mrf.mxu0
      %v2427 = vadd.f32 0.0, %v2426
      %v2428 = vpop.f32.mrf.mxu0
      %v2429 = vpop.f32.mrf.mxu0
      %v2430 = vpop.f32.mrf.mxu0
      %2431 = vdwg.mxu0
      %2433 = vrot.lane.b32.xlu0 %v1695, 64
      %v2434 = vpop.permute.xlu0 %2433
      %v2436 = vsel %vm1487, %v1679, 0
      %v2439 = vsel %vm1702, %v2434, 0
      %2441 = vmatprep.subr.bf16.mxu0 0
      %2442 = vmatpush1.bf16.msra.mxu0 0
      %2443 = vmatprep.subr.bf16.mxu0 0
      %2444 = vmatpush1.bf16.msra.mxu0 0
      %2445 = vmatprep.subr.bf16.mxu0 0
      %2446 = vmatpush1.bf16.msra.mxu0 0
      %2447 = vmatprep.subr.bf16.mxu0 0
      %2448 = vmatpush1.bf16.msra.mxu0 0
      %2449 = vmatprep.subr.bf16.mxu0 0
      %2450 = vmatpush1.bf16.msra.mxu0 0
      %2451 = vmatprep.subr.bf16.mxu0 0
      %2452 = vmatpush1.bf16.msra.mxu0 0
      %2453 = vmatprep.subr.bf16.mxu0 0
      %2454 = vmatpush1.bf16.msra.mxu0 0
      %2455 = vmatprep.subr.bf16.mxu0 0
      %2456 = vmatpush1.bf16.msra.mxu0 %v2439
      %2457 = vmatprep.subr.bf16.mxu0 0
      %2458 = vmatpush2.bf16.msra.mxu0 0
      %2459 = vmatprep.subr.bf16.mxu0 0
      %2460 = vmatpush2.bf16.msra.mxu0 0
      %2461 = vmatprep.subr.bf16.mxu0 0
      %2462 = vmatpush2.bf16.msra.mxu0 0
      %2463 = vmatprep.subr.bf16.mxu0 0
      %2464 = vmatpush2.bf16.msra.mxu0 0
      %2465 = vmatprep.subr.bf16.mxu0 0
      %2466 = vmatpush2.bf16.msra.mxu0 0
      %2467 = vmatprep.subr.bf16.mxu0 0
      %2468 = vmatpush2.bf16.msra.mxu0 0
      %2469 = vmatprep.subr.bf16.mxu0 0
      %2470 = vmatpush2.bf16.msra.mxu0 0
      %2471 = vmatprep.subr.bf16.mxu0 0
      %2472 = vmatpush2.bf16.msra.mxu0 0
      %2473 = vmatprep.mubr.bf16.mxu0 0
      %2474 = vmatmul.mubr.bf16.gmra.mxu0 %v2436
      %v2475 = vpop.f32.mrf.mxu0
      %v2476 = vadd.f32 0.0, %v2475
      %v2477 = vpop.f32.mrf.mxu0
      %v2478 = vpop.f32.mrf.mxu0
      %v2479 = vpop.f32.mrf.mxu0
      %2480 = vdwg.mxu0
      %v2481 = vadd.f32 %v1741, %v1937
      %v2482 = vadd.f32 %v1790, %v1986
      %v2483 = vadd.f32 %v1839, %v2035
      %v2484 = vadd.f32 %v1888, %v2084
      %v2485 = vadd.f32 %v2481, %v2133
      %v2486 = vadd.f32 %v2482, %v2182
      %v2487 = vadd.f32 %v2483, %v2231
      %v2488 = vadd.f32 %v2484, %v2280
      %v2489 = vadd.f32 %v2485, %v2329
      %v2490 = vadd.f32 %v2486, %v2378
      %v2491 = vadd.f32 %v2487, %v2427
      %v2492 = vadd.f32 %v2488, %v2476
      %v2493 = vld [vmem:[%s424] sm:$0xf]
      %v2494 = vld [vmem:[%s424 + $0x4] sm:$0xf]
      %v2495 = vld [vmem:[%s424 + $0x8] sm:$0xf]
      %v2496 = vld [vmem:[%s424 + $0xc] sm:$0xf]
      %v2497 = vpack.c.bf16 %v2490, %v2489
      %v2498 = vpack.c.bf16 %v2492, %v2491
      %v2499 = vlaneseq
      %v2500 = vshrl.u32 %v2499, 7
      %v2501 = vsub.s32 1, %v2500
      %v2502 = vrot.slane %v534, %v2501
      %v2507 = vunpack.c.l.b16 %v2493
      %v2508 = vunpack.c.l.b16 %v2494
      %v2509 = vunpack.c.l.b16 %v2495
      %v2510 = vunpack.c.l.b16 %v2496
      %v2511 = vpack.c.b16 %v2508, %v2507
      %v2512 = vpack.c.b16 %v2510, %v2509
      %v2516 = vsel %vm561, %v2497, 0
      %v2519 = vsel %vm561, %v2498, 0
      %2521 = vmatprep.subr.bf16.mxu0 0
      %2522 = vmatpush1.bf16.msra.mxu0 0
      %2523 = vmatprep.subr.bf16.mxu0 0
      %2524 = vmatpush1.bf16.msra.mxu0 0
      %2525 = vmatprep.subr.bf16.mxu0 0
      %2526 = vmatpush1.bf16.msra.mxu0 0
      %2527 = vmatprep.subr.bf16.mxu0 0
      %2528 = vmatpush1.bf16.msra.mxu0 0
      %2529 = vmatprep.subr.bf16.mxu0 0
      %2530 = vmatpush1.bf16.msra.mxu0 0
      %2531 = vmatprep.subr.bf16.mxu0 0
      %2532 = vmatpush1.bf16.msra.mxu0 0
      %2533 = vmatprep.subr.bf16.mxu0 0
      %2534 = vmatpush1.bf16.msra.mxu0 %v2512
      %2535 = vmatprep.subr.bf16.mxu0 0
      %2536 = vmatpush1.bf16.msra.mxu0 %v2511
      %2537 = vmatprep.subr.bf16.mxu0 0
      %2538 = vmatpush2.bf16.msra.mxu0 0
      %2539 = vmatprep.subr.bf16.mxu0 0
      %2540 = vmatpush2.bf16.msra.mxu0 0
      %2541 = vmatprep.subr.bf16.mxu0 0
      %2542 = vmatpush2.bf16.msra.mxu0 0
      %2543 = vmatprep.subr.bf16.mxu0 0
      %2544 = vmatpush2.bf16.msra.mxu0 0
      %2545 = vmatprep.subr.bf16.mxu0 0
      %2546 = vmatpush2.bf16.msra.mxu0 0
      %2547 = vmatprep.subr.bf16.mxu0 0
      %2548 = vmatpush2.bf16.msra.mxu0 0
      %2549 = vmatprep.subr.bf16.mxu0 0
      %2550 = vmatpush2.bf16.msra.mxu0 0
      %2551 = vmatprep.subr.bf16.mxu0 0
      %2552 = vmatpush2.bf16.msra.mxu0 0
      %2553 = vmatprep.mubr.bf16.mxu0 0
      %2554 = vmatmul.mubr.bf16.gmra.mxu0 %v2516
      %v2555 = vpop.f32.mrf.mxu0
      %v2556 = vadd.f32 %v2502, %v2555
      %v2557 = vpop.f32.mrf.mxu0
      %v2558 = vpop.f32.mrf.mxu0
      %v2559 = vadd.f32 %v2502, %v2558
      %v2560 = vpop.f32.mrf.mxu0
      %2561 = vmatprep.mubr.bf16.mxu0 0
      %2562 = vmatmul.mubr.bf16.gmra.mxu0 %v2519
      %v2563 = vpop.f32.mrf.mxu0
      %v2564 = vadd.f32 %v2502, %v2563
      %v2565 = vpop.f32.mrf.mxu0
      %v2566 = vpop.f32.mrf.mxu0
      %v2567 = vadd.f32 %v2502, %v2566
      %v2568 = vpop.f32.mrf.mxu0
      %2569 = vdwg.mxu0
      %v2570 = vadd.f32 %v535, %v2556
      %v2571 = vadd.f32 %v536, %v2559
      %v2572 = vadd.f32 %v537, %v2564
      %v2573 = vadd.f32 %v538, %v2567
      %v2574 = vsel %vm561, %v2570, 0.0
      %2575 = vadd.xlane.f32.xlu0 %v2574
      %v2576 = vpop.xlane.xlu0 %2575
      %v2577 = vsel %vm561, %v2571, 0.0
      %2578 = vadd.xlane.f32.xlu0 %v2577
      %v2579 = vpop.xlane.xlu0 %2578
      %v2580 = vsel %vm561, %v2572, 0.0
      %2581 = vadd.xlane.f32.xlu0 %v2580
      %v2582 = vpop.xlane.xlu0 %2581
      %v2583 = vsel %vm561, %v2573, 0.0
      %2584 = vadd.xlane.f32.xlu0 %v2583
      %v2585 = vpop.xlane.xlu0 %2584
      %v2586 = vrcp.pop 32.0
      %v2587 = vmul.f32 %v2576, %v2586
      %v2588 = vmul.f32 %v2579, %v2586
      %v2589 = vmul.f32 %v2582, %v2586
      %v2590 = vmul.f32 %v2585, %v2586
      %v2591 = vsub.f32 %v2570, %v2587
      %v2592 = vsub.f32 %v2571, %v2588
      %v2593 = vsub.f32 %v2572, %v2589
      %v2594 = vsub.f32 %v2573, %v2590
      %v2595 = vmul.f32 %v2591, %v2591
      %v2596 = vmul.f32 %v2592, %v2592
      %v2597 = vmul.f32 %v2593, %v2593
      %v2598 = vmul.f32 %v2594, %v2594
      %v2599 = vsel %vm561, %v2595, 0.0
      %2600 = vadd.xlane.f32.xlu0 %v2599
      %v2601 = vpop.xlane.xlu0 %2600
      %v2602 = vsel %vm561, %v2596, 0.0
      %2603 = vadd.xlane.f32.xlu0 %v2602
      %v2604 = vpop.xlane.xlu0 %2603
      %v2605 = vsel %vm561, %v2597, 0.0
      %2606 = vadd.xlane.f32.xlu0 %v2605
      %v2607 = vpop.xlane.xlu0 %2606
      %v2608 = vsel %vm561, %v2598, 0.0
      %2609 = vadd.xlane.f32.xlu0 %v2608
      %v2610 = vpop.xlane.xlu0 %2609
      %v2611 = vmul.f32 %v2601, %v2586
      %v2612 = vmul.f32 %v2604, %v2586
      %v2613 = vmul.f32 %v2607, %v2586
      %v2614 = vmul.f32 %v2610, %v2586
      %v2615 = vadd.f32 %v2611, 1e-12
      %v2616 = vadd.f32 %v2612, 1e-12
      %v2617 = vadd.f32 %v2613, 1e-12
      %v2618 = vadd.f32 %v2614, 1e-12
      %v2619 = vrsqrt.pop %v2615
      %v2620 = vrsqrt.pop %v2616
      %v2621 = vrsqrt.pop %v2617
      %v2622 = vrsqrt.pop %v2618
      %v2623 = vmul.f32 %v2591, %v2619
      %v2624 = vmul.f32 %v2592, %v2620
      %v2625 = vmul.f32 %v2593, %v2621
      %v2626 = vmul.f32 %v2594, %v2622
      %v2627 = vlaneseq
      %v2628 = vshrl.u32 %v2627, 7
      %v2629 = vsub.s32 2, %v2628
      %v2630 = vrot.slane %v534, %v2629
      %v2631 = vmul.f32 %v2623, %v2630
      %v2632 = vmul.f32 %v2624, %v2630
      %v2633 = vmul.f32 %v2625, %v2630
      %v2634 = vmul.f32 %v2626, %v2630
      %v2635 = vlaneseq
      %v2636 = vshrl.u32 %v2635, 7
      %v2637 = vsub.s32 3, %v2636
      %v2638 = vrot.slane %v534, %v2637
      %v2639 = vadd.f32 %v2631, %v2638
      %v2640 = vadd.f32 %v2632, %v2638
      %v2641 = vadd.f32 %v2633, %v2638
      %v2642 = vadd.f32 %v2634, %v2638
      %v2643 = vld [vmem:[%s429] sm:$0xf]
      %v2644 = vld [vmem:[%s429 + $0x4] sm:$0xf]
      %v2645 = vld [vmem:[%s429 + $0x8] sm:$0xf]
      %v2646 = vld [vmem:[%s429 + $0xc] sm:$0xf]
      %v2647 = vpack.c.bf16 %v2640, %v2639
      %v2648 = vpack.c.bf16 %v2642, %v2641
      %v2649 = vlaneseq
      %v2650 = vshrl.u32 %v2649, 7
      %v2651 = vsub.s32 4, %v2650
      %v2652 = vrot.slane %v534, %v2651
      %v2657 = vunpack.c.l.b16 %v2643
      %v2658 = vunpack.c.l.b16 %v2644
      %v2659 = vunpack.c.l.b16 %v2645
      %v2660 = vunpack.c.l.b16 %v2646
      %v2661 = vpack.c.b16 %v2658, %v2657
      %v2662 = vpack.c.b16 %v2660, %v2659
      %v2666 = vsel %vm561, %v2647, 0
      %v2669 = vsel %vm561, %v2648, 0
      %2671 = vmatprep.subr.bf16.mxu0 0
      %2672 = vmatpush1.bf16.msra.mxu0 0
      %2673 = vmatprep.subr.bf16.mxu0 0
      %2674 = vmatpush1.bf16.msra.mxu0 0
      %2675 = vmatprep.subr.bf16.mxu0 0
      %2676 = vmatpush1.bf16.msra.mxu0 0
      %2677 = vmatprep.subr.bf16.mxu0 0
      %2678 = vmatpush1.bf16.msra.mxu0 0
      %2679 = vmatprep.subr.bf16.mxu0 0
      %2680 = vmatpush1.bf16.msra.mxu0 0
      %2681 = vmatprep.subr.bf16.mxu0 0
      %2682 = vmatpush1.bf16.msra.mxu0 0
      %2683 = vmatprep.subr.bf16.mxu0 0
      %2684 = vmatpush1.bf16.msra.mxu0 %v2662
      %2685 = vmatprep.subr.bf16.mxu0 0
      %2686 = vmatpush1.bf16.msra.mxu0 %v2661
      %2687 = vmatprep.subr.bf16.mxu0 0
      %2688 = vmatpush2.bf16.msra.mxu0 0
      %2689 = vmatprep.subr.bf16.mxu0 0
      %2690 = vmatpush2.bf16.msra.mxu0 0
      %2691 = vmatprep.subr.bf16.mxu0 0
      %2692 = vmatpush2.bf16.msra.mxu0 0
      %2693 = vmatprep.subr.bf16.mxu0 0
      %2694 = vmatpush2.bf16.msra.mxu0 0
      %2695 = vmatprep.subr.bf16.mxu0 0
      %2696 = vmatpush2.bf16.msra.mxu0 0
      %2697 = vmatprep.subr.bf16.mxu0 0
      %2698 = vmatpush2.bf16.msra.mxu0 0
      %2699 = vmatprep.subr.bf16.mxu0 0
      %2700 = vmatpush2.bf16.msra.mxu0 0
      %2701 = vmatprep.subr.bf16.mxu0 0
      %2702 = vmatpush2.bf16.msra.mxu0 0
      %2703 = vmatprep.mubr.bf16.mxu0 0
      %2704 = vmatmul.mubr.bf16.gmra.mxu0 %v2666
      %v2705 = vpop.f32.mrf.mxu0
      %v2706 = vadd.f32 %v2652, %v2705
      %v2707 = vpop.f32.mrf.mxu0
      %v2708 = vpop.f32.mrf.mxu0
      %v2709 = vadd.f32 %v2652, %v2708
      %v2710 = vpop.f32.mrf.mxu0
      %2711 = vmatprep.mubr.bf16.mxu0 0
      %2712 = vmatmul.mubr.bf16.gmra.mxu0 %v2669
      %v2713 = vpop.f32.mrf.mxu0
      %v2714 = vadd.f32 %v2652, %v2713
      %v2715 = vpop.f32.mrf.mxu0
      %v2716 = vpop.f32.mrf.mxu0
      %v2717 = vadd.f32 %v2652, %v2716
      %v2718 = vpop.f32.mrf.mxu0
      %2719 = vdwg.mxu0
      %v2720 = vmul.f32 %v2706, %v2706
      %v2721 = vmul.f32 %v2709, %v2709
      %v2722 = vmul.f32 %v2714, %v2714
      %v2723 = vmul.f32 %v2717, %v2717
      %v2724 = vmul.f32 %v2706, %v2720
      %v2725 = vmul.f32 %v2709, %v2721
      %v2726 = vmul.f32 %v2714, %v2722
      %v2727 = vmul.f32 %v2717, %v2723
      %v2728 = vmul.f32 %v2724, 0.044715
      %v2729 = vmul.f32 %v2725, 0.044715
      %v2730 = vmul.f32 %v2726, 0.044715
      %v2731 = vmul.f32 %v2727, 0.044715
      %v2732 = vadd.f32 %v2706, %v2728
      %v2733 = vadd.f32 %v2709, %v2729
      %v2734 = vadd.f32 %v2714, %v2730
      %v2735 = vadd.f32 %v2717, %v2731
      %v2736 = vmul.f32 %v2732, 0.7978846
      %v2737 = vmul.f32 %v2733, 0.7978846
      %v2738 = vmul.f32 %v2734, 0.7978846
      %v2739 = vmul.f32 %v2735, 0.7978846
      %v2740 = vtanh.pop %v2736
      %v2741 = vtanh.pop %v2737
      %v2742 = vtanh.pop %v2738
      %v2743 = vtanh.pop %v2739
      %v2744 = vadd.f32 %v2740, 1.0
      %v2745 = vadd.f32 %v2741, 1.0
      %v2746 = vadd.f32 %v2742, 1.0
      %v2747 = vadd.f32 %v2743, 1.0
      %v2748 = vmul.f32 %v2744, 0.5
      %v2749 = vmul.f32 %v2745, 0.5
      %v2750 = vmul.f32 %v2746, 0.5
      %v2751 = vmul.f32 %v2747, 0.5
      %v2752 = vmul.f32 %v2706, %v2748
      %v2753 = vmul.f32 %v2709, %v2749
      %v2754 = vmul.f32 %v2714, %v2750
      %v2755 = vmul.f32 %v2717, %v2751
      %v2756 = vld [vmem:[%s434] sm:$0xf]
      %v2757 = vld [vmem:[%s434 + $0x4] sm:$0xf]
      %v2758 = vld [vmem:[%s434 + $0x8] sm:$0xf]
      %v2759 = vld [vmem:[%s434 + $0xc] sm:$0xf]
      %v2760 = vld [vmem:[%s434 + $0x10] sm:$0xf]
      %v2761 = vld [vmem:[%s434 + $0x14] sm:$0xf]
      %v2762 = vld [vmem:[%s434 + $0x18] sm:$0xf]
      %v2763 = vld [vmem:[%s434 + $0x1c] sm:$0xf]
      %v2764 = vpack.c.bf16 %v2753, %v2752
      %v2765 = vpack.c.bf16 %v2755, %v2754
      %v2766 = vlaneseq
      %v2767 = vshrl.u32 %v2766, 7
      %v2768 = vsub.s32 5, %v2767
      %v2769 = vrot.slane %v534, %v2768
      %v2778 = vunpack.c.l.b16 %v2756
      %v2779 = vunpack.c.l.b16 %v2757
      %v2780 = vunpack.c.l.b16 %v2758
      %v2781 = vunpack.c.l.b16 %v2759
      %v2782 = vunpack.c.l.b16 %v2760
      %v2783 = vunpack.c.l.b16 %v2761
      %v2784 = vunpack.c.l.b16 %v2762
      %v2785 = vunpack.c.l.b16 %v2763
      %v2786 = vpack.c.b16 %v2779, %v2778
      %v2787 = vpack.c.b16 %v2781, %v2780
      %v2788 = vpack.c.b16 %v2783, %v2782
      %v2789 = vpack.c.b16 %v2785, %v2784
      %vm2794 = vcmask 523264
      %v2796 = vsel %vm2794, %v2764, 0
      %v2799 = vsel %vm2794, %v2765, 0
      %2801 = vmatprep.subr.bf16.mxu0 0
      %2802 = vmatpush1.bf16.msra.mxu0 0
      %2803 = vmatprep.subr.bf16.mxu0 0
      %2804 = vmatpush1.bf16.msra.mxu0 0
      %2805 = vmatprep.subr.bf16.mxu0 0
      %2806 = vmatpush1.bf16.msra.mxu0 0
      %2807 = vmatprep.subr.bf16.mxu0 0
      %2808 = vmatpush1.bf16.msra.mxu0 0
      %2809 = vmatprep.subr.bf16.mxu0 0
      %2810 = vmatpush1.bf16.msra.mxu0 %v2789
      %2811 = vmatprep.subr.bf16.mxu0 0
      %2812 = vmatpush1.bf16.msra.mxu0 %v2788
      %2813 = vmatprep.subr.bf16.mxu0 0
      %2814 = vmatpush1.bf16.msra.mxu0 %v2787
      %2815 = vmatprep.subr.bf16.mxu0 0
      %2816 = vmatpush1.bf16.msra.mxu0 %v2786
      %2817 = vmatprep.subr.bf16.mxu0 0
      %2818 = vmatpush2.bf16.msra.mxu0 0
      %2819 = vmatprep.subr.bf16.mxu0 0
      %2820 = vmatpush2.bf16.msra.mxu0 0
      %2821 = vmatprep.subr.bf16.mxu0 0
      %2822 = vmatpush2.bf16.msra.mxu0 0
      %2823 = vmatprep.subr.bf16.mxu0 0
      %2824 = vmatpush2.bf16.msra.mxu0 0
      %2825 = vmatprep.subr.bf16.mxu0 0
      %2826 = vmatpush2.bf16.msra.mxu0 0
      %2827 = vmatprep.subr.bf16.mxu0 0
      %2828 = vmatpush2.bf16.msra.mxu0 0
      %2829 = vmatprep.subr.bf16.mxu0 0
      %2830 = vmatpush2.bf16.msra.mxu0 0
      %2831 = vmatprep.subr.bf16.mxu0 0
      %2832 = vmatpush2.bf16.msra.mxu0 0
      %2833 = vmatprep.mubr.bf16.mxu0 0
      %2834 = vmatmul.mubr.bf16.gmra.mxu0 %v2796
      %v2835 = vpop.f32.mrf.mxu0
      %v2836 = vadd.f32 %v2769, %v2835
      %v2837 = vpop.f32.mrf.mxu0
      %v2838 = vpop.f32.mrf.mxu0
      %v2839 = vadd.f32 %v2769, %v2838
      %v2840 = vpop.f32.mrf.mxu0
      %2841 = vmatprep.mubr.bf16.mxu0 0
      %2842 = vmatmul.mubr.bf16.gmra.mxu0 %v2799
      %v2843 = vpop.f32.mrf.mxu0
      %v2844 = vadd.f32 %v2769, %v2843
      %v2845 = vpop.f32.mrf.mxu0
      %v2846 = vpop.f32.mrf.mxu0
      %v2847 = vadd.f32 %v2769, %v2846
      %v2848 = vpop.f32.mrf.mxu0
      %2849 = vdwg.mxu0
      %v2850 = vadd.f32 %v2639, %v2836
      %v2851 = vadd.f32 %v2640, %v2839
      %v2852 = vadd.f32 %v2641, %v2844
      %v2853 = vadd.f32 %v2642, %v2847
      %v2854 = vsel %vm561, %v2850, 0.0
      %2855 = vadd.xlane.f32.xlu0 %v2854
      %v2856 = vpop.xlane.xlu0 %2855
      %v2857 = vsel %vm561, %v2851, 0.0
      %2858 = vadd.xlane.f32.xlu0 %v2857
      %v2859 = vpop.xlane.xlu0 %2858
      %v2860 = vsel %vm561, %v2852, 0.0
      %2861 = vadd.xlane.f32.xlu0 %v2860
      %v2862 = vpop.xlane.xlu0 %2861
      %v2863 = vsel %vm561, %v2853, 0.0
      %2864 = vadd.xlane.f32.xlu0 %v2863
      %v2865 = vpop.xlane.xlu0 %2864
      %v2866 = vmul.f32 %v2856, %v2586
      %v2867 = vmul.f32 %v2859, %v2586
      %v2868 = vmul.f32 %v2862, %v2586
      %v2869 = vmul.f32 %v2865, %v2586
      %v2870 = vsub.f32 %v2850, %v2866
      %v2871 = vsub.f32 %v2851, %v2867
      %v2872 = vsub.f32 %v2852, %v2868
      %v2873 = vsub.f32 %v2853, %v2869
      %v2874 = vmul.f32 %v2870, %v2870
      %v2875 = vmul.f32 %v2871, %v2871
      %v2876 = vmul.f32 %v2872, %v2872
      %v2877 = vmul.f32 %v2873, %v2873
      %v2878 = vsel %vm561, %v2874, 0.0
      %2879 = vadd.xlane.f32.xlu0 %v2878
      %v2880 = vpop.xlane.xlu0 %2879
      %v2881 = vsel %vm561, %v2875, 0.0
      %2882 = vadd.xlane.f32.xlu0 %v2881
      %v2883 = vpop.xlane.xlu0 %2882
      %v2884 = vsel %vm561, %v2876, 0.0
      %2885 = vadd.xlane.f32.xlu0 %v2884
      %v2886 = vpop.xlane.xlu0 %2885
      %v2887 = vsel %vm561, %v2877, 0.0
      %2888 = vadd.xlane.f32.xlu0 %v2887
      %v2889 = vpop.xlane.xlu0 %2888
      %v2890 = vmul.f32 %v2880, %v2586
      %v2891 = vmul.f32 %v2883, %v2586
      %v2892 = vmul.f32 %v2886, %v2586
      %v2893 = vmul.f32 %v2889, %v2586
      %v2894 = vadd.f32 %v2890, 1e-12
      %v2895 = vadd.f32 %v2891, 1e-12
      %v2896 = vadd.f32 %v2892, 1e-12
      %v2897 = vadd.f32 %v2893, 1e-12
      %v2898 = vrsqrt.pop %v2894
      %v2899 = vrsqrt.pop %v2895
      %v2900 = vrsqrt.pop %v2896
      %v2901 = vrsqrt.pop %v2897
      %v2902 = vmul.f32 %v2870, %v2898
      %v2903 = vmul.f32 %v2871, %v2899
      %v2904 = vmul.f32 %v2872, %v2900
      %v2905 = vmul.f32 %v2873, %v2901
      %v2906 = vlaneseq
      %v2907 = vshrl.u32 %v2906, 7
      %v2908 = vsub.s32 6, %v2907
      %v2909 = vrot.slane %v534, %v2908
      %v2910 = vmul.f32 %v2902, %v2909
      %v2911 = vmul.f32 %v2903, %v2909
      %v2912 = vmul.f32 %v2904, %v2909
      %v2913 = vmul.f32 %v2905, %v2909
      %v2914 = vlaneseq
      %v2915 = vshrl.u32 %v2914, 7
      %v2916 = vsub.s32 7, %v2915
      %v2917 = vrot.slane %v534, %v2916
      %v2918 = vadd.f32 %v2910, %v2917
      %v2919 = vadd.f32 %v2911, %v2917
      %v2920 = vadd.f32 %v2912, %v2917
      %v2921 = vadd.f32 %v2913, %v2917
      %2922 = vst.msk [vmem:[#allocation2] sm:$0xff] %vm561, %v2918
      %2923 = vst.msk [vmem:[#allocation2 + $0x8] sm:$0xff] %vm561, %v2919
      %2924 = vst.msk [vmem:[#allocation2 + $0x10] sm:$0xff] %vm561, %v2920
      %2925 = vst.msk [vmem:[#allocation2 + $0x18] sm:$0xff] %vm561, %v2921
      %p2926 = scmp.eq.s32.totalorder %s25, 1
      // Predicated region
      $region61: #{bert_matcher_forward.2} parent=55 // pred_check
        %p2927 = pneg %p2926
      $region62: #{bert_matcher_forward.2} parent=55 // pred_check_branch
        %2929 = sbr.rel (%p2927) target = $region64
      $region63: #{bert_matcher_forward.2} parent=55 // pred_region
        %v2930 = vpack.c.bf16 %v2919, %v2918
        %v2931 = vpack.c.bf16 %v2921, %v2920
        %v2934 = vunpack.c.l.b16 %v2930
        %v2935 = vunpack.c.h.b16 %v2930
        %v2936 = vunpack.c.l.b16 %v2931
        %v2937 = vunpack.c.h.b16 %v2931
        %v2938 = vpack.c.b16 %v2934, %v2934
        %v2939 = vpack.c.b16 %v2935, %v2935
        %v2940 = vpack.c.b16 %v2936, %v2936
        %v2941 = vpack.c.b16 %v2937, %v2937
        %vm2946 = vcmask 257024
        %2947 = vst.msk [vmem:[%s443] sm:$0xf] %vm2946, %v2938
        %2948 = vst.msk [vmem:[%s443 + $0x4] sm:$0xf] %vm2946, %v2939
        %2949 = vst.msk [vmem:[%s443 + $0x8] sm:$0xf] %vm2946, %v2940
        %2950 = vst.msk [vmem:[%s443 + $0xc] sm:$0xf] %vm2946, %v2941
      $region64: #{bert_matcher_forward.2} parent=55 // pred_fallthru
        _
      %s2951 = smul.u32 4, %s24
      %p2952 = scmp.lt.s32.totalorder %s2951, 3
      %s2953 = scalar_select %p2952, %s2951, 3
      %s2954 = smul.addr %s2953, 4
      %s2955 = scalar_lea.vmem %s9, %s2954
      // Predicated region
      $region65: #{bert_matcher_forward.2} parent=55 // pred_check
        %p2956 = pneg %p269
      $region66: #{bert_matcher_forward.2} parent=55 // pred_check_branch
        %2958 = sbr.rel (%p2956) target = $region68
      $region67: #{bert_matcher_forward.2} parent=55 // pred_region
        %s2959 = smul.u32 4, %s24
      $region68: #{bert_matcher_forward.2} parent=55 // pred_fallthru
        _
      // Predicated region
      $region69: #{bert_matcher_forward.2} parent=55 // pred_check
        %p2960 = pneg %p269
      $region70: #{bert_matcher_forward.2} parent=55 // pred_check_branch
        %2962 = sbr.rel (%p2960) target = $region72
      $region71: #{bert_matcher_forward.2} parent=55 // pred_region
        %s2963 = smul.u32 4, %s24
        %p2964 = scmp.lt.s32.totalorder %s2963, 3
        %s2965 = scalar_select %p2964, %s2963, 3
        %s2966 = smul.addr %s2965, 4
        %s2967 = scalar_lea.vmem %s9, %s2966
      $region72: #{bert_matcher_forward.2} parent=55 // pred_fallthru
        _
    $region56: #{bert_matcher_forward.2} parent=5 // pred_fallthru
      _
    %p2968 = scmp.le.s32.totalorder 2, %s15
    // Predicated region
    $region73: #{bert_matcher_forward.2} parent=5 // pred_check
      %p2969 = pneg %p2968
    $region74: #{bert_matcher_forward.2} parent=5 // pred_check_branch
      %2971 = sbr.rel (%p2969) target = $region76
    $region75: #{bert_matcher_forward.2} parent=5 // pred_region
      %s2972 = ssub.s32 %s15, 2
    $region76: #{bert_matcher_forward.2} parent=5 // pred_fallthru
      _
  $region6: #{bert_matcher_forward.2} parent=0 // loop_footer
    %s19 = sadd.s32 1, %s15
  $region7: #{bert_matcher_forward.2} parent=0 // loop_footer_branch
    %14 = sbr.rel target = $region3
  $region8: #{bert_matcher_forward.2} parent=0 // loop_exit
    _

</llo_original>
